<compile_context>
chip_gen: v7x
topology: tpu7x:2x2x1
jax: 0.10.0
libtpu: 0.0.40
codegen_flags: <defaults>
</compile_context>

<pallas_src>
import functools

import jax
import jax.numpy as jnp
from jax.experimental import pallas as pl
from jax.experimental.pallas import tpu as pltpu


def _moe_expert_kernel(hit_ref, sched_e_ref, sched_f_ref,        # scalar prefetch (SMEM)
                       gw_ref, x_ref, w1_ref, b1_ref, w2_ref,    # streamed inputs
                       o_ref,                                     # output
                       acc_ref,                                   # VMEM scratch
                       *, num_experts, compute_dtype):
    """One grid step: (token tile i, expert e, dff-chunk f)."""
    del sched_e_ref, sched_f_ref  # only used by the index_maps
    i = pl.program_id(0)
    e = pl.program_id(1)
    f = pl.program_id(2)
    n_e = pl.num_programs(1)
    n_f = pl.num_programs(2)

    # ---- init accumulator at the start of every token tile's reduction ------------
    @pl.when((e == 0) & (f == 0))
    def _init():
        acc_ref[...] = jnp.zeros_like(acc_ref)

    # ---- cheap scalar check: does any token in tile i route to expert e? ----------
    hit = hit_ref[i * num_experts + e]

    @pl.when(hit != 0)
    def _compute():
        w_e = gw_ref[0]                                               # [tm, 1] f32
        h = jnp.dot(x_ref[...], w1_ref[0],
                    preferred_element_type=jnp.float32)               # [tm, tf] f32
        h = jnp.maximum(h + b1_ref[0], 0.0)                           # bias + ReLU
        y = jnp.dot(h.astype(compute_dtype), w2_ref[0],
                    preferred_element_type=jnp.float32)               # [tm, D] f32
        acc_ref[...] += w_e * y                                       # b2 hoisted to wrapper

    # ---- finalize ------------------------------------------------------------------
    @pl.when((e == n_e - 1) & (f == n_f - 1))
    def _store():
        o_ref[...] = acc_ref[...].astype(o_ref.dtype)


def moe_feedforward_top2(x, params, *, tm=256, tf=512,
                         compute_dtype=jnp.bfloat16, weight_buffers=2):
    """x: [B, T, d_model] -> [B, T, d_model]. Eval-mode MoE top-2 forward."""
    wg, bg, w1, b1, w2, b2 = (
        params["wg"], params["bg"], params["w1"], params["b1"], params["w2"], params["b2"]
    )
    B, T, D = x.shape
    E = wg.shape[1]
    dff = w1.shape[2]
    N = B * T

    assert tm % 8 == 0, "token tile must be a multiple of 8 (sublane)"
    tf = min(tf, dff)
    assert dff % tf == 0 and (tf == dff or tf % 128 == 0), "bad dff chunk size"
    n_f = dff // tf

    # ---- gating hoisted out of the kernel (f32 softmax + top-2, matches PyTorch) ----
    xf32 = x.reshape(N, D).astype(jnp.float32)
    logits = jnp.dot(xf32, wg, preferred_element_type=jnp.float32) + bg.reshape(1, E)
    scores = jax.nn.softmax(logits, axis=-1)                            # [N, E]
    top2_s, top2_i = jax.lax.top_k(scores, 2)
    gw = (jax.nn.one_hot(top2_i[:, 0], E, dtype=jnp.float32) * top2_s[:, 0:1]
          + jax.nn.one_hot(top2_i[:, 1], E, dtype=jnp.float32) * top2_s[:, 1:2])  # [N, E]

    # ---- pad tokens; cast activations to the compute dtype ONCE in the wrapper ------
    n_tiles = pl.cdiv(N, tm)
    N_pad = n_tiles * tm
    xfc = x.reshape(N, D).astype(compute_dtype)
    gwp = gw
    if N_pad != N:
        xfc = jnp.pad(xfc, ((0, N_pad - N), (0, 0)))
        gwp = jnp.pad(gw, ((0, N_pad - N), (0, 0)))     # zero gate weight => zero rows

    # combine weights as per-expert columns for a direct [tm, 1] load in the kernel
    gw_cols = jnp.transpose(gwp).reshape(E, N_pad, 1)                   # [E, N_pad, 1]

    # ---- per-(tile, expert) hit flags + weight-DMA load schedule (scalar prefetch) ---
    hit = jnp.any(gwp.reshape(n_tiles, tm, E) > 0.0, axis=1)            # [n_tiles, E]
    hit_i32 = hit.astype(jnp.int32).reshape(-1)                         # [n_tiles*E]

    steps = n_tiles * E * n_f
    sid = jnp.arange(steps, dtype=jnp.int32)
    e_of = ((sid // n_f) % E).astype(jnp.int32)
    f_of = (sid % n_f).astype(jnp.int32)
    hit_step = jnp.repeat(hit_i32, n_f)                                 # [steps]
    # Hold-last-value schedule: skipped steps repeat the previous (expert, chunk) block
    # index, so the Pallas pipeline elides the W1/W2/b1 DMA for non-routed experts.
    last_hit = jax.lax.cummax(jnp.where(hit_step > 0, sid, -1))
    src = jnp.maximum(last_hit, 0)
    sched_e = e_of[src]
    sched_f = f_of[src]

    # ---- expert weights streamed in the MXU compute dtype ---------------------------
    w1c = w1.astype(compute_dtype)                                       # [E, D, dff]
    w2c = w2.astype(compute_dtype)                                       # [E, dff, D]
    b1r = b1.reshape(E, 1, dff).astype(jnp.float32)                      # [E, 1, dff]

    w_itemsize = jnp.dtype(compute_dtype).itemsize
    x_itemsize = jnp.dtype(compute_dtype).itemsize
    f32b = 4

    # ---- VMEM budget (double/ multi-buffered tiles + scratch), with headroom --------
    nbuf = max(2, int(weight_buffers or 2))
    per_step = (2 * tm * D * x_itemsize            # x tile
                + 2 * tm * 128 * f32b              # [tm,1] gate column (lane-padded)
                + nbuf * D * tf * w_itemsize       # W1 tile(s)
                + nbuf * tf * D * w_itemsize       # W2 tile(s)
                + nbuf * max(tf, 128) * 8 * f32b   # b1 chunk (padded, conservative)
                + 2 * tm * D * f32b                # output tile
                + tm * D * f32b)                   # accumulator scratch
    try:
        vmem_cap = int(pltpu.get_tpu_info().vmem_capacity_bytes)
    except Exception:
        vmem_cap = 128 * 2**20
    vmem_limit = int(min(max(int(per_step * 1.5), 32 * 2**20), int(vmem_cap * 0.75)))

    # ---- advisory cost estimate: top-2 routing, hit experts only --------------------
    experts_per_tile = min(E, 2 * tm)
    cost = pl.CostEstimate(
        flops=int(8 * N * D * dff),                    # 2 experts/token * 2 matmuls * 2 FLOP/MAC
        transcendentals=0,
        bytes_accessed=int(
            N_pad * D * x_itemsize                     # x read once per tile (index constant over e,f)
            + N_pad * E * f32b                         # gate columns
            + n_tiles * experts_per_tile * (2 * D * dff * w_itemsize + dff * f32b)
            + N_pad * D * f32b                         # output written once per tile
        ),
    )

    # ---- index maps (scalar-prefetch refs arrive as trailing positional args) -------
    def _step(i, e, f):
        return (i * E + e) * n_f + f

    def gw_map(i, e, f, hit_r, se_r, sf_r):
        return (e, i, 0)

    def x_map(i, e, f, hit_r, se_r, sf_r):
        return (i, 0)

    def w1_map(i, e, f, hit_r, se_r, sf_r):
        s = _step(i, e, f)
        return (se_r[s], 0, sf_r[s])

    def b1_map(i, e, f, hit_r, se_r, sf_r):
        s = _step(i, e, f)
        return (se_r[s], 0, sf_r[s])

    def w2_map(i, e, f, hit_r, se_r, sf_r):
        s = _step(i, e, f)
        return (se_r[s], sf_r[s], 0)

    def out_map(i, e, f, hit_r, se_r, sf_r):
        return (i, 0)

    wkw = {}
    if weight_buffers and int(weight_buffers) != 2:
        # deeper buffering only on the two large streamed operands (review: sweep)
        wkw = dict(pipeline_mode=pl.Buffered(int(weight_buffers)))

    kernel = functools.partial(_moe_expert_kernel, num_experts=E,
                               compute_dtype=compute_dtype)

    out = pl.pallas_call(
        kernel,
        out_shape=jax.ShapeDtypeStruct((N_pad, D), x.dtype),
        grid_spec=pltpu.PrefetchScalarGridSpec(
            num_scalar_prefetch=3,
            grid=(n_tiles, E, n_f),
            in_specs=[
                pl.BlockSpec((1, tm, 1), gw_map),            # combine-weight column
                pl.BlockSpec((tm, D), x_map),                # x tile (resident across e,f)
                pl.BlockSpec((1, D, tf), w1_map, **wkw),     # W1 tile (DMA elided when skipped)
                pl.BlockSpec((1, 1, tf), b1_map),            # b1 chunk
                pl.BlockSpec((1, tf, D), w2_map, **wkw),     # W2 tile (DMA elided when skipped)
            ],
            out_specs=pl.BlockSpec((tm, D), out_map),
            scratch_shapes=[pltpu.VMEM((tm, D), jnp.float32)],
        ),
        compiler_params=pltpu.CompilerParams(
            dimension_semantics=("parallel", "arbitrary", "arbitrary"),
            vmem_limit_bytes=vmem_limit,
        ),
        cost_estimate=cost,
    )(hit_i32, sched_e, sched_f, gw_cols, xfc, w1c, b1r, w2c)

    # second-layer bias hoisted out of the kernel: sum_e gate_weight[e] * b2[e]
    out = out[:N].astype(jnp.float32) + jnp.dot(
        gw, b2.astype(jnp.float32), preferred_element_type=jnp.float32)
    return out.astype(x.dtype).reshape(B, T, D)


def init_params(key, d_model, dim_feedforward, num_experts):
    """Deterministic, PyTorch-Linear-style uniform init."""
    ks = jax.random.split(key, 6)

    def uni(k, shape, fan_in):
        bound = 1.0 / jnp.sqrt(fan_in)
        return jax.random.uniform(k, shape, jnp.float32, -bound, bound)

    return dict(
        wg=uni(ks[0], (d_model, num_experts), d_model),
        bg=uni(ks[1], (1, num_experts), d_model),
        w1=uni(ks[2], (num_experts, d_model, dim_feedforward), d_model),
        b1=uni(ks[3], (num_experts, dim_feedforward), d_model),
        w2=uni(ks[4], (num_experts, dim_feedforward, d_model), dim_feedforward),
        b2=uni(ks[5], (num_experts, d_model), dim_feedforward),
    )


def moe_reference(x, params):
    """Pure-JAX reference mirroring the PyTorch forward (eval mode)."""
    wg, bg, w1, b1, w2, b2 = (
        params["wg"], params["bg"], params["w1"], params["b1"], params["w2"], params["b2"]
    )
    logits = jnp.einsum("btd,de->bte", x, wg) + bg[0]
    scores = jax.nn.softmax(logits, axis=-1)
    top2_scores, top2_idx = jax.lax.top_k(scores, 2)
    out = jnp.zeros_like(x)
    E = wg.shape[1]
    for rank in range(2):
        idx = top2_idx[..., rank]
        w = top2_scores[..., rank][..., None]
        for e in range(E):
            h = jax.nn.relu(jnp.einsum("btd,df->btf", x, w1[e]) + b1[e])
            y = jnp.einsum("btf,fd->btd", h, w2[e]) + b2[e]
            mask = (idx == e)[..., None]
            out = out + jnp.where(mask, w * y, 0.0)
    return out


if __name__ == "__main__":
    # Accurate f32 reference / gating so the comparison is meaningful on TPU.
    jax.config.update("jax_default_matmul_precision", "highest")

    B, T, D, DFF, E = 2, 8, 32, 64, 4
    key = jax.random.PRNGKey(0)
    kx, kp = jax.random.split(key)
    x = jax.random.normal(kx, (B, T, D), jnp.float32)
    params = init_params(kp, D, DFF, E)

    ref = moe_reference(x, params)

    # f32 MXU path — tight check.
    out_f32 = jax.block_until_ready(
        jax.jit(functools.partial(moe_feedforward_top2, tm=256, tf=512,
                                  compute_dtype=jnp.float32))(x, params))
    assert out_f32.shape == (B, T, D)
    assert jnp.allclose(out_f32, ref, atol=1e-2, rtol=1e-2), "f32 kernel mismatch vs reference"

    # default path: bf16 weights + activations, f32 accumulation / gating — loose tolerance.
    out_bf16 = jax.block_until_ready(jax.jit(moe_feedforward_top2)(x, params))
    assert out_bf16.shape == (B, T, D)
    assert jnp.allclose(out_bf16, ref, atol=6e-2, rtol=6e-2), "bf16 kernel mismatch vs reference"

    print("KERNEL_OK")
</pallas_src>

<mosaic_0001>
module attributes {stable_mosaic.version = 11 : i64} {
  func.func @_moe_expert_kernel(%arg0: i32, %arg1: i32, %arg2: i32, %arg3: memref<4xi32, #tpu.memory_space<smem>>, %arg4: memref<4xi32, #tpu.memory_space<smem>>, %arg5: memref<4xi32, #tpu.memory_space<smem>>, %arg6: memref<1x256x1xf32, #tpu.memory_space<vmem>>, %arg7: memref<256x32xf32, #tpu.memory_space<vmem>>, %arg8: memref<1x32x64xf32, #tpu.memory_space<vmem>>, %arg9: memref<1x1x64xf32, #tpu.memory_space<vmem>>, %arg10: memref<1x64x32xf32, #tpu.memory_space<vmem>>, %arg11: memref<256x32xf32, #tpu.memory_space<vmem>>, %arg12: memref<256x32xf32, #tpu.memory_space<vmem>>) attributes {dimension_semantics = [#tpu.dimension_semantics<parallel>, #tpu.dimension_semantics<arbitrary>, #tpu.dimension_semantics<arbitrary>], iteration_bounds = array<i64: 1, 4, 1>, scalar_prefetch = 3 : i64, scratch_operands = 1 : i64, tpu.core_type = #tpu.core_type<tc>, window_params = [{transform_indices = @transform_0, window_bounds = array<i64: 1, 256, 1>}, {transform_indices = @transform_1, window_bounds = array<i64: 256, 32>}, {transform_indices = @transform_2, window_bounds = array<i64: 1, 32, 64>}, {transform_indices = @transform_3, window_bounds = array<i64: 1, 1, 64>}, {transform_indices = @transform_4, window_bounds = array<i64: 1, 64, 32>}, {transform_indices = @transform_5, window_bounds = array<i64: 256, 32>}]} {
    %c0_i32 = arith.constant 0 : i32
    %0 = arith.cmpi eq, %arg1, %c0_i32 : i32
    %c0_i32_0 = arith.constant 0 : i32
    %1 = arith.cmpi eq, %arg2, %c0_i32_0 : i32
    %2 = arith.andi %0, %1 : i1
    %3 = arith.extui %2 : i1 to i32
    %c0_i32_1 = arith.constant 0 : i32
    %4 = arith.cmpi ne, %3, %c0_i32_1 : i32
    scf.if %4 {
      %cst = arith.constant 0.000000e+00 : f32
      %17 = vector.broadcast %cst : f32 to vector<256x32xf32>
      %c0 = arith.constant 0 : index
      %c0_6 = arith.constant 0 : index
      %18 = vector.load %arg12[%c0, %c0_6] : memref<256x32xf32, #tpu.memory_space<vmem>>, vector<256x32xf32>
      tpu.vector_store %arg12[%c0, %c0_6], %17 {strides = array<i32>} : memref<256x32xf32, #tpu.memory_space<vmem>>, vector<256x32xf32>,
    } else {
    }
    %c4_i32 = arith.constant 4 : i32
    %5 = arith.muli %arg0, %c4_i32 : i32
    %6 = arith.addi %5, %arg1 : i32
    %7 = arith.index_cast %6 : i32 to index
    %8 = memref.load %arg3[%7] : memref<4xi32, #tpu.memory_space<smem>>
    %c0_i32_2 = arith.constant 0 : i32
    %9 = arith.cmpi ne, %8, %c0_i32_2 : i32
    %10 = arith.extui %9 : i1 to i32
    %c0_i32_3 = arith.constant 0 : i32
    %11 = arith.cmpi ne, %10, %c0_i32_3 : i32
    scf.if %11 {
      %c0 = arith.constant 0 : index
      %c0_6 = arith.constant 0 : index
      %c0_7 = arith.constant 0 : index
      %17 = vector.load %arg6[%c0, %c0_6, %c0_7] : memref<1x256x1xf32, #tpu.memory_space<vmem>>, vector<1x256x1xf32>
      %18 = vector.shape_cast %17 : vector<1x256x1xf32> to vector<256x1xf32>
      %c0_8 = arith.constant 0 : index
      %c0_9 = arith.constant 0 : index
      %19 = vector.load %arg7[%c0_8, %c0_9] : memref<256x32xf32, #tpu.memory_space<vmem>>, vector<256x32xf32>
      %c0_10 = arith.constant 0 : index
      %c0_11 = arith.constant 0 : index
      %c0_12 = arith.constant 0 : index
      %20 = vector.load %arg8[%c0_10, %c0_11, %c0_12] : memref<1x32x64xf32, #tpu.memory_space<vmem>>, vector<1x32x64xf32>
      %21 = vector.shape_cast %20 : vector<1x32x64xf32> to vector<32x64xf32>
      %cst = arith.constant dense<0.000000e+00> : vector<256x64xf32>
      %22 = tpu.matmul %19, %21, %cst {dimension_numbers = #tpu.dot_dimension_numbers<[1], [0], [0], [1], [0, 0, 1, 1], [], []>, precision = #tpu.contract_precision<fp32>} : vector<256x32xf32>, vector<32x64xf32>, vector<256x64xf32> -> vector<256x64xf32>
      %c0_13 = arith.constant 0 : index
      %c0_14 = arith.constant 0 : index
      %c0_15 = arith.constant 0 : index
      %23 = vector.load %arg9[%c0_13, %c0_14, %c0_15] : memref<1x1x64xf32, #tpu.memory_space<vmem>>, vector<1x1x64xf32>
      %24 = vector.shape_cast %23 : vector<1x1x64xf32> to vector<1x64xf32>
      %25 = vector.broadcast %24 : vector<1x64xf32> to vector<256x64xf32>
      %26 = arith.addf %22, %25 : vector<256x64xf32>
      %cst_16 = arith.constant 0.000000e+00 : f32
      %27 = vector.broadcast %cst_16 : f32 to vector<256x64xf32>
      %28 = arith.maximumf %26, %27 : vector<256x64xf32>
      %c0_17 = arith.constant 0 : index
      %c0_18 = arith.constant 0 : index
      %c0_19 = arith.constant 0 : index
      %29 = vector.load %arg10[%c0_17, %c0_18, %c0_19] : memref<1x64x32xf32, #tpu.memory_space<vmem>>, vector<1x64x32xf32>
      %30 = vector.shape_cast %29 : vector<1x64x32xf32> to vector<64x32xf32>
      %cst_20 = arith.constant dense<0.000000e+00> : vector<256x32xf32>
      %31 = tpu.matmul %28, %30, %cst_20 {dimension_numbers = #tpu.dot_dimension_numbers<[1], [0], [0], [1], [0, 0, 1, 1], [], []>, precision = #tpu.contract_precision<fp32>} : vector<256x64xf32>, vector<64x32xf32>, vector<256x32xf32> -> vector<256x32xf32>
      %c0_21 = arith.constant 0 : index
      %c0_22 = arith.constant 0 : index
      %32 = vector.load %arg12[%c0_21, %c0_22] : memref<256x32xf32, #tpu.memory_space<vmem>>, vector<256x32xf32>
      %33 = vector.broadcast %18 : vector<256x1xf32> to vector<256x32xf32>
      %34 = arith.mulf %33, %31 : vector<256x32xf32>
      %35 = arith.addf %32, %34 : vector<256x32xf32>
      %c0_23 = arith.constant 0 : index
      %c0_24 = arith.constant 0 : index
      %36 = vector.load %arg12[%c0_23, %c0_24] : memref<256x32xf32, #tpu.memory_space<vmem>>, vector<256x32xf32>
      tpu.vector_store %arg12[%c0_23, %c0_24], %35 {strides = array<i32>} : memref<256x32xf32, #tpu.memory_space<vmem>>, vector<256x32xf32>,
    } else {
    }
    %c3_i32 = arith.constant 3 : i32
    %12 = arith.cmpi eq, %arg1, %c3_i32 : i32
    %c0_i32_4 = arith.constant 0 : i32
    %13 = arith.cmpi eq, %arg2, %c0_i32_4 : i32
    %14 = arith.andi %12, %13 : i1
    %15 = arith.extui %14 : i1 to i32
    %c0_i32_5 = arith.constant 0 : i32
    %16 = arith.cmpi ne, %15, %c0_i32_5 : i32
    scf.if %16 {
      %c0 = arith.constant 0 : index
      %c0_6 = arith.constant 0 : index
      %17 = vector.load %arg12[%c0, %c0_6] : memref<256x32xf32, #tpu.memory_space<vmem>>, vector<256x32xf32>
      %c0_7 = arith.constant 0 : index
      %c0_8 = arith.constant 0 : index
      %18 = vector.load %arg11[%c0_7, %c0_8] : memref<256x32xf32, #tpu.memory_space<vmem>>, vector<256x32xf32>
      tpu.vector_store %arg11[%c0_7, %c0_8], %17 {strides = array<i32>} : memref<256x32xf32, #tpu.memory_space<vmem>>, vector<256x32xf32>,
    } else {
    }
    return
  }
  func.func @transform_0(%arg0: i32, %arg1: i32, %arg2: i32, %arg3: memref<4xi32, #tpu.memory_space<smem>>, %arg4: memref<4xi32, #tpu.memory_space<smem>>, %arg5: memref<4xi32, #tpu.memory_space<smem>>) -> (i32, i32, i32) {
    %c0_i32 = arith.constant 0 : i32
    %c0_i32_0 = arith.constant 0 : i32
    return %arg1, %arg0, %c0_i32 : i32, i32, i32
  }
  func.func @transform_1(%arg0: i32, %arg1: i32, %arg2: i32, %arg3: memref<4xi32, #tpu.memory_space<smem>>, %arg4: memref<4xi32, #tpu.memory_space<smem>>, %arg5: memref<4xi32, #tpu.memory_space<smem>>) -> (i32, i32) {
    %c0_i32 = arith.constant 0 : i32
    %c0_i32_0 = arith.constant 0 : i32
    return %arg0, %c0_i32 : i32, i32
  }
  func.func @transform_2(%arg0: i32, %arg1: i32, %arg2: i32, %arg3: memref<4xi32, #tpu.memory_space<smem>>, %arg4: memref<4xi32, #tpu.memory_space<smem>>, %arg5: memref<4xi32, #tpu.memory_space<smem>>) -> (i32, i32, i32) {
    %c4_i32 = arith.constant 4 : i32
    %0 = arith.muli %arg0, %c4_i32 : i32
    %1 = arith.addi %0, %arg1 : i32
    %c1_i32 = arith.constant 1 : i32
    %2 = arith.muli %1, %c1_i32 : i32
    %3 = arith.addi %2, %arg2 : i32
    %4 = arith.index_cast %3 : i32 to index
    %5 = memref.load %arg4[%4] : memref<4xi32, #tpu.memory_space<smem>>
    %6 = arith.index_cast %3 : i32 to index
    %7 = memref.load %arg5[%6] : memref<4xi32, #tpu.memory_space<smem>>
    %c0_i32 = arith.constant 0 : i32
    %c0_i32_0 = arith.constant 0 : i32
    return %5, %c0_i32, %7 : i32, i32, i32
  }
  func.func @transform_3(%arg0: i32, %arg1: i32, %arg2: i32, %arg3: memref<4xi32, #tpu.memory_space<smem>>, %arg4: memref<4xi32, #tpu.memory_space<smem>>, %arg5: memref<4xi32, #tpu.memory_space<smem>>) -> (i32, i32, i32) {
    %c4_i32 = arith.constant 4 : i32
    %0 = arith.muli %arg0, %c4_i32 : i32
    %1 = arith.addi %0, %arg1 : i32
    %c1_i32 = arith.constant 1 : i32
    %2 = arith.muli %1, %c1_i32 : i32
    %3 = arith.addi %2, %arg2 : i32
    %4 = arith.index_cast %3 : i32 to index
    %5 = memref.load %arg4[%4] : memref<4xi32, #tpu.memory_space<smem>>
    %6 = arith.index_cast %3 : i32 to index
    %7 = memref.load %arg5[%6] : memref<4xi32, #tpu.memory_space<smem>>
    %c0_i32 = arith.constant 0 : i32
    %c0_i32_0 = arith.constant 0 : i32
    return %5, %c0_i32, %7 : i32, i32, i32
  }
  func.func @transform_4(%arg0: i32, %arg1: i32, %arg2: i32, %arg3: memref<4xi32, #tpu.memory_space<smem>>, %arg4: memref<4xi32, #tpu.memory_space<smem>>, %arg5: memref<4xi32, #tpu.memory_space<smem>>) -> (i32, i32, i32) {
    %c4_i32 = arith.constant 4 : i32
    %0 = arith.muli %arg0, %c4_i32 : i32
    %1 = arith.addi %0, %arg1 : i32
    %c1_i32 = arith.constant 1 : i32
    %2 = arith.muli %1, %c1_i32 : i32
    %3 = arith.addi %2, %arg2 : i32
    %4 = arith.index_cast %3 : i32 to index
    %5 = memref.load %arg4[%4] : memref<4xi32, #tpu.memory_space<smem>>
    %6 = arith.index_cast %3 : i32 to index
    %7 = memref.load %arg5[%6] : memref<4xi32, #tpu.memory_space<smem>>
    %c0_i32 = arith.constant 0 : i32
    %c0_i32_0 = arith.constant 0 : i32
    return %5, %7, %c0_i32 : i32, i32, i32
  }
  func.func @transform_5(%arg0: i32, %arg1: i32, %arg2: i32, %arg3: memref<4xi32, #tpu.memory_space<smem>>, %arg4: memref<4xi32, #tpu.memory_space<smem>>, %arg5: memref<4xi32, #tpu.memory_space<smem>>) -> (i32, i32) {
    %c0_i32 = arith.constant 0 : i32
    %c0_i32_0 = arith.constant 0 : i32
    return %arg0, %c0_i32 : i32, i32
  }
}

</mosaic_0001>

<llo_original>
// kernel: moe_feedforward_top2.1
$region0: #{moe_feedforward_top2.1}
  #allocation0 [shape = 'u32[]', space=smem, size = 0x4, offset = 0x4, fixed_abs, tag = 'smem constant byte address 0x4 - core index']
  #allocation1 [shape = 'u32[144,128]{1,0:T(1,128)}', space=vmem, size = 0x12000, scoped, tag = 'internal scratch']
  #allocation2 [shape = 'f32[256,32]{1,0:T(8,128)}', space=vmem, size = 0x20000, scoped, tag = 'scratch operand']
  #allocation3 [shape = 's32[1]{0}', space=sflag, size = 0x4, scoped, tag = 'scoped memory for moe_feedforward_top2.1']
  #allocation4 [shape = 'u8[512]{0}', space=smem, size = 0x200, scoped, tag = 'prefetched SMEM operand 0']
  #allocation5 [shape = 'u8[512]{0}', space=smem, size = 0x200, scoped, tag = 'prefetched SMEM operand 1']
  #allocation6 [shape = 'u8[512]{0}', space=smem, size = 0x200, scoped, tag = 'prefetched SMEM operand 2']
  %s0 = inlined_call_operand.vmem [shape: s32[4], index: 0, kind: input, shape index: {}]
  %s1 = inlined_call_operand.vmem [shape: s32[4], index: 1, kind: input, shape index: {}]
  %s2 = inlined_call_operand.vmem [shape: s32[4], index: 2, kind: input, shape index: {}]
  %s3 = inlined_call_operand.vmem [shape: f32[4,256,1], index: 3, kind: input, shape index: {}]
  %s4 = inlined_call_operand.vmem [shape: f32[256,32], index: 4, kind: input, shape index: {}]
  %s5 = inlined_call_operand.vmem [shape: f32[4,32,64], index: 5, kind: input, shape index: {}]
  %s6 = inlined_call_operand.vmem [shape: f32[4,1,64], index: 6, kind: input, shape index: {}]
  %s7 = inlined_call_operand.vmem [shape: f32[4,64,32], index: 7, kind: input, shape index: {}]
  %s8 = inlined_call_operand.vmem [shape: f32[256,32], index: 8, kind: output, shape index: {}]
  %s9 = sld [smem:[#allocation0]]
  $region65: #{moe_feedforward_top2.1} parent=0
    _
  %s11 = ssub.s32 1, %s9
  %s12 = scalar_select 0, %s11, %s9
  %s13 = sshll.u32 %s0, 4
  %s14 = int_to_ptr.vmem [resolvable:$true] %s13
  %16 = dma.vmem_to_smem %s14, 16, [#allocation4], [#allocation3]
  %s17 = sshll.u32 %s1, 4
  %s18 = int_to_ptr.vmem [resolvable:$true] %s17
  %20 = dma.vmem_to_smem %s18, 16, [#allocation5], [#allocation3]
  %s21 = sshll.u32 %s2, 4
  %s22 = int_to_ptr.vmem [resolvable:$true] %s21
  %24 = dma.vmem_to_smem %s22, 16, [#allocation6], [#allocation3]
  %25 = dma.done [#allocation3], 48
  %26 = sfence
  loop: start=0, step=1, limit=6
  $region2: #{moe_feedforward_top2.1} parent=0 // loop_pre_header
    _
  $region3: #{moe_feedforward_top2.1} parent=0 // loop_header
    %s28 = sphi 0, %s32
    %p29 = scmp.ge.s32.totalorder %s28, 6
    %s35 = sphi 0, %s54
    %s36 = sphi 0, %s50
    %s37 = sphi 0, %s46
    %s38 = sphi 0, %s35
    %s39 = sphi 0, %s36
    %s40 = sphi 0, %s37
    %s41 = sphi 0, %s38
    %s42 = sphi 0, %s39
    %s43 = sphi 0, %s40
    %s59 = sphi 0, %s61
    %s62 = sphi 0, %s59
    %s63 = sphi 0, %s62
    %s79 = sphi 0, %s63
    %s85 = sphi 0, %s87
    %s88 = sphi 0, %s85
    %s89 = sphi 0, %s88
    %s105 = sphi 0, %s89
    %s123 = sphi 0, %s125
    %s126 = sphi 0, %s123
    %s127 = sphi 0, %s126
    %s143 = sphi 0, %s127
    %s161 = sphi 0, %s163
    %s164 = sphi 0, %s161
    %s165 = sphi 0, %s164
    %s181 = sphi 0, %s165
    %s199 = sphi 0, %s201
    %s202 = sphi 0, %s199
    %s203 = sphi 0, %s202
    %s219 = sphi 0, %s203
    %s225 = sphi 0, %s227
    %s228 = sphi 0, %s225
    %s229 = sphi 0, %s228
    %s245 = sphi 0, %s229
  $region4: #{moe_feedforward_top2.1} parent=0 // loop_header_branch
    %31 = sbr.rel (%p29) target = $region8
  $region5: #{moe_feedforward_top2.1} parent=0 // loop_body
    %s33 = ssub.s32 %s28, 1
    %s34 = ssub.s32 %s28, 2
    %s44 = sadd.s32 1, %s37
    %p45 = scmp.ge.s32.totalorder %s44, 1
    %s46 = scalar_select %p45, 0, %s44
    %s47 = sadd.s32 1, %s36
    %s48 = scalar_select %p45, %s47, %s36
    %p49 = scmp.ge.s32.totalorder %s48, 4
    %s50 = scalar_select %p49, 0, %s48
    %s51 = sadd.s32 1, %s35
    %s52 = scalar_select %p49, %s51, %s35
    %p53 = scmp.ge.s32.totalorder %s52, 1
    %s54 = scalar_select %p53, 0, %s52
    %s55 = ssub.s32 %s36, %s50
    %s56 = ssub.s32 %s35, %s54
    %s57 = sor.u32 %s55, %s56
    %p58 = scmp.eq.s32.totalorder %s57, 0
    %s60 = sadd.s32 %s59, 1
    %s61 = scalar_select %p58, %s59, %s60
    %p64 = pneg %p58
    %p65 = scmp.eq.s32.totalorder %s28, 3
    %p66 = por %p64, %p65
    %p67 = scmp.ne.s32.totalorder %s59, %s62
    %p68 = scmp.eq.s32.totalorder %s28, 0
    %p69 = por %p67, %p68
    %p70 = scmp.ne.s32.totalorder %s59, %s62
    %p71 = scmp.eq.s32.totalorder %s33, 3
    %p72 = por %p70, %p71
    %p73 = scmp.ne.s32.totalorder %s62, %s63
    %p74 = scmp.eq.s32.totalorder %s33, 0
    %p75 = por %p73, %p74
    %p76 = scmp.ne.s32.totalorder %s62, %s63
    %p77 = scmp.eq.s32.totalorder %s34, 3
    %p78 = por %p76, %p77
    %p80 = scmp.ne.s32.totalorder %s63, %s79
    %p81 = scmp.eq.s32.totalorder %s34, 0
    %p82 = por %p80, %p81
    %s83 = ssub.s32 %s35, %s54
    %p84 = scmp.eq.s32.totalorder %s83, 0
    %s86 = sadd.s32 %s85, 1
    %s87 = scalar_select %p84, %s85, %s86
    %p90 = pneg %p84
    %p91 = scmp.eq.s32.totalorder %s28, 3
    %p92 = por %p90, %p91
    %p93 = scmp.ne.s32.totalorder %s85, %s88
    %p94 = scmp.eq.s32.totalorder %s28, 0
    %p95 = por %p93, %p94
    %p96 = scmp.ne.s32.totalorder %s85, %s88
    %p97 = scmp.eq.s32.totalorder %s33, 3
    %p98 = por %p96, %p97
    %p99 = scmp.ne.s32.totalorder %s88, %s89
    %p100 = scmp.eq.s32.totalorder %s33, 0
    %p101 = por %p99, %p100
    %p102 = scmp.ne.s32.totalorder %s88, %s89
    %p103 = scmp.eq.s32.totalorder %s34, 3
    %p104 = por %p102, %p103
    %p106 = scmp.ne.s32.totalorder %s89, %s105
    %p107 = scmp.eq.s32.totalorder %s34, 0
    %p108 = por %p106, %p107
    %s109 = smul.u32 %s35, 4
    %s110 = sadd.s32 %s109, %s36
    %s111 = sadd.s32 %s110, %s37
    %s112 = sld [smem:[#allocation5 + %s111]]
    %s113 = sld [smem:[#allocation6 + %s111]]
    %s114 = smul.u32 %s54, 4
    %s115 = sadd.s32 %s114, %s50
    %s116 = sadd.s32 %s115, %s46
    %s117 = sld [smem:[#allocation5 + %s116]]
    %s118 = sld [smem:[#allocation6 + %s116]]
    %s119 = ssub.s32 %s112, %s117
    %s120 = ssub.s32 %s113, %s118
    %s121 = sor.u32 %s119, %s120
    %p122 = scmp.eq.s32.totalorder %s121, 0
    %s124 = sadd.s32 %s123, 1
    %s125 = scalar_select %p122, %s123, %s124
    %p128 = pneg %p122
    %p129 = scmp.eq.s32.totalorder %s28, 3
    %p130 = por %p128, %p129
    %p131 = scmp.ne.s32.totalorder %s123, %s126
    %p132 = scmp.eq.s32.totalorder %s28, 0
    %p133 = por %p131, %p132
    %p134 = scmp.ne.s32.totalorder %s123, %s126
    %p135 = scmp.eq.s32.totalorder %s33, 3
    %p136 = por %p134, %p135
    %p137 = scmp.ne.s32.totalorder %s126, %s127
    %p138 = scmp.eq.s32.totalorder %s33, 0
    %p139 = por %p137, %p138
    %p140 = scmp.ne.s32.totalorder %s126, %s127
    %p141 = scmp.eq.s32.totalorder %s34, 3
    %p142 = por %p140, %p141
    %p144 = scmp.ne.s32.totalorder %s127, %s143
    %p145 = scmp.eq.s32.totalorder %s34, 0
    %p146 = por %p144, %p145
    %s147 = smul.u32 %s35, 4
    %s148 = sadd.s32 %s147, %s36
    %s149 = sadd.s32 %s148, %s37
    %s150 = sld [smem:[#allocation5 + %s149]]
    %s151 = sld [smem:[#allocation6 + %s149]]
    %s152 = smul.u32 %s54, 4
    %s153 = sadd.s32 %s152, %s50
    %s154 = sadd.s32 %s153, %s46
    %s155 = sld [smem:[#allocation5 + %s154]]
    %s156 = sld [smem:[#allocation6 + %s154]]
    %s157 = ssub.s32 %s150, %s155
    %s158 = ssub.s32 %s151, %s156
    %s159 = sor.u32 %s157, %s158
    %p160 = scmp.eq.s32.totalorder %s159, 0
    %s162 = sadd.s32 %s161, 1
    %s163 = scalar_select %p160, %s161, %s162
    %p166 = pneg %p160
    %p167 = scmp.eq.s32.totalorder %s28, 3
    %p168 = por %p166, %p167
    %p169 = scmp.ne.s32.totalorder %s161, %s164
    %p170 = scmp.eq.s32.totalorder %s28, 0
    %p171 = por %p169, %p170
    %p172 = scmp.ne.s32.totalorder %s161, %s164
    %p173 = scmp.eq.s32.totalorder %s33, 3
    %p174 = por %p172, %p173
    %p175 = scmp.ne.s32.totalorder %s164, %s165
    %p176 = scmp.eq.s32.totalorder %s33, 0
    %p177 = por %p175, %p176
    %p178 = scmp.ne.s32.totalorder %s164, %s165
    %p179 = scmp.eq.s32.totalorder %s34, 3
    %p180 = por %p178, %p179
    %p182 = scmp.ne.s32.totalorder %s165, %s181
    %p183 = scmp.eq.s32.totalorder %s34, 0
    %p184 = por %p182, %p183
    %s185 = smul.u32 %s35, 4
    %s186 = sadd.s32 %s185, %s36
    %s187 = sadd.s32 %s186, %s37
    %s188 = sld [smem:[#allocation5 + %s187]]
    %s189 = sld [smem:[#allocation6 + %s187]]
    %s190 = smul.u32 %s54, 4
    %s191 = sadd.s32 %s190, %s50
    %s192 = sadd.s32 %s191, %s46
    %s193 = sld [smem:[#allocation5 + %s192]]
    %s194 = sld [smem:[#allocation6 + %s192]]
    %s195 = ssub.s32 %s188, %s193
    %s196 = ssub.s32 %s189, %s194
    %s197 = sor.u32 %s195, %s196
    %p198 = scmp.eq.s32.totalorder %s197, 0
    %s200 = sadd.s32 %s199, 1
    %s201 = scalar_select %p198, %s199, %s200
    %p204 = pneg %p198
    %p205 = scmp.eq.s32.totalorder %s28, 3
    %p206 = por %p204, %p205
    %p207 = scmp.ne.s32.totalorder %s199, %s202
    %p208 = scmp.eq.s32.totalorder %s28, 0
    %p209 = por %p207, %p208
    %p210 = scmp.ne.s32.totalorder %s199, %s202
    %p211 = scmp.eq.s32.totalorder %s33, 3
    %p212 = por %p210, %p211
    %p213 = scmp.ne.s32.totalorder %s202, %s203
    %p214 = scmp.eq.s32.totalorder %s33, 0
    %p215 = por %p213, %p214
    %p216 = scmp.ne.s32.totalorder %s202, %s203
    %p217 = scmp.eq.s32.totalorder %s34, 3
    %p218 = por %p216, %p217
    %p220 = scmp.ne.s32.totalorder %s203, %s219
    %p221 = scmp.eq.s32.totalorder %s34, 0
    %p222 = por %p220, %p221
    %s223 = ssub.s32 %s35, %s54
    %p224 = scmp.eq.s32.totalorder %s223, 0
    %s226 = sadd.s32 %s225, 1
    %s227 = scalar_select %p224, %s225, %s226
    %p230 = pneg %p224
    %p231 = scmp.eq.s32.totalorder %s28, 3
    %p232 = por %p230, %p231
    %p233 = scmp.ne.s32.totalorder %s225, %s228
    %p234 = scmp.eq.s32.totalorder %s28, 0
    %p235 = por %p233, %p234
    %p236 = scmp.ne.s32.totalorder %s225, %s228
    %p237 = scmp.eq.s32.totalorder %s33, 3
    %p238 = por %p236, %p237
    %p239 = scmp.ne.s32.totalorder %s228, %s229
    %p240 = scmp.eq.s32.totalorder %s33, 0
    %p241 = por %p239, %p240
    %p242 = scmp.ne.s32.totalorder %s228, %s229
    %p243 = scmp.eq.s32.totalorder %s34, 3
    %p244 = por %p242, %p243
    %p246 = scmp.ne.s32.totalorder %s229, %s245
    %p247 = scmp.eq.s32.totalorder %s34, 0
    %p248 = por %p246, %p247
    %p249 = scmp.le.s32.totalorder 1, %s28
    %p250 = scmp.lt.s32.totalorder %s28, 5
    %p251 = pnand %p249, %p250
    %p252 = pneg %p251
    // Predicated region
    $region9: #{moe_feedforward_top2.1} parent=5 // pred_check
      _
    $region10: #{moe_feedforward_top2.1} parent=5 // pred_check_branch
      %254 = sbr.rel (%p251) target = $region12
    $region11: #{moe_feedforward_top2.1} parent=5 // pred_region
      %s255 = ssub.s32 %s28, 1
      // Predicated region
      $region13: #{moe_feedforward_top2.1} parent=11 // pred_check
        %p256 = pneg %p101
      $region14: #{moe_feedforward_top2.1} parent=11 // pred_check_branch
        %258 = sbr.rel (%p256) target = $region16
      $region15: #{moe_feedforward_top2.1} parent=11 // pred_region
        %s259 = smul.u32 32, %s38
        %p260 = scmp.lt.s32.totalorder %s259, 31
        %s261 = scalar_select %p260, %s259, 31
        %s262 = smul.addr %s261, 8
        %s263 = scalar_lea.vmem %s4, %s262
        %s264 = smul.u32 32, %s38
      $region16: #{moe_feedforward_top2.1} parent=11 // pred_fallthru
        _
    $region12: #{moe_feedforward_top2.1} parent=5 // pred_fallthru
      _
    %p265 = scmp.lt.s32.totalorder %s28, 4
    // Predicated region
    $region17: #{moe_feedforward_top2.1} parent=5 // pred_check
      %p266 = pneg %p265
    $region18: #{moe_feedforward_top2.1} parent=5 // pred_check_branch
      %268 = sbr.rel (%p266) target = $region20
    $region19: #{moe_feedforward_top2.1} parent=5 // pred_region
      // Predicated region
      $region21: #{moe_feedforward_top2.1} parent=19 // pred_check
        %p269 = pneg %p69
      $region22: #{moe_feedforward_top2.1} parent=19 // pred_check_branch
        %271 = sbr.rel (%p269) target = $region24
      $region23: #{moe_feedforward_top2.1} parent=19 // pred_region
        %s272 = smul.u32 32, %s35
        %p273 = scmp.lt.s32.totalorder %s36, 3
        %s274 = scalar_select %p273, %s36, 3
        %p275 = scmp.lt.s32.totalorder %s272, 31
        %s276 = scalar_select %p275, %s272, 31
        %s277 = smul.addr %s274, 32
        %s278 = sadd.s32 %s276, %s277
        %s279 = smul.addr %s278, 8
        %s280 = scalar_lea.vmem %s3, %s279
        %s281 = smul.u32 32, %s35
      $region24: #{moe_feedforward_top2.1} parent=19 // pred_fallthru
        _
      // Predicated region
      $region25: #{moe_feedforward_top2.1} parent=19 // pred_check
        %p282 = pneg %p133
      $region26: #{moe_feedforward_top2.1} parent=19 // pred_check_branch
        %284 = sbr.rel (%p282) target = $region28
      $region27: #{moe_feedforward_top2.1} parent=19 // pred_region
        %s285 = smul.u32 %s35, 4
        %s286 = sadd.s32 %s285, %s36
        %s287 = sadd.s32 %s286, %s37
        %s288 = sld [smem:[#allocation5 + %s287]]
        %s289 = sld [smem:[#allocation6 + %s287]]
        %p290 = scmp.lt.s32.totalorder %s288, 3
        %s291 = scalar_select %p290, %s288, 3
        %p292 = scmp.lt.s32.totalorder %s289, 0
        %s293 = scalar_select %p292, %s289, 0
        %s294 = smul.addr %s291, 4
        %s295 = sadd.s32 %s293, %s294
        %s296 = smul.addr %s295, 8
        %s297 = scalar_lea.vmem %s5, %s296
        %s298 = smul.u32 %s35, 4
        %s299 = sadd.s32 %s298, %s36
        %s300 = sadd.s32 %s299, %s37
        %s301 = sld [smem:[#allocation5 + %s300]]
        %s302 = sld [smem:[#allocation6 + %s300]]
      $region28: #{moe_feedforward_top2.1} parent=19 // pred_fallthru
        _
      // Predicated region
      $region29: #{moe_feedforward_top2.1} parent=19 // pred_check
        %p303 = pneg %p171
      $region30: #{moe_feedforward_top2.1} parent=19 // pred_check_branch
        %305 = sbr.rel (%p303) target = $region32
      $region31: #{moe_feedforward_top2.1} parent=19 // pred_region
        %s306 = smul.u32 %s35, 4
        %s307 = sadd.s32 %s306, %s36
        %s308 = sadd.s32 %s307, %s37
        %s309 = sld [smem:[#allocation5 + %s308]]
        %s310 = sld [smem:[#allocation6 + %s308]]
        %p311 = scmp.lt.s32.totalorder %s309, 3
        %s312 = scalar_select %p311, %s309, 3
        %p313 = scmp.lt.s32.totalorder %s310, 0
        %s314 = scalar_select %p313, %s310, 0
        %s315 = sadd.s32 %s314, %s312
        %s316 = scalar_lea.vmem %s6, %s315
        %s317 = smul.u32 %s35, 4
        %s318 = sadd.s32 %s317, %s36
        %s319 = sadd.s32 %s318, %s37
        %s320 = sld [smem:[#allocation5 + %s319]]
        %s321 = sld [smem:[#allocation6 + %s319]]
      $region32: #{moe_feedforward_top2.1} parent=19 // pred_fallthru
        _
      // Predicated region
      $region33: #{moe_feedforward_top2.1} parent=19 // pred_check
        %p322 = pneg %p209
      $region34: #{moe_feedforward_top2.1} parent=19 // pred_check_branch
        %324 = sbr.rel (%p322) target = $region36
      $region35: #{moe_feedforward_top2.1} parent=19 // pred_region
        %s325 = smul.u32 %s35, 4
        %s326 = sadd.s32 %s325, %s36
        %s327 = sadd.s32 %s326, %s37
        %s328 = sld [smem:[#allocation5 + %s327]]
        %s329 = sld [smem:[#allocation6 + %s327]]
        %s330 = smul.u32 8, %s329
        %p331 = scmp.lt.s32.totalorder %s328, 3
        %s332 = scalar_select %p331, %s328, 3
        %p333 = scmp.lt.s32.totalorder %s330, 7
        %s334 = scalar_select %p333, %s330, 7
        %s335 = smul.addr %s332, 8
        %s336 = sadd.s32 %s334, %s335
        %s337 = smul.addr %s336, 8
        %s338 = scalar_lea.vmem %s7, %s337
        %s339 = smul.u32 %s35, 4
        %s340 = sadd.s32 %s339, %s36
        %s341 = sadd.s32 %s340, %s37
        %s342 = sld [smem:[#allocation5 + %s341]]
        %s343 = sld [smem:[#allocation6 + %s341]]
        %s344 = smul.u32 8, %s343
      $region36: #{moe_feedforward_top2.1} parent=19 // pred_fallthru
        _
    $region20: #{moe_feedforward_top2.1} parent=5 // pred_fallthru
      _
    %p345 = scmp.le.s32.totalorder 1, %s28
    %p346 = scmp.lt.s32.totalorder %s28, 5
    %p347 = pnand %p345, %p346
    %p348 = pneg %p347
    // Predicated region
    $region37: #{moe_feedforward_top2.1} parent=5 // pred_check
      _
    $region38: #{moe_feedforward_top2.1} parent=5 // pred_check_branch
      %350 = sbr.rel (%p347) target = $region40
    $region39: #{moe_feedforward_top2.1} parent=5 // pred_region
      %s351 = ssub.s32 %s28, 1
      %s352 = smul.u32 32, %s38
      %p353 = scmp.lt.s32.totalorder %s39, 3
      %s354 = scalar_select %p353, %s39, 3
      %p355 = scmp.lt.s32.totalorder %s352, 31
      %s356 = scalar_select %p355, %s352, 31
      %s357 = smul.addr %s354, 32
      %s358 = sadd.s32 %s356, %s357
      %s359 = smul.addr %s358, 8
      %s360 = scalar_lea.vmem %s3, %s359
      %p361 = pneg %p75
      %p362 = pneg %p72
      %s363 = smul.u32 32, %s38
      %p364 = scmp.lt.s32.totalorder %s363, 31
      %s365 = scalar_select %p364, %s363, 31
      %s366 = smul.addr %s365, 8
      %s367 = scalar_lea.vmem %s4, %s366
      %p368 = pneg %p101
      %p369 = pneg %p98
      %s370 = smul.u32 %s38, 4
      %s371 = sadd.s32 %s370, %s39
      %s372 = sadd.s32 %s371, %s40
      %s373 = sld [smem:[#allocation5 + %s372]]
      %s374 = sld [smem:[#allocation6 + %s372]]
      %p375 = scmp.lt.s32.totalorder %s373, 3
      %s376 = scalar_select %p375, %s373, 3
      %p377 = scmp.lt.s32.totalorder %s374, 0
      %s378 = scalar_select %p377, %s374, 0
      %s379 = smul.addr %s376, 4
      %s380 = sadd.s32 %s378, %s379
      %s381 = smul.addr %s380, 8
      %s382 = scalar_lea.vmem %s5, %s381
      %p383 = pneg %p139
      %p384 = pneg %p136
      %s385 = smul.u32 %s38, 4
      %s386 = sadd.s32 %s385, %s39
      %s387 = sadd.s32 %s386, %s40
      %s388 = sld [smem:[#allocation5 + %s387]]
      %s389 = sld [smem:[#allocation6 + %s387]]
      %p390 = scmp.lt.s32.totalorder %s388, 3
      %s391 = scalar_select %p390, %s388, 3
      %p392 = scmp.lt.s32.totalorder %s389, 0
      %s393 = scalar_select %p392, %s389, 0
      %s394 = sadd.s32 %s393, %s391
      %s395 = scalar_lea.vmem %s6, %s394
      %p396 = pneg %p177
      %p397 = pneg %p174
      %s398 = smul.u32 %s38, 4
      %s399 = sadd.s32 %s398, %s39
      %s400 = sadd.s32 %s399, %s40
      %s401 = sld [smem:[#allocation5 + %s400]]
      %s402 = sld [smem:[#allocation6 + %s400]]
      %s403 = smul.u32 8, %s402
      %p404 = scmp.lt.s32.totalorder %s401, 3
      %s405 = scalar_select %p404, %s401, 3
      %p406 = scmp.lt.s32.totalorder %s403, 7
      %s407 = scalar_select %p406, %s403, 7
      %s408 = smul.addr %s405, 8
      %s409 = sadd.s32 %s407, %s408
      %s410 = smul.addr %s409, 8
      %s411 = scalar_lea.vmem %s7, %s410
      %p412 = pneg %p215
      %p413 = pneg %p212
      %p414 = pneg %p241
      %p415 = pneg %p238
      %s416 = smul.u32 32, %s38
      %p417 = scmp.lt.s32.totalorder %s416, 31
      %s418 = scalar_select %p417, %s416, 31
      %s419 = smul.addr %s418, 8
      %s420 = scalar_lea.vmem %s8, %s419
      %s421 = smul.u32 32, %s38
      %p422 = scmp.lt.s32.totalorder %s39, 3
      %s423 = scalar_select %p422, %s39, 3
      %p424 = scmp.lt.s32.totalorder %s421, 31
      %s425 = scalar_select %p424, %s421, 31
      %s426 = smul.addr %s423, 32
      %s427 = sadd.s32 %s425, %s426
      %s428 = smul.addr %s427, 8
      %s429 = scalar_lea.vmem %s3, %s428
      %s430 = smul.u32 32, %s38
      %s431 = smul.u32 32, %s38
      %p432 = scmp.lt.s32.totalorder %s431, 31
      %s433 = scalar_select %p432, %s431, 31
      %s434 = smul.addr %s433, 8
      %s435 = scalar_lea.vmem %s4, %s434
      %s436 = smul.u32 32, %s38
      %s437 = smul.u32 %s38, 4
      %s438 = sadd.s32 %s437, %s39
      %s439 = sadd.s32 %s438, %s40
      %s440 = sld [smem:[#allocation5 + %s439]]
      %s441 = sld [smem:[#allocation6 + %s439]]
      %p442 = scmp.lt.s32.totalorder %s440, 3
      %s443 = scalar_select %p442, %s440, 3
      %p444 = scmp.lt.s32.totalorder %s441, 0
      %s445 = scalar_select %p444, %s441, 0
      %s446 = smul.addr %s443, 4
      %s447 = sadd.s32 %s445, %s446
      %s448 = smul.addr %s447, 8
      %s449 = scalar_lea.vmem %s5, %s448
      %s450 = smul.u32 %s38, 4
      %s451 = sadd.s32 %s450, %s39
      %s452 = sadd.s32 %s451, %s40
      %s453 = sld [smem:[#allocation5 + %s452]]
      %s454 = sld [smem:[#allocation6 + %s452]]
      %s455 = smul.u32 %s38, 4
      %s456 = sadd.s32 %s455, %s39
      %s457 = sadd.s32 %s456, %s40
      %s458 = sld [smem:[#allocation5 + %s457]]
      %s459 = sld [smem:[#allocation6 + %s457]]
      %p460 = scmp.lt.s32.totalorder %s458, 3
      %s461 = scalar_select %p460, %s458, 3
      %p462 = scmp.lt.s32.totalorder %s459, 0
      %s463 = scalar_select %p462, %s459, 0
      %s464 = sadd.s32 %s463, %s461
      %s465 = scalar_lea.vmem %s6, %s464
      %s466 = smul.u32 %s38, 4
      %s467 = sadd.s32 %s466, %s39
      %s468 = sadd.s32 %s467, %s40
      %s469 = sld [smem:[#allocation5 + %s468]]
      %s470 = sld [smem:[#allocation6 + %s468]]
      %s471 = smul.u32 %s38, 4
      %s472 = sadd.s32 %s471, %s39
      %s473 = sadd.s32 %s472, %s40
      %s474 = sld [smem:[#allocation5 + %s473]]
      %s475 = sld [smem:[#allocation6 + %s473]]
      %s476 = smul.u32 8, %s475
      %p477 = scmp.lt.s32.totalorder %s474, 3
      %s478 = scalar_select %p477, %s474, 3
      %p479 = scmp.lt.s32.totalorder %s476, 7
      %s480 = scalar_select %p479, %s476, 7
      %s481 = smul.addr %s478, 8
      %s482 = sadd.s32 %s480, %s481
      %s483 = smul.addr %s482, 8
      %s484 = scalar_lea.vmem %s7, %s483
      %s485 = smul.u32 %s38, 4
      %s486 = sadd.s32 %s485, %s39
      %s487 = sadd.s32 %s486, %s40
      %s488 = sld [smem:[#allocation5 + %s487]]
      %s489 = sld [smem:[#allocation6 + %s487]]
      %s490 = smul.u32 8, %s489
      %s491 = smul.u32 32, %s38
      %p492 = scmp.lt.s32.totalorder %s491, 31
      %s493 = scalar_select %p492, %s491, 31
      %s494 = smul.addr %s493, 8
      %s495 = scalar_lea.vmem %s8, %s494
      %s496 = smul.u32 32, %s38
      %p497 = scmp.eq.s32.totalorder %s39, 0
      %p498 = scmp.eq.s32.totalorder %s40, 0
      %p499 = pnand %p497, %p498
      %p500 = pneg %p499
      // Predicated region
      $region41: #{moe_feedforward_top2.1} parent=39 // pred_check
        _
      $region42: #{moe_feedforward_top2.1} parent=39 // pred_check_branch
        %502 = sbr.rel (%p499) target = $region44
      $region43: #{moe_feedforward_top2.1} parent=39 // pred_region
        %vm503 = vcmask 261120
        %504 = vst.msk [vmem:[#allocation2] sm:$0xff] %vm503, 0.0
        %505 = vst.msk [vmem:[#allocation2 + $0x8] sm:$0xff] %vm503, 0.0
        %506 = vst.msk [vmem:[#allocation2 + $0x10] sm:$0xff] %vm503, 0.0
        %507 = vst.msk [vmem:[#allocation2 + $0x18] sm:$0xff] %vm503, 0.0
        %508 = vst.msk [vmem:[#allocation2 + $0x20] sm:$0xff] %vm503, 0.0
        %509 = vst.msk [vmem:[#allocation2 + $0x28] sm:$0xff] %vm503, 0.0
        %510 = vst.msk [vmem:[#allocation2 + $0x30] sm:$0xff] %vm503, 0.0
        %511 = vst.msk [vmem:[#allocation2 + $0x38] sm:$0xff] %vm503, 0.0
        %512 = vst.msk [vmem:[#allocation2 + $0x40] sm:$0xff] %vm503, 0.0
        %513 = vst.msk [vmem:[#allocation2 + $0x48] sm:$0xff] %vm503, 0.0
        %514 = vst.msk [vmem:[#allocation2 + $0x50] sm:$0xff] %vm503, 0.0
        %515 = vst.msk [vmem:[#allocation2 + $0x58] sm:$0xff] %vm503, 0.0
        %516 = vst.msk [vmem:[#allocation2 + $0x60] sm:$0xff] %vm503, 0.0
        %517 = vst.msk [vmem:[#allocation2 + $0x68] sm:$0xff] %vm503, 0.0
        %518 = vst.msk [vmem:[#allocation2 + $0x70] sm:$0xff] %vm503, 0.0
        %519 = vst.msk [vmem:[#allocation2 + $0x78] sm:$0xff] %vm503, 0.0
        %520 = vst.msk [vmem:[#allocation2 + $0x80] sm:$0xff] %vm503, 0.0
        %521 = vst.msk [vmem:[#allocation2 + $0x88] sm:$0xff] %vm503, 0.0
        %522 = vst.msk [vmem:[#allocation2 + $0x90] sm:$0xff] %vm503, 0.0
        %523 = vst.msk [vmem:[#allocation2 + $0x98] sm:$0xff] %vm503, 0.0
        %524 = vst.msk [vmem:[#allocation2 + $0xa0] sm:$0xff] %vm503, 0.0
        %525 = vst.msk [vmem:[#allocation2 + $0xa8] sm:$0xff] %vm503, 0.0
        %526 = vst.msk [vmem:[#allocation2 + $0xb0] sm:$0xff] %vm503, 0.0
        %527 = vst.msk [vmem:[#allocation2 + $0xb8] sm:$0xff] %vm503, 0.0
        %528 = vst.msk [vmem:[#allocation2 + $0xc0] sm:$0xff] %vm503, 0.0
        %529 = vst.msk [vmem:[#allocation2 + $0xc8] sm:$0xff] %vm503, 0.0
        %530 = vst.msk [vmem:[#allocation2 + $0xd0] sm:$0xff] %vm503, 0.0
        %531 = vst.msk [vmem:[#allocation2 + $0xd8] sm:$0xff] %vm503, 0.0
        %532 = vst.msk [vmem:[#allocation2 + $0xe0] sm:$0xff] %vm503, 0.0
        %533 = vst.msk [vmem:[#allocation2 + $0xe8] sm:$0xff] %vm503, 0.0
        %534 = vst.msk [vmem:[#allocation2 + $0xf0] sm:$0xff] %vm503, 0.0
        %535 = vst.msk [vmem:[#allocation2 + $0xf8] sm:$0xff] %vm503, 0.0
      $region44: #{moe_feedforward_top2.1} parent=39 // pred_fallthru
        _
      %s536 = smul.u32 %s38, 4
      %s537 = sadd.s32 %s536, %s39
      %s538 = sld [smem:[#allocation4 + %s537]]
      %p539 = scmp.ne.s32.totalorder %s538, 0
      // Predicated region
      $region45: #{moe_feedforward_top2.1} parent=39 // pred_check
        %p540 = pneg %p539
      $region46: #{moe_feedforward_top2.1} parent=39 // pred_check_branch
        %542 = sbr.rel (%p540) target = $region48
      $region47: #{moe_feedforward_top2.1} parent=39 // pred_region
        %v543 = vld [vmem:[%s429] sm:$0xff]
        %v544 = vld [vmem:[%s429 + $0x8] sm:$0xff]
        %v545 = vld [vmem:[%s429 + $0x10] sm:$0xff]
        %v546 = vld [vmem:[%s429 + $0x18] sm:$0xff]
        %v547 = vld [vmem:[%s429 + $0x20] sm:$0xff]
        %v548 = vld [vmem:[%s429 + $0x28] sm:$0xff]
        %v549 = vld [vmem:[%s429 + $0x30] sm:$0xff]
        %v550 = vld [vmem:[%s429 + $0x38] sm:$0xff]
        %v551 = vld [vmem:[%s429 + $0x40] sm:$0xff]
        %v552 = vld [vmem:[%s429 + $0x48] sm:$0xff]
        %v553 = vld [vmem:[%s429 + $0x50] sm:$0xff]
        %v554 = vld [vmem:[%s429 + $0x58] sm:$0xff]
        %v555 = vld [vmem:[%s429 + $0x60] sm:$0xff]
        %v556 = vld [vmem:[%s429 + $0x68] sm:$0xff]
        %v557 = vld [vmem:[%s429 + $0x70] sm:$0xff]
        %v558 = vld [vmem:[%s429 + $0x78] sm:$0xff]
        %v559 = vld [vmem:[%s429 + $0x80] sm:$0xff]
        %v560 = vld [vmem:[%s429 + $0x88] sm:$0xff]
        %v561 = vld [vmem:[%s429 + $0x90] sm:$0xff]
        %v562 = vld [vmem:[%s429 + $0x98] sm:$0xff]
        %v563 = vld [vmem:[%s429 + $0xa0] sm:$0xff]
        %v564 = vld [vmem:[%s429 + $0xa8] sm:$0xff]
        %v565 = vld [vmem:[%s429 + $0xb0] sm:$0xff]
        %v566 = vld [vmem:[%s429 + $0xb8] sm:$0xff]
        %v567 = vld [vmem:[%s429 + $0xc0] sm:$0xff]
        %v568 = vld [vmem:[%s429 + $0xc8] sm:$0xff]
        %v569 = vld [vmem:[%s429 + $0xd0] sm:$0xff]
        %v570 = vld [vmem:[%s429 + $0xd8] sm:$0xff]
        %v571 = vld [vmem:[%s429 + $0xe0] sm:$0xff]
        %v572 = vld [vmem:[%s429 + $0xe8] sm:$0xff]
        %v573 = vld [vmem:[%s429 + $0xf0] sm:$0xff]
        %v574 = vld [vmem:[%s429 + $0xf8] sm:$0xff]
        %v575 = vld [vmem:[%s435] sm:$0xff]
        %v576 = vld [vmem:[%s435 + $0x8] sm:$0xff]
        %v577 = vld [vmem:[%s435 + $0x10] sm:$0xff]
        %v578 = vld [vmem:[%s435 + $0x18] sm:$0xff]
        %v579 = vld [vmem:[%s435 + $0x20] sm:$0xff]
        %v580 = vld [vmem:[%s435 + $0x28] sm:$0xff]
        %v581 = vld [vmem:[%s435 + $0x30] sm:$0xff]
        %v582 = vld [vmem:[%s435 + $0x38] sm:$0xff]
        %v583 = vld [vmem:[%s435 + $0x40] sm:$0xff]
        %v584 = vld [vmem:[%s435 + $0x48] sm:$0xff]
        %v585 = vld [vmem:[%s435 + $0x50] sm:$0xff]
        %v586 = vld [vmem:[%s435 + $0x58] sm:$0xff]
        %v587 = vld [vmem:[%s435 + $0x60] sm:$0xff]
        %v588 = vld [vmem:[%s435 + $0x68] sm:$0xff]
        %v589 = vld [vmem:[%s435 + $0x70] sm:$0xff]
        %v590 = vld [vmem:[%s435 + $0x78] sm:$0xff]
        %v591 = vld [vmem:[%s435 + $0x80] sm:$0xff]
        %v592 = vld [vmem:[%s435 + $0x88] sm:$0xff]
        %v593 = vld [vmem:[%s435 + $0x90] sm:$0xff]
        %v594 = vld [vmem:[%s435 + $0x98] sm:$0xff]
        %v595 = vld [vmem:[%s435 + $0xa0] sm:$0xff]
        %v596 = vld [vmem:[%s435 + $0xa8] sm:$0xff]
        %v597 = vld [vmem:[%s435 + $0xb0] sm:$0xff]
        %v598 = vld [vmem:[%s435 + $0xb8] sm:$0xff]
        %v599 = vld [vmem:[%s435 + $0xc0] sm:$0xff]
        %v600 = vld [vmem:[%s435 + $0xc8] sm:$0xff]
        %v601 = vld [vmem:[%s435 + $0xd0] sm:$0xff]
        %v602 = vld [vmem:[%s435 + $0xd8] sm:$0xff]
        %v603 = vld [vmem:[%s435 + $0xe0] sm:$0xff]
        %v604 = vld [vmem:[%s435 + $0xe8] sm:$0xff]
        %v605 = vld [vmem:[%s435 + $0xf0] sm:$0xff]
        %v606 = vld [vmem:[%s435 + $0xf8] sm:$0xff]
        %v607 = vld [vmem:[%s449] sm:$0xff]
        %v608 = vld [vmem:[%s449 + $0x8] sm:$0xff]
        %v609 = vld [vmem:[%s449 + $0x10] sm:$0xff]
        %v610 = vld [vmem:[%s449 + $0x18] sm:$0xff]
        %v611 = vld [vmem:[%s465] sm:$0x1]
        %v613 = vlaneseq
        %v614 = vshrl.u32 %v613, 7
        %v615 = vsub.s32 0, %v614
        %v616 = vrot.slane %v611, %v615
        %vm618 = vcmask 261120
        %v620 = vsel %vm618, %v575, 0
        %v623 = vsel %vm618, %v576, 0
        %v626 = vsel %vm618, %v577, 0
        %v629 = vsel %vm618, %v578, 0
        %v632 = vsel %vm618, %v579, 0
        %v635 = vsel %vm618, %v580, 0
        %v638 = vsel %vm618, %v581, 0
        %v641 = vsel %vm618, %v582, 0
        %v644 = vsel %vm618, %v583, 0
        %v647 = vsel %vm618, %v584, 0
        %v650 = vsel %vm618, %v585, 0
        %v653 = vsel %vm618, %v586, 0
        %v656 = vsel %vm618, %v587, 0
        %v659 = vsel %vm618, %v588, 0
        %v662 = vsel %vm618, %v589, 0
        %v665 = vsel %vm618, %v590, 0
        %v668 = vsel %vm618, %v591, 0
        %v671 = vsel %vm618, %v592, 0
        %v674 = vsel %vm618, %v593, 0
        %v677 = vsel %vm618, %v594, 0
        %v680 = vsel %vm618, %v595, 0
        %v683 = vsel %vm618, %v596, 0
        %v686 = vsel %vm618, %v597, 0
        %v689 = vsel %vm618, %v598, 0
        %v692 = vsel %vm618, %v599, 0
        %v695 = vsel %vm618, %v600, 0
        %v698 = vsel %vm618, %v601, 0
        %v701 = vsel %vm618, %v602, 0
        %v704 = vsel %vm618, %v603, 0
        %v707 = vsel %vm618, %v604, 0
        %v710 = vsel %vm618, %v605, 0
        %v713 = vsel %vm618, %v606, 0
        %715 = vmatprep.subr.mxu0 0.0
        %v716 = vand.u32 %v607, 4294901760
        %717 = vmatpush1.msra.mxu0 %v716
        %718 = vmatprep.subr.mxu0 0.0
        %v719 = vand.u32 %v608, 4294901760
        %720 = vmatpush1.msra.mxu0 %v719
        %721 = vmatprep.subr.mxu0 0.0
        %v722 = vand.u32 %v609, 4294901760
        %723 = vmatpush1.msra.mxu0 %v722
        %724 = vmatprep.subr.mxu0 0.0
        %v725 = vand.u32 %v610, 4294901760
        %726 = vmatpush1.msra.mxu0 %v725
        %727 = vmatprep.subr.mxu0 0.0
        %728 = vmatpush1.msra.mxu0 0.0
        %729 = vmatprep.subr.mxu0 0.0
        %730 = vmatpush1.msra.mxu0 0.0
        %731 = vmatprep.subr.mxu0 0.0
        %732 = vmatpush1.msra.mxu0 0.0
        %733 = vmatprep.subr.mxu0 0.0
        %734 = vmatpush1.msra.mxu0 0.0
        %735 = vmatprep.subr.mxu0 0.0
        %736 = vmatpush1.msra.mxu0 0.0
        %737 = vmatprep.subr.mxu0 0.0
        %738 = vmatpush1.msra.mxu0 0.0
        %739 = vmatprep.subr.mxu0 0.0
        %740 = vmatpush1.msra.mxu0 0.0
        %741 = vmatprep.subr.mxu0 0.0
        %742 = vmatpush1.msra.mxu0 0.0
        %743 = vmatprep.subr.mxu0 0.0
        %744 = vmatpush1.msra.mxu0 0.0
        %745 = vmatprep.subr.mxu0 0.0
        %746 = vmatpush1.msra.mxu0 0.0
        %747 = vmatprep.subr.mxu0 0.0
        %748 = vmatpush1.msra.mxu0 0.0
        %749 = vmatprep.subr.mxu0 0.0
        %750 = vmatpush1.msra.mxu0 0.0
        %751 = vmatprep.subr.mxu0 0.0
        %752 = vmatpush1.msra.mxu0 0.0
        %753 = vmatprep.subr.mxu0 0.0
        %754 = vmatpush1.msra.mxu0 0.0
        %755 = vmatprep.subr.mxu0 0.0
        %756 = vmatpush1.msra.mxu0 0.0
        %757 = vmatprep.subr.mxu0 0.0
        %758 = vmatpush1.msra.mxu0 0.0
        %759 = vmatprep.subr.mxu0 0.0
        %760 = vmatpush1.msra.mxu0 0.0
        %761 = vmatprep.subr.mxu0 0.0
        %762 = vmatpush1.msra.mxu0 0.0
        %763 = vmatprep.subr.mxu0 0.0
        %764 = vmatpush1.msra.mxu0 0.0
        %765 = vmatprep.subr.mxu0 0.0
        %766 = vmatpush1.msra.mxu0 0.0
        %767 = vmatprep.subr.mxu0 0.0
        %768 = vmatpush1.msra.mxu0 0.0
        %769 = vmatprep.subr.mxu0 0.0
        %770 = vmatpush1.msra.mxu0 0.0
        %771 = vmatprep.subr.mxu0 0.0
        %772 = vmatpush1.msra.mxu0 0.0
        %773 = vmatprep.subr.mxu0 0.0
        %774 = vmatpush1.msra.mxu0 0.0
        %775 = vmatprep.subr.mxu0 0.0
        %776 = vmatpush1.msra.mxu0 0.0
        %777 = vmatprep.subr.mxu0 0.0
        %778 = vmatpush1.msra.mxu0 0.0
        %779 = vmatprep.subr.mxu0 0.0
        %780 = vmatpush1.msra.mxu0 0.0
        %781 = vmatprep.subr.mxu0 0.0
        %782 = vmatpush1.msra.mxu0 0.0
        %783 = vmatprep.mubr.f32.mxu0 0.0
        %v784 = vand.u32 %v620, 4294901760
        %v785 = vsub.f32 %v620, %v784
        %v786 = vand.u32 %v785, 4294901760
        %v787 = vsub.f32 %v785, %v786
        %v788 = vand.u32 %v787, 4294901760
        %789 = vmatmul.mubr.f32.gmra.mrb[0].mxu0 %v788
        %v790 = vpop.f32.mrb[0].mxu0
        %v791 = vadd.f32 %v616, %v790
        %v792 = vpop.f32.mrb[0].mxu0
        %793 = vmatprep.mubr.f32.mxu0 0.0
        %v794 = vand.u32 %v623, 4294901760
        %v795 = vsub.f32 %v623, %v794
        %v796 = vand.u32 %v795, 4294901760
        %v797 = vsub.f32 %v795, %v796
        %v798 = vand.u32 %v797, 4294901760
        %799 = vmatmul.mubr.f32.gmra.mrb[0].mxu0 %v798
        %v800 = vpop.f32.mrb[0].mxu0
        %v801 = vadd.f32 %v616, %v800
        %v802 = vpop.f32.mrb[0].mxu0
        %803 = vmatprep.mubr.f32.mxu0 0.0
        %v804 = vand.u32 %v626, 4294901760
        %v805 = vsub.f32 %v626, %v804
        %v806 = vand.u32 %v805, 4294901760
        %v807 = vsub.f32 %v805, %v806
        %v808 = vand.u32 %v807, 4294901760
        %809 = vmatmul.mubr.f32.gmra.mrb[0].mxu0 %v808
        %v810 = vpop.f32.mrb[0].mxu0
        %v811 = vadd.f32 %v616, %v810
        %v812 = vpop.f32.mrb[0].mxu0
        %813 = vmatprep.mubr.f32.mxu0 0.0
        %v814 = vand.u32 %v629, 4294901760
        %v815 = vsub.f32 %v629, %v814
        %v816 = vand.u32 %v815, 4294901760
        %v817 = vsub.f32 %v815, %v816
        %v818 = vand.u32 %v817, 4294901760
        %819 = vmatmul.mubr.f32.gmra.mrb[0].mxu0 %v818
        %v820 = vpop.f32.mrb[0].mxu0
        %v821 = vadd.f32 %v616, %v820
        %v822 = vpop.f32.mrb[0].mxu0
        %823 = vmatprep.mubr.f32.mxu0 0.0
        %v824 = vand.u32 %v632, 4294901760
        %v825 = vsub.f32 %v632, %v824
        %v826 = vand.u32 %v825, 4294901760
        %v827 = vsub.f32 %v825, %v826
        %v828 = vand.u32 %v827, 4294901760
        %829 = vmatmul.mubr.f32.gmra.mrb[0].mxu0 %v828
        %v830 = vpop.f32.mrb[0].mxu0
        %v831 = vadd.f32 %v616, %v830
        %v832 = vpop.f32.mrb[0].mxu0
        %833 = vmatprep.mubr.f32.mxu0 0.0
        %v834 = vand.u32 %v635, 4294901760
        %v835 = vsub.f32 %v635, %v834
        %v836 = vand.u32 %v835, 4294901760
        %v837 = vsub.f32 %v835, %v836
        %v838 = vand.u32 %v837, 4294901760
        %839 = vmatmul.mubr.f32.gmra.mrb[0].mxu0 %v838
        %v840 = vpop.f32.mrb[0].mxu0
        %v841 = vadd.f32 %v616, %v840
        %v842 = vpop.f32.mrb[0].mxu0
        %843 = vmatprep.mubr.f32.mxu0 0.0
        %v844 = vand.u32 %v638, 4294901760
        %v845 = vsub.f32 %v638, %v844
        %v846 = vand.u32 %v845, 4294901760
        %v847 = vsub.f32 %v845, %v846
        %v848 = vand.u32 %v847, 4294901760
        %849 = vmatmul.mubr.f32.gmra.mrb[0].mxu0 %v848
        %v850 = vpop.f32.mrb[0].mxu0
        %v851 = vadd.f32 %v616, %v850
        %v852 = vpop.f32.mrb[0].mxu0
        %853 = vmatprep.mubr.f32.mxu0 0.0
        %v854 = vand.u32 %v641, 4294901760
        %v855 = vsub.f32 %v641, %v854
        %v856 = vand.u32 %v855, 4294901760
        %v857 = vsub.f32 %v855, %v856
        %v858 = vand.u32 %v857, 4294901760
        %859 = vmatmul.mubr.f32.gmra.mrb[0].mxu0 %v858
        %v860 = vpop.f32.mrb[0].mxu0
        %v861 = vadd.f32 %v616, %v860
        %v862 = vpop.f32.mrb[0].mxu0
        %863 = vmatprep.mubr.f32.mxu0 0.0
        %v864 = vand.u32 %v644, 4294901760
        %v865 = vsub.f32 %v644, %v864
        %v866 = vand.u32 %v865, 4294901760
        %v867 = vsub.f32 %v865, %v866
        %v868 = vand.u32 %v867, 4294901760
        %869 = vmatmul.mubr.f32.gmra.mrb[0].mxu0 %v868
        %v870 = vpop.f32.mrb[0].mxu0
        %v871 = vadd.f32 %v616, %v870
        %v872 = vpop.f32.mrb[0].mxu0
        %873 = vmatprep.mubr.f32.mxu0 0.0
        %v874 = vand.u32 %v647, 4294901760
        %v875 = vsub.f32 %v647, %v874
        %v876 = vand.u32 %v875, 4294901760
        %v877 = vsub.f32 %v875, %v876
        %v878 = vand.u32 %v877, 4294901760
        %879 = vmatmul.mubr.f32.gmra.mrb[0].mxu0 %v878
        %v880 = vpop.f32.mrb[0].mxu0
        %v881 = vadd.f32 %v616, %v880
        %v882 = vpop.f32.mrb[0].mxu0
        %883 = vmatprep.mubr.f32.mxu0 0.0
        %v884 = vand.u32 %v650, 4294901760
        %v885 = vsub.f32 %v650, %v884
        %v886 = vand.u32 %v885, 4294901760
        %v887 = vsub.f32 %v885, %v886
        %v888 = vand.u32 %v887, 4294901760
        %889 = vmatmul.mubr.f32.gmra.mrb[0].mxu0 %v888
        %v890 = vpop.f32.mrb[0].mxu0
        %v891 = vadd.f32 %v616, %v890
        %v892 = vpop.f32.mrb[0].mxu0
        %893 = vmatprep.mubr.f32.mxu0 0.0
        %v894 = vand.u32 %v653, 4294901760
        %v895 = vsub.f32 %v653, %v894
        %v896 = vand.u32 %v895, 4294901760
        %v897 = vsub.f32 %v895, %v896
        %v898 = vand.u32 %v897, 4294901760
        %899 = vmatmul.mubr.f32.gmra.mrb[0].mxu0 %v898
        %v900 = vpop.f32.mrb[0].mxu0
        %v901 = vadd.f32 %v616, %v900
        %v902 = vpop.f32.mrb[0].mxu0
        %903 = vmatprep.mubr.f32.mxu0 0.0
        %v904 = vand.u32 %v656, 4294901760
        %v905 = vsub.f32 %v656, %v904
        %v906 = vand.u32 %v905, 4294901760
        %v907 = vsub.f32 %v905, %v906
        %v908 = vand.u32 %v907, 4294901760
        %909 = vmatmul.mubr.f32.gmra.mrb[0].mxu0 %v908
        %v910 = vpop.f32.mrb[0].mxu0
        %v911 = vadd.f32 %v616, %v910
        %v912 = vpop.f32.mrb[0].mxu0
        %913 = vmatprep.mubr.f32.mxu0 0.0
        %v914 = vand.u32 %v659, 4294901760
        %v915 = vsub.f32 %v659, %v914
        %v916 = vand.u32 %v915, 4294901760
        %v917 = vsub.f32 %v915, %v916
        %v918 = vand.u32 %v917, 4294901760
        %919 = vmatmul.mubr.f32.gmra.mrb[0].mxu0 %v918
        %v920 = vpop.f32.mrb[0].mxu0
        %v921 = vadd.f32 %v616, %v920
        %v922 = vpop.f32.mrb[0].mxu0
        %923 = vmatprep.mubr.f32.mxu0 0.0
        %v924 = vand.u32 %v662, 4294901760
        %v925 = vsub.f32 %v662, %v924
        %v926 = vand.u32 %v925, 4294901760
        %v927 = vsub.f32 %v925, %v926
        %v928 = vand.u32 %v927, 4294901760
        %929 = vmatmul.mubr.f32.gmra.mrb[0].mxu0 %v928
        %v930 = vpop.f32.mrb[0].mxu0
        %v931 = vadd.f32 %v616, %v930
        %v932 = vpop.f32.mrb[0].mxu0
        %933 = vmatprep.mubr.f32.mxu0 0.0
        %v934 = vand.u32 %v665, 4294901760
        %v935 = vsub.f32 %v665, %v934
        %v936 = vand.u32 %v935, 4294901760
        %v937 = vsub.f32 %v935, %v936
        %v938 = vand.u32 %v937, 4294901760
        %939 = vmatmul.mubr.f32.gmra.mrb[0].mxu0 %v938
        %v940 = vpop.f32.mrb[0].mxu0
        %v941 = vadd.f32 %v616, %v940
        %v942 = vpop.f32.mrb[0].mxu0
        %943 = vmatprep.mubr.f32.mxu0 0.0
        %v944 = vand.u32 %v668, 4294901760
        %v945 = vsub.f32 %v668, %v944
        %v946 = vand.u32 %v945, 4294901760
        %v947 = vsub.f32 %v945, %v946
        %v948 = vand.u32 %v947, 4294901760
        %949 = vmatmul.mubr.f32.gmra.mrb[0].mxu0 %v948
        %v950 = vpop.f32.mrb[0].mxu0
        %v951 = vadd.f32 %v616, %v950
        %v952 = vpop.f32.mrb[0].mxu0
        %953 = vmatprep.mubr.f32.mxu0 0.0
        %v954 = vand.u32 %v671, 4294901760
        %v955 = vsub.f32 %v671, %v954
        %v956 = vand.u32 %v955, 4294901760
        %v957 = vsub.f32 %v955, %v956
        %v958 = vand.u32 %v957, 4294901760
        %959 = vmatmul.mubr.f32.gmra.mrb[0].mxu0 %v958
        %v960 = vpop.f32.mrb[0].mxu0
        %v961 = vadd.f32 %v616, %v960
        %v962 = vpop.f32.mrb[0].mxu0
        %963 = vmatprep.mubr.f32.mxu0 0.0
        %v964 = vand.u32 %v674, 4294901760
        %v965 = vsub.f32 %v674, %v964
        %v966 = vand.u32 %v965, 4294901760
        %v967 = vsub.f32 %v965, %v966
        %v968 = vand.u32 %v967, 4294901760
        %969 = vmatmul.mubr.f32.gmra.mrb[0].mxu0 %v968
        %v970 = vpop.f32.mrb[0].mxu0
        %v971 = vadd.f32 %v616, %v970
        %v972 = vpop.f32.mrb[0].mxu0
        %973 = vmatprep.mubr.f32.mxu0 0.0
        %v974 = vand.u32 %v677, 4294901760
        %v975 = vsub.f32 %v677, %v974
        %v976 = vand.u32 %v975, 4294901760
        %v977 = vsub.f32 %v975, %v976
        %v978 = vand.u32 %v977, 4294901760
        %979 = vmatmul.mubr.f32.gmra.mrb[0].mxu0 %v978
        %v980 = vpop.f32.mrb[0].mxu0
        %v981 = vadd.f32 %v616, %v980
        %v982 = vpop.f32.mrb[0].mxu0
        %983 = vmatprep.mubr.f32.mxu0 0.0
        %v984 = vand.u32 %v680, 4294901760
        %v985 = vsub.f32 %v680, %v984
        %v986 = vand.u32 %v985, 4294901760
        %v987 = vsub.f32 %v985, %v986
        %v988 = vand.u32 %v987, 4294901760
        %989 = vmatmul.mubr.f32.gmra.mrb[0].mxu0 %v988
        %v990 = vpop.f32.mrb[0].mxu0
        %v991 = vadd.f32 %v616, %v990
        %v992 = vpop.f32.mrb[0].mxu0
        %993 = vmatprep.mubr.f32.mxu0 0.0
        %v994 = vand.u32 %v683, 4294901760
        %v995 = vsub.f32 %v683, %v994
        %v996 = vand.u32 %v995, 4294901760
        %v997 = vsub.f32 %v995, %v996
        %v998 = vand.u32 %v997, 4294901760
        %999 = vmatmul.mubr.f32.gmra.mrb[0].mxu0 %v998
        %v1000 = vpop.f32.mrb[0].mxu0
        %v1001 = vadd.f32 %v616, %v1000
        %v1002 = vpop.f32.mrb[0].mxu0
        %1003 = vmatprep.mubr.f32.mxu0 0.0
        %v1004 = vand.u32 %v686, 4294901760
        %v1005 = vsub.f32 %v686, %v1004
        %v1006 = vand.u32 %v1005, 4294901760
        %v1007 = vsub.f32 %v1005, %v1006
        %v1008 = vand.u32 %v1007, 4294901760
        %1009 = vmatmul.mubr.f32.gmra.mrb[0].mxu0 %v1008
        %v1010 = vpop.f32.mrb[0].mxu0
        %v1011 = vadd.f32 %v616, %v1010
        %v1012 = vpop.f32.mrb[0].mxu0
        %1013 = vmatprep.mubr.f32.mxu0 0.0
        %v1014 = vand.u32 %v689, 4294901760
        %v1015 = vsub.f32 %v689, %v1014
        %v1016 = vand.u32 %v1015, 4294901760
        %v1017 = vsub.f32 %v1015, %v1016
        %v1018 = vand.u32 %v1017, 4294901760
        %1019 = vmatmul.mubr.f32.gmra.mrb[0].mxu0 %v1018
        %v1020 = vpop.f32.mrb[0].mxu0
        %v1021 = vadd.f32 %v616, %v1020
        %v1022 = vpop.f32.mrb[0].mxu0
        %1023 = vmatprep.mubr.f32.mxu0 0.0
        %v1024 = vand.u32 %v692, 4294901760
        %v1025 = vsub.f32 %v692, %v1024
        %v1026 = vand.u32 %v1025, 4294901760
        %v1027 = vsub.f32 %v1025, %v1026
        %v1028 = vand.u32 %v1027, 4294901760
        %1029 = vmatmul.mubr.f32.gmra.mrb[0].mxu0 %v1028
        %v1030 = vpop.f32.mrb[0].mxu0
        %v1031 = vadd.f32 %v616, %v1030
        %v1032 = vpop.f32.mrb[0].mxu0
        %1033 = vmatprep.mubr.f32.mxu0 0.0
        %v1034 = vand.u32 %v695, 4294901760
        %v1035 = vsub.f32 %v695, %v1034
        %v1036 = vand.u32 %v1035, 4294901760
        %v1037 = vsub.f32 %v1035, %v1036
        %v1038 = vand.u32 %v1037, 4294901760
        %1039 = vmatmul.mubr.f32.gmra.mrb[0].mxu0 %v1038
        %v1040 = vpop.f32.mrb[0].mxu0
        %v1041 = vadd.f32 %v616, %v1040
        %v1042 = vpop.f32.mrb[0].mxu0
        %1043 = vmatprep.mubr.f32.mxu0 0.0
        %v1044 = vand.u32 %v698, 4294901760
        %v1045 = vsub.f32 %v698, %v1044
        %v1046 = vand.u32 %v1045, 4294901760
        %v1047 = vsub.f32 %v1045, %v1046
        %v1048 = vand.u32 %v1047, 4294901760
        %1049 = vmatmul.mubr.f32.gmra.mrb[0].mxu0 %v1048
        %v1050 = vpop.f32.mrb[0].mxu0
        %v1051 = vadd.f32 %v616, %v1050
        %v1052 = vpop.f32.mrb[0].mxu0
        %1053 = vmatprep.mubr.f32.mxu0 0.0
        %v1054 = vand.u32 %v701, 4294901760
        %v1055 = vsub.f32 %v701, %v1054
        %v1056 = vand.u32 %v1055, 4294901760
        %v1057 = vsub.f32 %v1055, %v1056
        %v1058 = vand.u32 %v1057, 4294901760
        %1059 = vmatmul.mubr.f32.gmra.mrb[0].mxu0 %v1058
        %v1060 = vpop.f32.mrb[0].mxu0
        %v1061 = vadd.f32 %v616, %v1060
        %v1062 = vpop.f32.mrb[0].mxu0
        %1063 = vmatprep.mubr.f32.mxu0 0.0
        %v1064 = vand.u32 %v704, 4294901760
        %v1065 = vsub.f32 %v704, %v1064
        %v1066 = vand.u32 %v1065, 4294901760
        %v1067 = vsub.f32 %v1065, %v1066
        %v1068 = vand.u32 %v1067, 4294901760
        %1069 = vmatmul.mubr.f32.gmra.mrb[0].mxu0 %v1068
        %v1070 = vpop.f32.mrb[0].mxu0
        %v1071 = vadd.f32 %v616, %v1070
        %v1072 = vpop.f32.mrb[0].mxu0
        %1073 = vmatprep.mubr.f32.mxu0 0.0
        %v1074 = vand.u32 %v707, 4294901760
        %v1075 = vsub.f32 %v707, %v1074
        %v1076 = vand.u32 %v1075, 4294901760
        %v1077 = vsub.f32 %v1075, %v1076
        %v1078 = vand.u32 %v1077, 4294901760
        %1079 = vmatmul.mubr.f32.gmra.mrb[0].mxu0 %v1078
        %v1080 = vpop.f32.mrb[0].mxu0
        %v1081 = vadd.f32 %v616, %v1080
        %v1082 = vpop.f32.mrb[0].mxu0
        %1083 = vmatprep.mubr.f32.mxu0 0.0
        %v1084 = vand.u32 %v710, 4294901760
        %v1085 = vsub.f32 %v710, %v1084
        %v1086 = vand.u32 %v1085, 4294901760
        %v1087 = vsub.f32 %v1085, %v1086
        %v1088 = vand.u32 %v1087, 4294901760
        %1089 = vmatmul.mubr.f32.gmra.mrb[0].mxu0 %v1088
        %v1090 = vpop.f32.mrb[0].mxu0
        %v1091 = vadd.f32 %v616, %v1090
        %v1092 = vpop.f32.mrb[0].mxu0
        %1093 = vmatprep.mubr.f32.mxu0 0.0
        %v1094 = vand.u32 %v713, 4294901760
        %v1095 = vsub.f32 %v713, %v1094
        %v1096 = vand.u32 %v1095, 4294901760
        %v1097 = vsub.f32 %v1095, %v1096
        %v1098 = vand.u32 %v1097, 4294901760
        %1099 = vmatmul.mubr.f32.gmra.mrb[0].mxu0 %v1098
        %v1100 = vpop.f32.mrb[0].mxu0
        %v1101 = vadd.f32 %v616, %v1100
        %v1102 = vpop.f32.mrb[0].mxu0
        %1103 = vdwg.mxu0
        %1104 = vmatprep.subr.mxu0 0.0
        %v1105 = vand.u32 %v607, 4294901760
        %v1106 = vsub.f32 %v607, %v1105
        %v1107 = vand.u32 %v1106, 4294901760
        %v1108 = vsub.f32 %v1106, %v1107
        %v1109 = vand.u32 %v1108, 4294901760
        %1110 = vmatpush1.msra.mxu0 %v1109
        %1111 = vmatprep.subr.mxu0 0.0
        %v1112 = vand.u32 %v608, 4294901760
        %v1113 = vsub.f32 %v608, %v1112
        %v1114 = vand.u32 %v1113, 4294901760
        %v1115 = vsub.f32 %v1113, %v1114
        %v1116 = vand.u32 %v1115, 4294901760
        %1117 = vmatpush1.msra.mxu0 %v1116
        %1118 = vmatprep.subr.mxu0 0.0
        %v1119 = vand.u32 %v609, 4294901760
        %v1120 = vsub.f32 %v609, %v1119
        %v1121 = vand.u32 %v1120, 4294901760
        %v1122 = vsub.f32 %v1120, %v1121
        %v1123 = vand.u32 %v1122, 4294901760
        %1124 = vmatpush1.msra.mxu0 %v1123
        %1125 = vmatprep.subr.mxu0 0.0
        %v1126 = vand.u32 %v610, 4294901760
        %v1127 = vsub.f32 %v610, %v1126
        %v1128 = vand.u32 %v1127, 4294901760
        %v1129 = vsub.f32 %v1127, %v1128
        %v1130 = vand.u32 %v1129, 4294901760
        %1131 = vmatpush1.msra.mxu0 %v1130
        %1132 = vmatprep.subr.mxu0 0.0
        %1133 = vmatpush1.msra.mxu0 0.0
        %1134 = vmatprep.subr.mxu0 0.0
        %1135 = vmatpush1.msra.mxu0 0.0
        %1136 = vmatprep.subr.mxu0 0.0
        %1137 = vmatpush1.msra.mxu0 0.0
        %1138 = vmatprep.subr.mxu0 0.0
        %1139 = vmatpush1.msra.mxu0 0.0
        %1140 = vmatprep.subr.mxu0 0.0
        %1141 = vmatpush1.msra.mxu0 0.0
        %1142 = vmatprep.subr.mxu0 0.0
        %1143 = vmatpush1.msra.mxu0 0.0
        %1144 = vmatprep.subr.mxu0 0.0
        %1145 = vmatpush1.msra.mxu0 0.0
        %1146 = vmatprep.subr.mxu0 0.0
        %1147 = vmatpush1.msra.mxu0 0.0
        %1148 = vmatprep.subr.mxu0 0.0
        %1149 = vmatpush1.msra.mxu0 0.0
        %1150 = vmatprep.subr.mxu0 0.0
        %1151 = vmatpush1.msra.mxu0 0.0
        %1152 = vmatprep.subr.mxu0 0.0
        %1153 = vmatpush1.msra.mxu0 0.0
        %1154 = vmatprep.subr.mxu0 0.0
        %1155 = vmatpush1.msra.mxu0 0.0
        %1156 = vmatprep.subr.mxu0 0.0
        %1157 = vmatpush1.msra.mxu0 0.0
        %1158 = vmatprep.subr.mxu0 0.0
        %1159 = vmatpush1.msra.mxu0 0.0
        %1160 = vmatprep.subr.mxu0 0.0
        %1161 = vmatpush1.msra.mxu0 0.0
        %1162 = vmatprep.subr.mxu0 0.0
        %1163 = vmatpush1.msra.mxu0 0.0
        %1164 = vmatprep.subr.mxu0 0.0
        %1165 = vmatpush1.msra.mxu0 0.0
        %1166 = vmatprep.subr.mxu0 0.0
        %1167 = vmatpush1.msra.mxu0 0.0
        %1168 = vmatprep.subr.mxu0 0.0
        %1169 = vmatpush1.msra.mxu0 0.0
        %1170 = vmatprep.subr.mxu0 0.0
        %1171 = vmatpush1.msra.mxu0 0.0
        %1172 = vmatprep.subr.mxu0 0.0
        %1173 = vmatpush1.msra.mxu0 0.0
        %1174 = vmatprep.subr.mxu0 0.0
        %1175 = vmatpush1.msra.mxu0 0.0
        %1176 = vmatprep.subr.mxu0 0.0
        %1177 = vmatpush1.msra.mxu0 0.0
        %1178 = vmatprep.subr.mxu0 0.0
        %1179 = vmatpush1.msra.mxu0 0.0
        %1180 = vmatprep.subr.mxu0 0.0
        %1181 = vmatpush1.msra.mxu0 0.0
        %1182 = vmatprep.subr.mxu0 0.0
        %1183 = vmatpush1.msra.mxu0 0.0
        %1184 = vmatprep.subr.mxu0 0.0
        %1185 = vmatpush1.msra.mxu0 0.0
        %1186 = vmatprep.subr.mxu0 0.0
        %1187 = vmatpush1.msra.mxu0 0.0
        %1188 = vmatprep.mubr.f32.mxu0 0.0
        %v1189 = vand.u32 %v620, 4294901760
        %1190 = vmatmul.mubr.f32.gmra.mrb[0].mxu0 %v1189
        %v1191 = vpop.f32.mrb[0].mxu0
        %v1192 = vadd.f32 %v791, %v1191
        %v1193 = vpop.f32.mrb[0].mxu0
        %1194 = vmatprep.mubr.f32.mxu0 0.0
        %v1195 = vand.u32 %v623, 4294901760
        %1196 = vmatmul.mubr.f32.gmra.mrb[0].mxu0 %v1195
        %v1197 = vpop.f32.mrb[0].mxu0
        %v1198 = vadd.f32 %v801, %v1197
        %v1199 = vpop.f32.mrb[0].mxu0
        %1200 = vmatprep.mubr.f32.mxu0 0.0
        %v1201 = vand.u32 %v626, 4294901760
        %1202 = vmatmul.mubr.f32.gmra.mrb[0].mxu0 %v1201
        %v1203 = vpop.f32.mrb[0].mxu0
        %v1204 = vadd.f32 %v811, %v1203
        %v1205 = vpop.f32.mrb[0].mxu0
        %1206 = vmatprep.mubr.f32.mxu0 0.0
        %v1207 = vand.u32 %v629, 4294901760
        %1208 = vmatmul.mubr.f32.gmra.mrb[0].mxu0 %v1207
        %v1209 = vpop.f32.mrb[0].mxu0
        %v1210 = vadd.f32 %v821, %v1209
        %v1211 = vpop.f32.mrb[0].mxu0
        %1212 = vmatprep.mubr.f32.mxu0 0.0
        %v1213 = vand.u32 %v632, 4294901760
        %1214 = vmatmul.mubr.f32.gmra.mrb[0].mxu0 %v1213
        %v1215 = vpop.f32.mrb[0].mxu0
        %v1216 = vadd.f32 %v831, %v1215
        %v1217 = vpop.f32.mrb[0].mxu0
        %1218 = vmatprep.mubr.f32.mxu0 0.0
        %v1219 = vand.u32 %v635, 4294901760
        %1220 = vmatmul.mubr.f32.gmra.mrb[0].mxu0 %v1219
        %v1221 = vpop.f32.mrb[0].mxu0
        %v1222 = vadd.f32 %v841, %v1221
        %v1223 = vpop.f32.mrb[0].mxu0
        %1224 = vmatprep.mubr.f32.mxu0 0.0
        %v1225 = vand.u32 %v638, 4294901760
        %1226 = vmatmul.mubr.f32.gmra.mrb[0].mxu0 %v1225
        %v1227 = vpop.f32.mrb[0].mxu0
        %v1228 = vadd.f32 %v851, %v1227
        %v1229 = vpop.f32.mrb[0].mxu0
        %1230 = vmatprep.mubr.f32.mxu0 0.0
        %v1231 = vand.u32 %v641, 4294901760
        %1232 = vmatmul.mubr.f32.gmra.mrb[0].mxu0 %v1231
        %v1233 = vpop.f32.mrb[0].mxu0
        %v1234 = vadd.f32 %v861, %v1233
        %v1235 = vpop.f32.mrb[0].mxu0
        %1236 = vmatprep.mubr.f32.mxu0 0.0
        %v1237 = vand.u32 %v644, 4294901760
        %1238 = vmatmul.mubr.f32.gmra.mrb[0].mxu0 %v1237
        %v1239 = vpop.f32.mrb[0].mxu0
        %v1240 = vadd.f32 %v871, %v1239
        %v1241 = vpop.f32.mrb[0].mxu0
        %1242 = vmatprep.mubr.f32.mxu0 0.0
        %v1243 = vand.u32 %v647, 4294901760
        %1244 = vmatmul.mubr.f32.gmra.mrb[0].mxu0 %v1243
        %v1245 = vpop.f32.mrb[0].mxu0
        %v1246 = vadd.f32 %v881, %v1245
        %v1247 = vpop.f32.mrb[0].mxu0
        %1248 = vmatprep.mubr.f32.mxu0 0.0
        %v1249 = vand.u32 %v650, 4294901760
        %1250 = vmatmul.mubr.f32.gmra.mrb[0].mxu0 %v1249
        %v1251 = vpop.f32.mrb[0].mxu0
        %v1252 = vadd.f32 %v891, %v1251
        %v1253 = vpop.f32.mrb[0].mxu0
        %1254 = vmatprep.mubr.f32.mxu0 0.0
        %v1255 = vand.u32 %v653, 4294901760
        %1256 = vmatmul.mubr.f32.gmra.mrb[0].mxu0 %v1255
        %v1257 = vpop.f32.mrb[0].mxu0
        %v1258 = vadd.f32 %v901, %v1257
        %v1259 = vpop.f32.mrb[0].mxu0
        %1260 = vmatprep.mubr.f32.mxu0 0.0
        %v1261 = vand.u32 %v656, 4294901760
        %1262 = vmatmul.mubr.f32.gmra.mrb[0].mxu0 %v1261
        %v1263 = vpop.f32.mrb[0].mxu0
        %v1264 = vadd.f32 %v911, %v1263
        %v1265 = vpop.f32.mrb[0].mxu0
        %1266 = vmatprep.mubr.f32.mxu0 0.0
        %v1267 = vand.u32 %v659, 4294901760
        %1268 = vmatmul.mubr.f32.gmra.mrb[0].mxu0 %v1267
        %v1269 = vpop.f32.mrb[0].mxu0
        %v1270 = vadd.f32 %v921, %v1269
        %v1271 = vpop.f32.mrb[0].mxu0
        %1272 = vmatprep.mubr.f32.mxu0 0.0
        %v1273 = vand.u32 %v662, 4294901760
        %1274 = vmatmul.mubr.f32.gmra.mrb[0].mxu0 %v1273
        %v1275 = vpop.f32.mrb[0].mxu0
        %v1276 = vadd.f32 %v931, %v1275
        %v1277 = vpop.f32.mrb[0].mxu0
        %1278 = vmatprep.mubr.f32.mxu0 0.0
        %v1279 = vand.u32 %v665, 4294901760
        %1280 = vmatmul.mubr.f32.gmra.mrb[0].mxu0 %v1279
        %v1281 = vpop.f32.mrb[0].mxu0
        %v1282 = vadd.f32 %v941, %v1281
        %v1283 = vpop.f32.mrb[0].mxu0
        %1284 = vmatprep.mubr.f32.mxu0 0.0
        %v1285 = vand.u32 %v668, 4294901760
        %1286 = vmatmul.mubr.f32.gmra.mrb[0].mxu0 %v1285
        %v1287 = vpop.f32.mrb[0].mxu0
        %v1288 = vadd.f32 %v951, %v1287
        %v1289 = vpop.f32.mrb[0].mxu0
        %1290 = vmatprep.mubr.f32.mxu0 0.0
        %v1291 = vand.u32 %v671, 4294901760
        %1292 = vmatmul.mubr.f32.gmra.mrb[0].mxu0 %v1291
        %v1293 = vpop.f32.mrb[0].mxu0
        %v1294 = vadd.f32 %v961, %v1293
        %v1295 = vpop.f32.mrb[0].mxu0
        %1296 = vmatprep.mubr.f32.mxu0 0.0
        %v1297 = vand.u32 %v674, 4294901760
        %1298 = vmatmul.mubr.f32.gmra.mrb[0].mxu0 %v1297
        %v1299 = vpop.f32.mrb[0].mxu0
        %v1300 = vadd.f32 %v971, %v1299
        %v1301 = vpop.f32.mrb[0].mxu0
        %1302 = vmatprep.mubr.f32.mxu0 0.0
        %v1303 = vand.u32 %v677, 4294901760
        %1304 = vmatmul.mubr.f32.gmra.mrb[0].mxu0 %v1303
        %v1305 = vpop.f32.mrb[0].mxu0
        %v1306 = vadd.f32 %v981, %v1305
        %v1307 = vpop.f32.mrb[0].mxu0
        %1308 = vmatprep.mubr.f32.mxu0 0.0
        %v1309 = vand.u32 %v680, 4294901760
        %1310 = vmatmul.mubr.f32.gmra.mrb[0].mxu0 %v1309
        %v1311 = vpop.f32.mrb[0].mxu0
        %v1312 = vadd.f32 %v991, %v1311
        %v1313 = vpop.f32.mrb[0].mxu0
        %1314 = vmatprep.mubr.f32.mxu0 0.0
        %v1315 = vand.u32 %v683, 4294901760
        %1316 = vmatmul.mubr.f32.gmra.mrb[0].mxu0 %v1315
        %v1317 = vpop.f32.mrb[0].mxu0
        %v1318 = vadd.f32 %v1001, %v1317
        %v1319 = vpop.f32.mrb[0].mxu0
        %1320 = vmatprep.mubr.f32.mxu0 0.0
        %v1321 = vand.u32 %v686, 4294901760
        %1322 = vmatmul.mubr.f32.gmra.mrb[0].mxu0 %v1321
        %v1323 = vpop.f32.mrb[0].mxu0
        %v1324 = vadd.f32 %v1011, %v1323
        %v1325 = vpop.f32.mrb[0].mxu0
        %1326 = vmatprep.mubr.f32.mxu0 0.0
        %v1327 = vand.u32 %v689, 4294901760
        %1328 = vmatmul.mubr.f32.gmra.mrb[0].mxu0 %v1327
        %v1329 = vpop.f32.mrb[0].mxu0
        %v1330 = vadd.f32 %v1021, %v1329
        %v1331 = vpop.f32.mrb[0].mxu0
        %1332 = vmatprep.mubr.f32.mxu0 0.0
        %v1333 = vand.u32 %v692, 4294901760
        %1334 = vmatmul.mubr.f32.gmra.mrb[0].mxu0 %v1333
        %v1335 = vpop.f32.mrb[0].mxu0
        %v1336 = vadd.f32 %v1031, %v1335
        %v1337 = vpop.f32.mrb[0].mxu0
        %1338 = vmatprep.mubr.f32.mxu0 0.0
        %v1339 = vand.u32 %v695, 4294901760
        %1340 = vmatmul.mubr.f32.gmra.mrb[0].mxu0 %v1339
        %v1341 = vpop.f32.mrb[0].mxu0
        %v1342 = vadd.f32 %v1041, %v1341
        %v1343 = vpop.f32.mrb[0].mxu0
        %1344 = vmatprep.mubr.f32.mxu0 0.0
        %v1345 = vand.u32 %v698, 4294901760
        %1346 = vmatmul.mubr.f32.gmra.mrb[0].mxu0 %v1345
        %v1347 = vpop.f32.mrb[0].mxu0
        %v1348 = vadd.f32 %v1051, %v1347
        %v1349 = vpop.f32.mrb[0].mxu0
        %1350 = vmatprep.mubr.f32.mxu0 0.0
        %v1351 = vand.u32 %v701, 4294901760
        %1352 = vmatmul.mubr.f32.gmra.mrb[0].mxu0 %v1351
        %v1353 = vpop.f32.mrb[0].mxu0
        %v1354 = vadd.f32 %v1061, %v1353
        %v1355 = vpop.f32.mrb[0].mxu0
        %1356 = vmatprep.mubr.f32.mxu0 0.0
        %v1357 = vand.u32 %v704, 4294901760
        %1358 = vmatmul.mubr.f32.gmra.mrb[0].mxu0 %v1357
        %v1359 = vpop.f32.mrb[0].mxu0
        %v1360 = vadd.f32 %v1071, %v1359
        %v1361 = vpop.f32.mrb[0].mxu0
        %1362 = vmatprep.mubr.f32.mxu0 0.0
        %v1363 = vand.u32 %v707, 4294901760
        %1364 = vmatmul.mubr.f32.gmra.mrb[0].mxu0 %v1363
        %v1365 = vpop.f32.mrb[0].mxu0
        %v1366 = vadd.f32 %v1081, %v1365
        %v1367 = vpop.f32.mrb[0].mxu0
        %1368 = vmatprep.mubr.f32.mxu0 0.0
        %v1369 = vand.u32 %v710, 4294901760
        %1370 = vmatmul.mubr.f32.gmra.mrb[0].mxu0 %v1369
        %v1371 = vpop.f32.mrb[0].mxu0
        %v1372 = vadd.f32 %v1091, %v1371
        %v1373 = vpop.f32.mrb[0].mxu0
        %1374 = vmatprep.mubr.f32.mxu0 0.0
        %v1375 = vand.u32 %v713, 4294901760
        %1376 = vmatmul.mubr.f32.gmra.mrb[0].mxu0 %v1375
        %v1377 = vpop.f32.mrb[0].mxu0
        %v1378 = vadd.f32 %v1101, %v1377
        %v1379 = vpop.f32.mrb[0].mxu0
        %1380 = vdwg.mxu0
        %1381 = vmatprep.subr.mxu0 0.0
        %v1382 = vand.u32 %v607, 4294901760
        %v1383 = vsub.f32 %v607, %v1382
        %1384 = vmatpush1.msra.mxu0 %v1383
        %1385 = vmatprep.subr.mxu0 0.0
        %v1386 = vand.u32 %v608, 4294901760
        %v1387 = vsub.f32 %v608, %v1386
        %1388 = vmatpush1.msra.mxu0 %v1387
        %1389 = vmatprep.subr.mxu0 0.0
        %v1390 = vand.u32 %v609, 4294901760
        %v1391 = vsub.f32 %v609, %v1390
        %1392 = vmatpush1.msra.mxu0 %v1391
        %1393 = vmatprep.subr.mxu0 0.0
        %v1394 = vand.u32 %v610, 4294901760
        %v1395 = vsub.f32 %v610, %v1394
        %1396 = vmatpush1.msra.mxu0 %v1395
        %1397 = vmatprep.subr.mxu0 0.0
        %1398 = vmatpush1.msra.mxu0 0.0
        %1399 = vmatprep.subr.mxu0 0.0
        %1400 = vmatpush1.msra.mxu0 0.0
        %1401 = vmatprep.subr.mxu0 0.0
        %1402 = vmatpush1.msra.mxu0 0.0
        %1403 = vmatprep.subr.mxu0 0.0
        %1404 = vmatpush1.msra.mxu0 0.0
        %1405 = vmatprep.subr.mxu0 0.0
        %1406 = vmatpush1.msra.mxu0 0.0
        %1407 = vmatprep.subr.mxu0 0.0
        %1408 = vmatpush1.msra.mxu0 0.0
        %1409 = vmatprep.subr.mxu0 0.0
        %1410 = vmatpush1.msra.mxu0 0.0
        %1411 = vmatprep.subr.mxu0 0.0
        %1412 = vmatpush1.msra.mxu0 0.0
        %1413 = vmatprep.subr.mxu0 0.0
        %1414 = vmatpush1.msra.mxu0 0.0
        %1415 = vmatprep.subr.mxu0 0.0
        %1416 = vmatpush1.msra.mxu0 0.0
        %1417 = vmatprep.subr.mxu0 0.0
        %1418 = vmatpush1.msra.mxu0 0.0
        %1419 = vmatprep.subr.mxu0 0.0
        %1420 = vmatpush1.msra.mxu0 0.0
        %1421 = vmatprep.subr.mxu0 0.0
        %1422 = vmatpush1.msra.mxu0 0.0
        %1423 = vmatprep.subr.mxu0 0.0
        %1424 = vmatpush1.msra.mxu0 0.0
        %1425 = vmatprep.subr.mxu0 0.0
        %1426 = vmatpush1.msra.mxu0 0.0
        %1427 = vmatprep.subr.mxu0 0.0
        %1428 = vmatpush1.msra.mxu0 0.0
        %1429 = vmatprep.subr.mxu0 0.0
        %1430 = vmatpush1.msra.mxu0 0.0
        %1431 = vmatprep.subr.mxu0 0.0
        %1432 = vmatpush1.msra.mxu0 0.0
        %1433 = vmatprep.subr.mxu0 0.0
        %1434 = vmatpush1.msra.mxu0 0.0
        %1435 = vmatprep.subr.mxu0 0.0
        %1436 = vmatpush1.msra.mxu0 0.0
        %1437 = vmatprep.subr.mxu0 0.0
        %1438 = vmatpush1.msra.mxu0 0.0
        %1439 = vmatprep.subr.mxu0 0.0
        %1440 = vmatpush1.msra.mxu0 0.0
        %1441 = vmatprep.subr.mxu0 0.0
        %1442 = vmatpush1.msra.mxu0 0.0
        %1443 = vmatprep.subr.mxu0 0.0
        %1444 = vmatpush1.msra.mxu0 0.0
        %1445 = vmatprep.subr.mxu0 0.0
        %1446 = vmatpush1.msra.mxu0 0.0
        %1447 = vmatprep.subr.mxu0 0.0
        %1448 = vmatpush1.msra.mxu0 0.0
        %1449 = vmatprep.subr.mxu0 0.0
        %1450 = vmatpush1.msra.mxu0 0.0
        %1451 = vmatprep.subr.mxu0 0.0
        %1452 = vmatpush1.msra.mxu0 0.0
        %1453 = vmatprep.mubr.f32.mxu0 0.0
        %v1454 = vand.u32 %v620, 4294901760
        %v1455 = vsub.f32 %v620, %v1454
        %1456 = vmatmul.mubr.f32.gmra.mrb[0].mxu0 %v1455
        %v1457 = vpop.f32.mrb[0].mxu0
        %v1458 = vadd.f32 %v1192, %v1457
        %v1459 = vpop.f32.mrb[0].mxu0
        %1460 = vmatprep.mubr.f32.mxu0 0.0
        %v1461 = vand.u32 %v623, 4294901760
        %v1462 = vsub.f32 %v623, %v1461
        %1463 = vmatmul.mubr.f32.gmra.mrb[0].mxu0 %v1462
        %v1464 = vpop.f32.mrb[0].mxu0
        %v1465 = vadd.f32 %v1198, %v1464
        %v1466 = vpop.f32.mrb[0].mxu0
        %1467 = vmatprep.mubr.f32.mxu0 0.0
        %v1468 = vand.u32 %v626, 4294901760
        %v1469 = vsub.f32 %v626, %v1468
        %1470 = vmatmul.mubr.f32.gmra.mrb[0].mxu0 %v1469
        %v1471 = vpop.f32.mrb[0].mxu0
        %v1472 = vadd.f32 %v1204, %v1471
        %v1473 = vpop.f32.mrb[0].mxu0
        %1474 = vmatprep.mubr.f32.mxu0 0.0
        %v1475 = vand.u32 %v629, 4294901760
        %v1476 = vsub.f32 %v629, %v1475
        %1477 = vmatmul.mubr.f32.gmra.mrb[0].mxu0 %v1476
        %v1478 = vpop.f32.mrb[0].mxu0
        %v1479 = vadd.f32 %v1210, %v1478
        %v1480 = vpop.f32.mrb[0].mxu0
        %1481 = vmatprep.mubr.f32.mxu0 0.0
        %v1482 = vand.u32 %v632, 4294901760
        %v1483 = vsub.f32 %v632, %v1482
        %1484 = vmatmul.mubr.f32.gmra.mrb[0].mxu0 %v1483
        %v1485 = vpop.f32.mrb[0].mxu0
        %v1486 = vadd.f32 %v1216, %v1485
        %v1487 = vpop.f32.mrb[0].mxu0
        %1488 = vmatprep.mubr.f32.mxu0 0.0
        %v1489 = vand.u32 %v635, 4294901760
        %v1490 = vsub.f32 %v635, %v1489
        %1491 = vmatmul.mubr.f32.gmra.mrb[0].mxu0 %v1490
        %v1492 = vpop.f32.mrb[0].mxu0
        %v1493 = vadd.f32 %v1222, %v1492
        %v1494 = vpop.f32.mrb[0].mxu0
        %1495 = vmatprep.mubr.f32.mxu0 0.0
        %v1496 = vand.u32 %v638, 4294901760
        %v1497 = vsub.f32 %v638, %v1496
        %1498 = vmatmul.mubr.f32.gmra.mrb[0].mxu0 %v1497
        %v1499 = vpop.f32.mrb[0].mxu0
        %v1500 = vadd.f32 %v1228, %v1499
        %v1501 = vpop.f32.mrb[0].mxu0
        %1502 = vmatprep.mubr.f32.mxu0 0.0
        %v1503 = vand.u32 %v641, 4294901760
        %v1504 = vsub.f32 %v641, %v1503
        %1505 = vmatmul.mubr.f32.gmra.mrb[0].mxu0 %v1504
        %v1506 = vpop.f32.mrb[0].mxu0
        %v1507 = vadd.f32 %v1234, %v1506
        %v1508 = vpop.f32.mrb[0].mxu0
        %1509 = vmatprep.mubr.f32.mxu0 0.0
        %v1510 = vand.u32 %v644, 4294901760
        %v1511 = vsub.f32 %v644, %v1510
        %1512 = vmatmul.mubr.f32.gmra.mrb[0].mxu0 %v1511
        %v1513 = vpop.f32.mrb[0].mxu0
        %v1514 = vadd.f32 %v1240, %v1513
        %v1515 = vpop.f32.mrb[0].mxu0
        %1516 = vmatprep.mubr.f32.mxu0 0.0
        %v1517 = vand.u32 %v647, 4294901760
        %v1518 = vsub.f32 %v647, %v1517
        %1519 = vmatmul.mubr.f32.gmra.mrb[0].mxu0 %v1518
        %v1520 = vpop.f32.mrb[0].mxu0
        %v1521 = vadd.f32 %v1246, %v1520
        %v1522 = vpop.f32.mrb[0].mxu0
        %1523 = vmatprep.mubr.f32.mxu0 0.0
        %v1524 = vand.u32 %v650, 4294901760
        %v1525 = vsub.f32 %v650, %v1524
        %1526 = vmatmul.mubr.f32.gmra.mrb[0].mxu0 %v1525
        %v1527 = vpop.f32.mrb[0].mxu0
        %v1528 = vadd.f32 %v1252, %v1527
        %v1529 = vpop.f32.mrb[0].mxu0
        %1530 = vmatprep.mubr.f32.mxu0 0.0
        %v1531 = vand.u32 %v653, 4294901760
        %v1532 = vsub.f32 %v653, %v1531
        %1533 = vmatmul.mubr.f32.gmra.mrb[0].mxu0 %v1532
        %v1534 = vpop.f32.mrb[0].mxu0
        %v1535 = vadd.f32 %v1258, %v1534
        %v1536 = vpop.f32.mrb[0].mxu0
        %1537 = vmatprep.mubr.f32.mxu0 0.0
        %v1538 = vand.u32 %v656, 4294901760
        %v1539 = vsub.f32 %v656, %v1538
        %1540 = vmatmul.mubr.f32.gmra.mrb[0].mxu0 %v1539
        %v1541 = vpop.f32.mrb[0].mxu0
        %v1542 = vadd.f32 %v1264, %v1541
        %v1543 = vpop.f32.mrb[0].mxu0
        %1544 = vmatprep.mubr.f32.mxu0 0.0
        %v1545 = vand.u32 %v659, 4294901760
        %v1546 = vsub.f32 %v659, %v1545
        %1547 = vmatmul.mubr.f32.gmra.mrb[0].mxu0 %v1546
        %v1548 = vpop.f32.mrb[0].mxu0
        %v1549 = vadd.f32 %v1270, %v1548
        %v1550 = vpop.f32.mrb[0].mxu0
        %1551 = vmatprep.mubr.f32.mxu0 0.0
        %v1552 = vand.u32 %v662, 4294901760
        %v1553 = vsub.f32 %v662, %v1552
        %1554 = vmatmul.mubr.f32.gmra.mrb[0].mxu0 %v1553
        %v1555 = vpop.f32.mrb[0].mxu0
        %v1556 = vadd.f32 %v1276, %v1555
        %v1557 = vpop.f32.mrb[0].mxu0
        %1558 = vmatprep.mubr.f32.mxu0 0.0
        %v1559 = vand.u32 %v665, 4294901760
        %v1560 = vsub.f32 %v665, %v1559
        %1561 = vmatmul.mubr.f32.gmra.mrb[0].mxu0 %v1560
        %v1562 = vpop.f32.mrb[0].mxu0
        %v1563 = vadd.f32 %v1282, %v1562
        %v1564 = vpop.f32.mrb[0].mxu0
        %1565 = vmatprep.mubr.f32.mxu0 0.0
        %v1566 = vand.u32 %v668, 4294901760
        %v1567 = vsub.f32 %v668, %v1566
        %1568 = vmatmul.mubr.f32.gmra.mrb[0].mxu0 %v1567
        %v1569 = vpop.f32.mrb[0].mxu0
        %v1570 = vadd.f32 %v1288, %v1569
        %v1571 = vpop.f32.mrb[0].mxu0
        %1572 = vmatprep.mubr.f32.mxu0 0.0
        %v1573 = vand.u32 %v671, 4294901760
        %v1574 = vsub.f32 %v671, %v1573
        %1575 = vmatmul.mubr.f32.gmra.mrb[0].mxu0 %v1574
        %v1576 = vpop.f32.mrb[0].mxu0
        %v1577 = vadd.f32 %v1294, %v1576
        %v1578 = vpop.f32.mrb[0].mxu0
        %1579 = vmatprep.mubr.f32.mxu0 0.0
        %v1580 = vand.u32 %v674, 4294901760
        %v1581 = vsub.f32 %v674, %v1580
        %1582 = vmatmul.mubr.f32.gmra.mrb[0].mxu0 %v1581
        %v1583 = vpop.f32.mrb[0].mxu0
        %v1584 = vadd.f32 %v1300, %v1583
        %v1585 = vpop.f32.mrb[0].mxu0
        %1586 = vmatprep.mubr.f32.mxu0 0.0
        %v1587 = vand.u32 %v677, 4294901760
        %v1588 = vsub.f32 %v677, %v1587
        %1589 = vmatmul.mubr.f32.gmra.mrb[0].mxu0 %v1588
        %v1590 = vpop.f32.mrb[0].mxu0
        %v1591 = vadd.f32 %v1306, %v1590
        %v1592 = vpop.f32.mrb[0].mxu0
        %1593 = vmatprep.mubr.f32.mxu0 0.0
        %v1594 = vand.u32 %v680, 4294901760
        %v1595 = vsub.f32 %v680, %v1594
        %1596 = vmatmul.mubr.f32.gmra.mrb[0].mxu0 %v1595
        %v1597 = vpop.f32.mrb[0].mxu0
        %v1598 = vadd.f32 %v1312, %v1597
        %v1599 = vpop.f32.mrb[0].mxu0
        %1600 = vmatprep.mubr.f32.mxu0 0.0
        %v1601 = vand.u32 %v683, 4294901760
        %v1602 = vsub.f32 %v683, %v1601
        %1603 = vmatmul.mubr.f32.gmra.mrb[0].mxu0 %v1602
        %v1604 = vpop.f32.mrb[0].mxu0
        %v1605 = vadd.f32 %v1318, %v1604
        %v1606 = vpop.f32.mrb[0].mxu0
        %1607 = vmatprep.mubr.f32.mxu0 0.0
        %v1608 = vand.u32 %v686, 4294901760
        %v1609 = vsub.f32 %v686, %v1608
        %1610 = vmatmul.mubr.f32.gmra.mrb[0].mxu0 %v1609
        %v1611 = vpop.f32.mrb[0].mxu0
        %v1612 = vadd.f32 %v1324, %v1611
        %v1613 = vpop.f32.mrb[0].mxu0
        %1614 = vmatprep.mubr.f32.mxu0 0.0
        %v1615 = vand.u32 %v689, 4294901760
        %v1616 = vsub.f32 %v689, %v1615
        %1617 = vmatmul.mubr.f32.gmra.mrb[0].mxu0 %v1616
        %v1618 = vpop.f32.mrb[0].mxu0
        %v1619 = vadd.f32 %v1330, %v1618
        %v1620 = vpop.f32.mrb[0].mxu0
        %1621 = vmatprep.mubr.f32.mxu0 0.0
        %v1622 = vand.u32 %v692, 4294901760
        %v1623 = vsub.f32 %v692, %v1622
        %1624 = vmatmul.mubr.f32.gmra.mrb[0].mxu0 %v1623
        %v1625 = vpop.f32.mrb[0].mxu0
        %v1626 = vadd.f32 %v1336, %v1625
        %v1627 = vpop.f32.mrb[0].mxu0
        %1628 = vmatprep.mubr.f32.mxu0 0.0
        %v1629 = vand.u32 %v695, 4294901760
        %v1630 = vsub.f32 %v695, %v1629
        %1631 = vmatmul.mubr.f32.gmra.mrb[0].mxu0 %v1630
        %v1632 = vpop.f32.mrb[0].mxu0
        %v1633 = vadd.f32 %v1342, %v1632
        %v1634 = vpop.f32.mrb[0].mxu0
        %1635 = vmatprep.mubr.f32.mxu0 0.0
        %v1636 = vand.u32 %v698, 4294901760
        %v1637 = vsub.f32 %v698, %v1636
        %1638 = vmatmul.mubr.f32.gmra.mrb[0].mxu0 %v1637
        %v1639 = vpop.f32.mrb[0].mxu0
        %v1640 = vadd.f32 %v1348, %v1639
        %v1641 = vpop.f32.mrb[0].mxu0
        %1642 = vmatprep.mubr.f32.mxu0 0.0
        %v1643 = vand.u32 %v701, 4294901760
        %v1644 = vsub.f32 %v701, %v1643
        %1645 = vmatmul.mubr.f32.gmra.mrb[0].mxu0 %v1644
        %v1646 = vpop.f32.mrb[0].mxu0
        %v1647 = vadd.f32 %v1354, %v1646
        %v1648 = vpop.f32.mrb[0].mxu0
        %1649 = vmatprep.mubr.f32.mxu0 0.0
        %v1650 = vand.u32 %v704, 4294901760
        %v1651 = vsub.f32 %v704, %v1650
        %1652 = vmatmul.mubr.f32.gmra.mrb[0].mxu0 %v1651
        %v1653 = vpop.f32.mrb[0].mxu0
        %v1654 = vadd.f32 %v1360, %v1653
        %v1655 = vpop.f32.mrb[0].mxu0
        %1656 = vmatprep.mubr.f32.mxu0 0.0
        %v1657 = vand.u32 %v707, 4294901760
        %v1658 = vsub.f32 %v707, %v1657
        %1659 = vmatmul.mubr.f32.gmra.mrb[0].mxu0 %v1658
        %v1660 = vpop.f32.mrb[0].mxu0
        %v1661 = vadd.f32 %v1366, %v1660
        %v1662 = vpop.f32.mrb[0].mxu0
        %1663 = vmatprep.mubr.f32.mxu0 0.0
        %v1664 = vand.u32 %v710, 4294901760
        %v1665 = vsub.f32 %v710, %v1664
        %1666 = vmatmul.mubr.f32.gmra.mrb[0].mxu0 %v1665
        %v1667 = vpop.f32.mrb[0].mxu0
        %v1668 = vadd.f32 %v1372, %v1667
        %v1669 = vpop.f32.mrb[0].mxu0
        %1670 = vmatprep.mubr.f32.mxu0 0.0
        %v1671 = vand.u32 %v713, 4294901760
        %v1672 = vsub.f32 %v713, %v1671
        %1673 = vmatmul.mubr.f32.gmra.mrb[0].mxu0 %v1672
        %v1674 = vpop.f32.mrb[0].mxu0
        %v1675 = vadd.f32 %v1378, %v1674
        %v1676 = vpop.f32.mrb[0].mxu0
        %1677 = vdwg.mxu0
        %1678 = vmatprep.subr.mxu0 0.0
        %v1679 = vand.u32 %v607, 4294901760
        %1680 = vmatpush1.msra.mxu0 %v1679
        %1681 = vmatprep.subr.mxu0 0.0
        %v1682 = vand.u32 %v608, 4294901760
        %1683 = vmatpush1.msra.mxu0 %v1682
        %1684 = vmatprep.subr.mxu0 0.0
        %v1685 = vand.u32 %v609, 4294901760
        %1686 = vmatpush1.msra.mxu0 %v1685
        %1687 = vmatprep.subr.mxu0 0.0
        %v1688 = vand.u32 %v610, 4294901760
        %1689 = vmatpush1.msra.mxu0 %v1688
        %1690 = vmatprep.subr.mxu0 0.0
        %1691 = vmatpush1.msra.mxu0 0.0
        %1692 = vmatprep.subr.mxu0 0.0
        %1693 = vmatpush1.msra.mxu0 0.0
        %1694 = vmatprep.subr.mxu0 0.0
        %1695 = vmatpush1.msra.mxu0 0.0
        %1696 = vmatprep.subr.mxu0 0.0
        %1697 = vmatpush1.msra.mxu0 0.0
        %1698 = vmatprep.subr.mxu0 0.0
        %1699 = vmatpush1.msra.mxu0 0.0
        %1700 = vmatprep.subr.mxu0 0.0
        %1701 = vmatpush1.msra.mxu0 0.0
        %1702 = vmatprep.subr.mxu0 0.0
        %1703 = vmatpush1.msra.mxu0 0.0
        %1704 = vmatprep.subr.mxu0 0.0
        %1705 = vmatpush1.msra.mxu0 0.0
        %1706 = vmatprep.subr.mxu0 0.0
        %1707 = vmatpush1.msra.mxu0 0.0
        %1708 = vmatprep.subr.mxu0 0.0
        %1709 = vmatpush1.msra.mxu0 0.0
        %1710 = vmatprep.subr.mxu0 0.0
        %1711 = vmatpush1.msra.mxu0 0.0
        %1712 = vmatprep.subr.mxu0 0.0
        %1713 = vmatpush1.msra.mxu0 0.0
        %1714 = vmatprep.subr.mxu0 0.0
        %1715 = vmatpush1.msra.mxu0 0.0
        %1716 = vmatprep.subr.mxu0 0.0
        %1717 = vmatpush1.msra.mxu0 0.0
        %1718 = vmatprep.subr.mxu0 0.0
        %1719 = vmatpush1.msra.mxu0 0.0
        %1720 = vmatprep.subr.mxu0 0.0
        %1721 = vmatpush1.msra.mxu0 0.0
        %1722 = vmatprep.subr.mxu0 0.0
        %1723 = vmatpush1.msra.mxu0 0.0
        %1724 = vmatprep.subr.mxu0 0.0
        %1725 = vmatpush1.msra.mxu0 0.0
        %1726 = vmatprep.subr.mxu0 0.0
        %1727 = vmatpush1.msra.mxu0 0.0
        %1728 = vmatprep.subr.mxu0 0.0
        %1729 = vmatpush1.msra.mxu0 0.0
        %1730 = vmatprep.subr.mxu0 0.0
        %1731 = vmatpush1.msra.mxu0 0.0
        %1732 = vmatprep.subr.mxu0 0.0
        %1733 = vmatpush1.msra.mxu0 0.0
        %1734 = vmatprep.subr.mxu0 0.0
        %1735 = vmatpush1.msra.mxu0 0.0
        %1736 = vmatprep.subr.mxu0 0.0
        %1737 = vmatpush1.msra.mxu0 0.0
        %1738 = vmatprep.subr.mxu0 0.0
        %1739 = vmatpush1.msra.mxu0 0.0
        %1740 = vmatprep.subr.mxu0 0.0
        %1741 = vmatpush1.msra.mxu0 0.0
        %1742 = vmatprep.subr.mxu0 0.0
        %1743 = vmatpush1.msra.mxu0 0.0
        %1744 = vmatprep.subr.mxu0 0.0
        %1745 = vmatpush1.msra.mxu0 0.0
        %1746 = vmatprep.mubr.f32.mxu0 0.0
        %v1747 = vand.u32 %v620, 4294901760
        %v1748 = vsub.f32 %v620, %v1747
        %v1749 = vand.u32 %v1748, 4294901760
        %1750 = vmatmul.mubr.f32.gmra.mrb[0].mxu0 %v1749
        %v1751 = vpop.f32.mrb[0].mxu0
        %v1752 = vadd.f32 %v1458, %v1751
        %v1753 = vpop.f32.mrb[0].mxu0
        %1754 = vmatprep.mubr.f32.mxu0 0.0
        %v1755 = vand.u32 %v623, 4294901760
        %v1756 = vsub.f32 %v623, %v1755
        %v1757 = vand.u32 %v1756, 4294901760
        %1758 = vmatmul.mubr.f32.gmra.mrb[0].mxu0 %v1757
        %v1759 = vpop.f32.mrb[0].mxu0
        %v1760 = vadd.f32 %v1465, %v1759
        %v1761 = vpop.f32.mrb[0].mxu0
        %1762 = vmatprep.mubr.f32.mxu0 0.0
        %v1763 = vand.u32 %v626, 4294901760
        %v1764 = vsub.f32 %v626, %v1763
        %v1765 = vand.u32 %v1764, 4294901760
        %1766 = vmatmul.mubr.f32.gmra.mrb[0].mxu0 %v1765
        %v1767 = vpop.f32.mrb[0].mxu0
        %v1768 = vadd.f32 %v1472, %v1767
        %v1769 = vpop.f32.mrb[0].mxu0
        %1770 = vmatprep.mubr.f32.mxu0 0.0
        %v1771 = vand.u32 %v629, 4294901760
        %v1772 = vsub.f32 %v629, %v1771
        %v1773 = vand.u32 %v1772, 4294901760
        %1774 = vmatmul.mubr.f32.gmra.mrb[0].mxu0 %v1773
        %v1775 = vpop.f32.mrb[0].mxu0
        %v1776 = vadd.f32 %v1479, %v1775
        %v1777 = vpop.f32.mrb[0].mxu0
        %1778 = vmatprep.mubr.f32.mxu0 0.0
        %v1779 = vand.u32 %v632, 4294901760
        %v1780 = vsub.f32 %v632, %v1779
        %v1781 = vand.u32 %v1780, 4294901760
        %1782 = vmatmul.mubr.f32.gmra.mrb[0].mxu0 %v1781
        %v1783 = vpop.f32.mrb[0].mxu0
        %v1784 = vadd.f32 %v1486, %v1783
        %v1785 = vpop.f32.mrb[0].mxu0
        %1786 = vmatprep.mubr.f32.mxu0 0.0
        %v1787 = vand.u32 %v635, 4294901760
        %v1788 = vsub.f32 %v635, %v1787
        %v1789 = vand.u32 %v1788, 4294901760
        %1790 = vmatmul.mubr.f32.gmra.mrb[0].mxu0 %v1789
        %v1791 = vpop.f32.mrb[0].mxu0
        %v1792 = vadd.f32 %v1493, %v1791
        %v1793 = vpop.f32.mrb[0].mxu0
        %1794 = vmatprep.mubr.f32.mxu0 0.0
        %v1795 = vand.u32 %v638, 4294901760
        %v1796 = vsub.f32 %v638, %v1795
        %v1797 = vand.u32 %v1796, 4294901760
        %1798 = vmatmul.mubr.f32.gmra.mrb[0].mxu0 %v1797
        %v1799 = vpop.f32.mrb[0].mxu0
        %v1800 = vadd.f32 %v1500, %v1799
        %v1801 = vpop.f32.mrb[0].mxu0
        %1802 = vmatprep.mubr.f32.mxu0 0.0
        %v1803 = vand.u32 %v641, 4294901760
        %v1804 = vsub.f32 %v641, %v1803
        %v1805 = vand.u32 %v1804, 4294901760
        %1806 = vmatmul.mubr.f32.gmra.mrb[0].mxu0 %v1805
        %v1807 = vpop.f32.mrb[0].mxu0
        %v1808 = vadd.f32 %v1507, %v1807
        %v1809 = vpop.f32.mrb[0].mxu0
        %1810 = vmatprep.mubr.f32.mxu0 0.0
        %v1811 = vand.u32 %v644, 4294901760
        %v1812 = vsub.f32 %v644, %v1811
        %v1813 = vand.u32 %v1812, 4294901760
        %1814 = vmatmul.mubr.f32.gmra.mrb[0].mxu0 %v1813
        %v1815 = vpop.f32.mrb[0].mxu0
        %v1816 = vadd.f32 %v1514, %v1815
        %v1817 = vpop.f32.mrb[0].mxu0
        %1818 = vmatprep.mubr.f32.mxu0 0.0
        %v1819 = vand.u32 %v647, 4294901760
        %v1820 = vsub.f32 %v647, %v1819
        %v1821 = vand.u32 %v1820, 4294901760
        %1822 = vmatmul.mubr.f32.gmra.mrb[0].mxu0 %v1821
        %v1823 = vpop.f32.mrb[0].mxu0
        %v1824 = vadd.f32 %v1521, %v1823
        %v1825 = vpop.f32.mrb[0].mxu0
        %1826 = vmatprep.mubr.f32.mxu0 0.0
        %v1827 = vand.u32 %v650, 4294901760
        %v1828 = vsub.f32 %v650, %v1827
        %v1829 = vand.u32 %v1828, 4294901760
        %1830 = vmatmul.mubr.f32.gmra.mrb[0].mxu0 %v1829
        %v1831 = vpop.f32.mrb[0].mxu0
        %v1832 = vadd.f32 %v1528, %v1831
        %v1833 = vpop.f32.mrb[0].mxu0
        %1834 = vmatprep.mubr.f32.mxu0 0.0
        %v1835 = vand.u32 %v653, 4294901760
        %v1836 = vsub.f32 %v653, %v1835
        %v1837 = vand.u32 %v1836, 4294901760
        %1838 = vmatmul.mubr.f32.gmra.mrb[0].mxu0 %v1837
        %v1839 = vpop.f32.mrb[0].mxu0
        %v1840 = vadd.f32 %v1535, %v1839
        %v1841 = vpop.f32.mrb[0].mxu0
        %1842 = vmatprep.mubr.f32.mxu0 0.0
        %v1843 = vand.u32 %v656, 4294901760
        %v1844 = vsub.f32 %v656, %v1843
        %v1845 = vand.u32 %v1844, 4294901760
        %1846 = vmatmul.mubr.f32.gmra.mrb[0].mxu0 %v1845
        %v1847 = vpop.f32.mrb[0].mxu0
        %v1848 = vadd.f32 %v1542, %v1847
        %v1849 = vpop.f32.mrb[0].mxu0
        %1850 = vmatprep.mubr.f32.mxu0 0.0
        %v1851 = vand.u32 %v659, 4294901760
        %v1852 = vsub.f32 %v659, %v1851
        %v1853 = vand.u32 %v1852, 4294901760
        %1854 = vmatmul.mubr.f32.gmra.mrb[0].mxu0 %v1853
        %v1855 = vpop.f32.mrb[0].mxu0
        %v1856 = vadd.f32 %v1549, %v1855
        %v1857 = vpop.f32.mrb[0].mxu0
        %1858 = vmatprep.mubr.f32.mxu0 0.0
        %v1859 = vand.u32 %v662, 4294901760
        %v1860 = vsub.f32 %v662, %v1859
        %v1861 = vand.u32 %v1860, 4294901760
        %1862 = vmatmul.mubr.f32.gmra.mrb[0].mxu0 %v1861
        %v1863 = vpop.f32.mrb[0].mxu0
        %v1864 = vadd.f32 %v1556, %v1863
        %v1865 = vpop.f32.mrb[0].mxu0
        %1866 = vmatprep.mubr.f32.mxu0 0.0
        %v1867 = vand.u32 %v665, 4294901760
        %v1868 = vsub.f32 %v665, %v1867
        %v1869 = vand.u32 %v1868, 4294901760
        %1870 = vmatmul.mubr.f32.gmra.mrb[0].mxu0 %v1869
        %v1871 = vpop.f32.mrb[0].mxu0
        %v1872 = vadd.f32 %v1563, %v1871
        %v1873 = vpop.f32.mrb[0].mxu0
        %1874 = vmatprep.mubr.f32.mxu0 0.0
        %v1875 = vand.u32 %v668, 4294901760
        %v1876 = vsub.f32 %v668, %v1875
        %v1877 = vand.u32 %v1876, 4294901760
        %1878 = vmatmul.mubr.f32.gmra.mrb[0].mxu0 %v1877
        %v1879 = vpop.f32.mrb[0].mxu0
        %v1880 = vadd.f32 %v1570, %v1879
        %v1881 = vpop.f32.mrb[0].mxu0
        %1882 = vmatprep.mubr.f32.mxu0 0.0
        %v1883 = vand.u32 %v671, 4294901760
        %v1884 = vsub.f32 %v671, %v1883
        %v1885 = vand.u32 %v1884, 4294901760
        %1886 = vmatmul.mubr.f32.gmra.mrb[0].mxu0 %v1885
        %v1887 = vpop.f32.mrb[0].mxu0
        %v1888 = vadd.f32 %v1577, %v1887
        %v1889 = vpop.f32.mrb[0].mxu0
        %1890 = vmatprep.mubr.f32.mxu0 0.0
        %v1891 = vand.u32 %v674, 4294901760
        %v1892 = vsub.f32 %v674, %v1891
        %v1893 = vand.u32 %v1892, 4294901760
        %1894 = vmatmul.mubr.f32.gmra.mrb[0].mxu0 %v1893
        %v1895 = vpop.f32.mrb[0].mxu0
        %v1896 = vadd.f32 %v1584, %v1895
        %v1897 = vpop.f32.mrb[0].mxu0
        %1898 = vmatprep.mubr.f32.mxu0 0.0
        %v1899 = vand.u32 %v677, 4294901760
        %v1900 = vsub.f32 %v677, %v1899
        %v1901 = vand.u32 %v1900, 4294901760
        %1902 = vmatmul.mubr.f32.gmra.mrb[0].mxu0 %v1901
        %v1903 = vpop.f32.mrb[0].mxu0
        %v1904 = vadd.f32 %v1591, %v1903
        %v1905 = vpop.f32.mrb[0].mxu0
        %1906 = vmatprep.mubr.f32.mxu0 0.0
        %v1907 = vand.u32 %v680, 4294901760
        %v1908 = vsub.f32 %v680, %v1907
        %v1909 = vand.u32 %v1908, 4294901760
        %1910 = vmatmul.mubr.f32.gmra.mrb[0].mxu0 %v1909
        %v1911 = vpop.f32.mrb[0].mxu0
        %v1912 = vadd.f32 %v1598, %v1911
        %v1913 = vpop.f32.mrb[0].mxu0
        %1914 = vmatprep.mubr.f32.mxu0 0.0
        %v1915 = vand.u32 %v683, 4294901760
        %v1916 = vsub.f32 %v683, %v1915
        %v1917 = vand.u32 %v1916, 4294901760
        %1918 = vmatmul.mubr.f32.gmra.mrb[0].mxu0 %v1917
        %v1919 = vpop.f32.mrb[0].mxu0
        %v1920 = vadd.f32 %v1605, %v1919
        %v1921 = vpop.f32.mrb[0].mxu0
        %1922 = vmatprep.mubr.f32.mxu0 0.0
        %v1923 = vand.u32 %v686, 4294901760
        %v1924 = vsub.f32 %v686, %v1923
        %v1925 = vand.u32 %v1924, 4294901760
        %1926 = vmatmul.mubr.f32.gmra.mrb[0].mxu0 %v1925
        %v1927 = vpop.f32.mrb[0].mxu0
        %v1928 = vadd.f32 %v1612, %v1927
        %v1929 = vpop.f32.mrb[0].mxu0
        %1930 = vmatprep.mubr.f32.mxu0 0.0
        %v1931 = vand.u32 %v689, 4294901760
        %v1932 = vsub.f32 %v689, %v1931
        %v1933 = vand.u32 %v1932, 4294901760
        %1934 = vmatmul.mubr.f32.gmra.mrb[0].mxu0 %v1933
        %v1935 = vpop.f32.mrb[0].mxu0
        %v1936 = vadd.f32 %v1619, %v1935
        %v1937 = vpop.f32.mrb[0].mxu0
        %1938 = vmatprep.mubr.f32.mxu0 0.0
        %v1939 = vand.u32 %v692, 4294901760
        %v1940 = vsub.f32 %v692, %v1939
        %v1941 = vand.u32 %v1940, 4294901760
        %1942 = vmatmul.mubr.f32.gmra.mrb[0].mxu0 %v1941
        %v1943 = vpop.f32.mrb[0].mxu0
        %v1944 = vadd.f32 %v1626, %v1943
        %v1945 = vpop.f32.mrb[0].mxu0
        %1946 = vmatprep.mubr.f32.mxu0 0.0
        %v1947 = vand.u32 %v695, 4294901760
        %v1948 = vsub.f32 %v695, %v1947
        %v1949 = vand.u32 %v1948, 4294901760
        %1950 = vmatmul.mubr.f32.gmra.mrb[0].mxu0 %v1949
        %v1951 = vpop.f32.mrb[0].mxu0
        %v1952 = vadd.f32 %v1633, %v1951
        %v1953 = vpop.f32.mrb[0].mxu0
        %1954 = vmatprep.mubr.f32.mxu0 0.0
        %v1955 = vand.u32 %v698, 4294901760
        %v1956 = vsub.f32 %v698, %v1955
        %v1957 = vand.u32 %v1956, 4294901760
        %1958 = vmatmul.mubr.f32.gmra.mrb[0].mxu0 %v1957
        %v1959 = vpop.f32.mrb[0].mxu0
        %v1960 = vadd.f32 %v1640, %v1959
        %v1961 = vpop.f32.mrb[0].mxu0
        %1962 = vmatprep.mubr.f32.mxu0 0.0
        %v1963 = vand.u32 %v701, 4294901760
        %v1964 = vsub.f32 %v701, %v1963
        %v1965 = vand.u32 %v1964, 4294901760
        %1966 = vmatmul.mubr.f32.gmra.mrb[0].mxu0 %v1965
        %v1967 = vpop.f32.mrb[0].mxu0
        %v1968 = vadd.f32 %v1647, %v1967
        %v1969 = vpop.f32.mrb[0].mxu0
        %1970 = vmatprep.mubr.f32.mxu0 0.0
        %v1971 = vand.u32 %v704, 4294901760
        %v1972 = vsub.f32 %v704, %v1971
        %v1973 = vand.u32 %v1972, 4294901760
        %1974 = vmatmul.mubr.f32.gmra.mrb[0].mxu0 %v1973
        %v1975 = vpop.f32.mrb[0].mxu0
        %v1976 = vadd.f32 %v1654, %v1975
        %v1977 = vpop.f32.mrb[0].mxu0
        %1978 = vmatprep.mubr.f32.mxu0 0.0
        %v1979 = vand.u32 %v707, 4294901760
        %v1980 = vsub.f32 %v707, %v1979
        %v1981 = vand.u32 %v1980, 4294901760
        %1982 = vmatmul.mubr.f32.gmra.mrb[0].mxu0 %v1981
        %v1983 = vpop.f32.mrb[0].mxu0
        %v1984 = vadd.f32 %v1661, %v1983
        %v1985 = vpop.f32.mrb[0].mxu0
        %1986 = vmatprep.mubr.f32.mxu0 0.0
        %v1987 = vand.u32 %v710, 4294901760
        %v1988 = vsub.f32 %v710, %v1987
        %v1989 = vand.u32 %v1988, 4294901760
        %1990 = vmatmul.mubr.f32.gmra.mrb[0].mxu0 %v1989
        %v1991 = vpop.f32.mrb[0].mxu0
        %v1992 = vadd.f32 %v1668, %v1991
        %v1993 = vpop.f32.mrb[0].mxu0
        %1994 = vmatprep.mubr.f32.mxu0 0.0
        %v1995 = vand.u32 %v713, 4294901760
        %v1996 = vsub.f32 %v713, %v1995
        %v1997 = vand.u32 %v1996, 4294901760
        %1998 = vmatmul.mubr.f32.gmra.mrb[0].mxu0 %v1997
        %v1999 = vpop.f32.mrb[0].mxu0
        %v2000 = vadd.f32 %v1675, %v1999
        %v2001 = vpop.f32.mrb[0].mxu0
        %2002 = vdwg.mxu0
        %2003 = vmatprep.subr.mxu0 0.0
        %v2004 = vand.u32 %v607, 4294901760
        %v2005 = vsub.f32 %v607, %v2004
        %v2006 = vand.u32 %v2005, 4294901760
        %2007 = vmatpush1.msra.mxu0 %v2006
        %2008 = vmatprep.subr.mxu0 0.0
        %v2009 = vand.u32 %v608, 4294901760
        %v2010 = vsub.f32 %v608, %v2009
        %v2011 = vand.u32 %v2010, 4294901760
        %2012 = vmatpush1.msra.mxu0 %v2011
        %2013 = vmatprep.subr.mxu0 0.0
        %v2014 = vand.u32 %v609, 4294901760
        %v2015 = vsub.f32 %v609, %v2014
        %v2016 = vand.u32 %v2015, 4294901760
        %2017 = vmatpush1.msra.mxu0 %v2016
        %2018 = vmatprep.subr.mxu0 0.0
        %v2019 = vand.u32 %v610, 4294901760
        %v2020 = vsub.f32 %v610, %v2019
        %v2021 = vand.u32 %v2020, 4294901760
        %2022 = vmatpush1.msra.mxu0 %v2021
        %2023 = vmatprep.subr.mxu0 0.0
        %2024 = vmatpush1.msra.mxu0 0.0
        %2025 = vmatprep.subr.mxu0 0.0
        %2026 = vmatpush1.msra.mxu0 0.0
        %2027 = vmatprep.subr.mxu0 0.0
        %2028 = vmatpush1.msra.mxu0 0.0
        %2029 = vmatprep.subr.mxu0 0.0
        %2030 = vmatpush1.msra.mxu0 0.0
        %2031 = vmatprep.subr.mxu0 0.0
        %2032 = vmatpush1.msra.mxu0 0.0
        %2033 = vmatprep.subr.mxu0 0.0
        %2034 = vmatpush1.msra.mxu0 0.0
        %2035 = vmatprep.subr.mxu0 0.0
        %2036 = vmatpush1.msra.mxu0 0.0
        %2037 = vmatprep.subr.mxu0 0.0
        %2038 = vmatpush1.msra.mxu0 0.0
        %2039 = vmatprep.subr.mxu0 0.0
        %2040 = vmatpush1.msra.mxu0 0.0
        %2041 = vmatprep.subr.mxu0 0.0
        %2042 = vmatpush1.msra.mxu0 0.0
        %2043 = vmatprep.subr.mxu0 0.0
        %2044 = vmatpush1.msra.mxu0 0.0
        %2045 = vmatprep.subr.mxu0 0.0
        %2046 = vmatpush1.msra.mxu0 0.0
        %2047 = vmatprep.subr.mxu0 0.0
        %2048 = vmatpush1.msra.mxu0 0.0
        %2049 = vmatprep.subr.mxu0 0.0
        %2050 = vmatpush1.msra.mxu0 0.0
        %2051 = vmatprep.subr.mxu0 0.0
        %2052 = vmatpush1.msra.mxu0 0.0
        %2053 = vmatprep.subr.mxu0 0.0
        %2054 = vmatpush1.msra.mxu0 0.0
        %2055 = vmatprep.subr.mxu0 0.0
        %2056 = vmatpush1.msra.mxu0 0.0
        %2057 = vmatprep.subr.mxu0 0.0
        %2058 = vmatpush1.msra.mxu0 0.0
        %2059 = vmatprep.subr.mxu0 0.0
        %2060 = vmatpush1.msra.mxu0 0.0
        %2061 = vmatprep.subr.mxu0 0.0
        %2062 = vmatpush1.msra.mxu0 0.0
        %2063 = vmatprep.subr.mxu0 0.0
        %2064 = vmatpush1.msra.mxu0 0.0
        %2065 = vmatprep.subr.mxu0 0.0
        %2066 = vmatpush1.msra.mxu0 0.0
        %2067 = vmatprep.subr.mxu0 0.0
        %2068 = vmatpush1.msra.mxu0 0.0
        %2069 = vmatprep.subr.mxu0 0.0
        %2070 = vmatpush1.msra.mxu0 0.0
        %2071 = vmatprep.subr.mxu0 0.0
        %2072 = vmatpush1.msra.mxu0 0.0
        %2073 = vmatprep.subr.mxu0 0.0
        %2074 = vmatpush1.msra.mxu0 0.0
        %2075 = vmatprep.subr.mxu0 0.0
        %2076 = vmatpush1.msra.mxu0 0.0
        %2077 = vmatprep.subr.mxu0 0.0
        %2078 = vmatpush1.msra.mxu0 0.0
        %2079 = vmatprep.mubr.f32.mxu0 0.0
        %v2080 = vand.u32 %v620, 4294901760
        %2081 = vmatmul.mubr.f32.gmra.mrb[0].mxu0 %v2080
        %v2082 = vpop.f32.mrb[0].mxu0
        %v2083 = vadd.f32 %v1752, %v2082
        %v2084 = vpop.f32.mrb[0].mxu0
        %2085 = vmatprep.mubr.f32.mxu0 0.0
        %v2086 = vand.u32 %v623, 4294901760
        %2087 = vmatmul.mubr.f32.gmra.mrb[0].mxu0 %v2086
        %v2088 = vpop.f32.mrb[0].mxu0
        %v2089 = vadd.f32 %v1760, %v2088
        %v2090 = vpop.f32.mrb[0].mxu0
        %2091 = vmatprep.mubr.f32.mxu0 0.0
        %v2092 = vand.u32 %v626, 4294901760
        %2093 = vmatmul.mubr.f32.gmra.mrb[0].mxu0 %v2092
        %v2094 = vpop.f32.mrb[0].mxu0
        %v2095 = vadd.f32 %v1768, %v2094
        %v2096 = vpop.f32.mrb[0].mxu0
        %2097 = vmatprep.mubr.f32.mxu0 0.0
        %v2098 = vand.u32 %v629, 4294901760
        %2099 = vmatmul.mubr.f32.gmra.mrb[0].mxu0 %v2098
        %v2100 = vpop.f32.mrb[0].mxu0
        %v2101 = vadd.f32 %v1776, %v2100
        %v2102 = vpop.f32.mrb[0].mxu0
        %2103 = vmatprep.mubr.f32.mxu0 0.0
        %v2104 = vand.u32 %v632, 4294901760
        %2105 = vmatmul.mubr.f32.gmra.mrb[0].mxu0 %v2104
        %v2106 = vpop.f32.mrb[0].mxu0
        %v2107 = vadd.f32 %v1784, %v2106
        %v2108 = vpop.f32.mrb[0].mxu0
        %2109 = vmatprep.mubr.f32.mxu0 0.0
        %v2110 = vand.u32 %v635, 4294901760
        %2111 = vmatmul.mubr.f32.gmra.mrb[0].mxu0 %v2110
        %v2112 = vpop.f32.mrb[0].mxu0
        %v2113 = vadd.f32 %v1792, %v2112
        %v2114 = vpop.f32.mrb[0].mxu0
        %2115 = vmatprep.mubr.f32.mxu0 0.0
        %v2116 = vand.u32 %v638, 4294901760
        %2117 = vmatmul.mubr.f32.gmra.mrb[0].mxu0 %v2116
        %v2118 = vpop.f32.mrb[0].mxu0
        %v2119 = vadd.f32 %v1800, %v2118
        %v2120 = vpop.f32.mrb[0].mxu0
        %2121 = vmatprep.mubr.f32.mxu0 0.0
        %v2122 = vand.u32 %v641, 4294901760
        %2123 = vmatmul.mubr.f32.gmra.mrb[0].mxu0 %v2122
        %v2124 = vpop.f32.mrb[0].mxu0
        %v2125 = vadd.f32 %v1808, %v2124
        %v2126 = vpop.f32.mrb[0].mxu0
        %2127 = vmatprep.mubr.f32.mxu0 0.0
        %v2128 = vand.u32 %v644, 4294901760
        %2129 = vmatmul.mubr.f32.gmra.mrb[0].mxu0 %v2128
        %v2130 = vpop.f32.mrb[0].mxu0
        %v2131 = vadd.f32 %v1816, %v2130
        %v2132 = vpop.f32.mrb[0].mxu0
        %2133 = vmatprep.mubr.f32.mxu0 0.0
        %v2134 = vand.u32 %v647, 4294901760
        %2135 = vmatmul.mubr.f32.gmra.mrb[0].mxu0 %v2134
        %v2136 = vpop.f32.mrb[0].mxu0
        %v2137 = vadd.f32 %v1824, %v2136
        %v2138 = vpop.f32.mrb[0].mxu0
        %2139 = vmatprep.mubr.f32.mxu0 0.0
        %v2140 = vand.u32 %v650, 4294901760
        %2141 = vmatmul.mubr.f32.gmra.mrb[0].mxu0 %v2140
        %v2142 = vpop.f32.mrb[0].mxu0
        %v2143 = vadd.f32 %v1832, %v2142
        %v2144 = vpop.f32.mrb[0].mxu0
        %2145 = vmatprep.mubr.f32.mxu0 0.0
        %v2146 = vand.u32 %v653, 4294901760
        %2147 = vmatmul.mubr.f32.gmra.mrb[0].mxu0 %v2146
        %v2148 = vpop.f32.mrb[0].mxu0
        %v2149 = vadd.f32 %v1840, %v2148
        %v2150 = vpop.f32.mrb[0].mxu0
        %2151 = vmatprep.mubr.f32.mxu0 0.0
        %v2152 = vand.u32 %v656, 4294901760
        %2153 = vmatmul.mubr.f32.gmra.mrb[0].mxu0 %v2152
        %v2154 = vpop.f32.mrb[0].mxu0
        %v2155 = vadd.f32 %v1848, %v2154
        %v2156 = vpop.f32.mrb[0].mxu0
        %2157 = vmatprep.mubr.f32.mxu0 0.0
        %v2158 = vand.u32 %v659, 4294901760
        %2159 = vmatmul.mubr.f32.gmra.mrb[0].mxu0 %v2158
        %v2160 = vpop.f32.mrb[0].mxu0
        %v2161 = vadd.f32 %v1856, %v2160
        %v2162 = vpop.f32.mrb[0].mxu0
        %2163 = vmatprep.mubr.f32.mxu0 0.0
        %v2164 = vand.u32 %v662, 4294901760
        %2165 = vmatmul.mubr.f32.gmra.mrb[0].mxu0 %v2164
        %v2166 = vpop.f32.mrb[0].mxu0
        %v2167 = vadd.f32 %v1864, %v2166
        %v2168 = vpop.f32.mrb[0].mxu0
        %2169 = vmatprep.mubr.f32.mxu0 0.0
        %v2170 = vand.u32 %v665, 4294901760
        %2171 = vmatmul.mubr.f32.gmra.mrb[0].mxu0 %v2170
        %v2172 = vpop.f32.mrb[0].mxu0
        %v2173 = vadd.f32 %v1872, %v2172
        %v2174 = vpop.f32.mrb[0].mxu0
        %2175 = vmatprep.mubr.f32.mxu0 0.0
        %v2176 = vand.u32 %v668, 4294901760
        %2177 = vmatmul.mubr.f32.gmra.mrb[0].mxu0 %v2176
        %v2178 = vpop.f32.mrb[0].mxu0
        %v2179 = vadd.f32 %v1880, %v2178
        %v2180 = vpop.f32.mrb[0].mxu0
        %2181 = vmatprep.mubr.f32.mxu0 0.0
        %v2182 = vand.u32 %v671, 4294901760
        %2183 = vmatmul.mubr.f32.gmra.mrb[0].mxu0 %v2182
        %v2184 = vpop.f32.mrb[0].mxu0
        %v2185 = vadd.f32 %v1888, %v2184
        %v2186 = vpop.f32.mrb[0].mxu0
        %2187 = vmatprep.mubr.f32.mxu0 0.0
        %v2188 = vand.u32 %v674, 4294901760
        %2189 = vmatmul.mubr.f32.gmra.mrb[0].mxu0 %v2188
        %v2190 = vpop.f32.mrb[0].mxu0
        %v2191 = vadd.f32 %v1896, %v2190
        %v2192 = vpop.f32.mrb[0].mxu0
        %2193 = vmatprep.mubr.f32.mxu0 0.0
        %v2194 = vand.u32 %v677, 4294901760
        %2195 = vmatmul.mubr.f32.gmra.mrb[0].mxu0 %v2194
        %v2196 = vpop.f32.mrb[0].mxu0
        %v2197 = vadd.f32 %v1904, %v2196
        %v2198 = vpop.f32.mrb[0].mxu0
        %2199 = vmatprep.mubr.f32.mxu0 0.0
        %v2200 = vand.u32 %v680, 4294901760
        %2201 = vmatmul.mubr.f32.gmra.mrb[0].mxu0 %v2200
        %v2202 = vpop.f32.mrb[0].mxu0
        %v2203 = vadd.f32 %v1912, %v2202
        %v2204 = vpop.f32.mrb[0].mxu0
        %2205 = vmatprep.mubr.f32.mxu0 0.0
        %v2206 = vand.u32 %v683, 4294901760
        %2207 = vmatmul.mubr.f32.gmra.mrb[0].mxu0 %v2206
        %v2208 = vpop.f32.mrb[0].mxu0
        %v2209 = vadd.f32 %v1920, %v2208
        %v2210 = vpop.f32.mrb[0].mxu0
        %2211 = vmatprep.mubr.f32.mxu0 0.0
        %v2212 = vand.u32 %v686, 4294901760
        %2213 = vmatmul.mubr.f32.gmra.mrb[0].mxu0 %v2212
        %v2214 = vpop.f32.mrb[0].mxu0
        %v2215 = vadd.f32 %v1928, %v2214
        %v2216 = vpop.f32.mrb[0].mxu0
        %2217 = vmatprep.mubr.f32.mxu0 0.0
        %v2218 = vand.u32 %v689, 4294901760
        %2219 = vmatmul.mubr.f32.gmra.mrb[0].mxu0 %v2218
        %v2220 = vpop.f32.mrb[0].mxu0
        %v2221 = vadd.f32 %v1936, %v2220
        %v2222 = vpop.f32.mrb[0].mxu0
        %2223 = vmatprep.mubr.f32.mxu0 0.0
        %v2224 = vand.u32 %v692, 4294901760
        %2225 = vmatmul.mubr.f32.gmra.mrb[0].mxu0 %v2224
        %v2226 = vpop.f32.mrb[0].mxu0
        %v2227 = vadd.f32 %v1944, %v2226
        %v2228 = vpop.f32.mrb[0].mxu0
        %2229 = vmatprep.mubr.f32.mxu0 0.0
        %v2230 = vand.u32 %v695, 4294901760
        %2231 = vmatmul.mubr.f32.gmra.mrb[0].mxu0 %v2230
        %v2232 = vpop.f32.mrb[0].mxu0
        %v2233 = vadd.f32 %v1952, %v2232
        %v2234 = vpop.f32.mrb[0].mxu0
        %2235 = vmatprep.mubr.f32.mxu0 0.0
        %v2236 = vand.u32 %v698, 4294901760
        %2237 = vmatmul.mubr.f32.gmra.mrb[0].mxu0 %v2236
        %v2238 = vpop.f32.mrb[0].mxu0
        %v2239 = vadd.f32 %v1960, %v2238
        %v2240 = vpop.f32.mrb[0].mxu0
        %2241 = vmatprep.mubr.f32.mxu0 0.0
        %v2242 = vand.u32 %v701, 4294901760
        %2243 = vmatmul.mubr.f32.gmra.mrb[0].mxu0 %v2242
        %v2244 = vpop.f32.mrb[0].mxu0
        %v2245 = vadd.f32 %v1968, %v2244
        %v2246 = vpop.f32.mrb[0].mxu0
        %2247 = vmatprep.mubr.f32.mxu0 0.0
        %v2248 = vand.u32 %v704, 4294901760
        %2249 = vmatmul.mubr.f32.gmra.mrb[0].mxu0 %v2248
        %v2250 = vpop.f32.mrb[0].mxu0
        %v2251 = vadd.f32 %v1976, %v2250
        %v2252 = vpop.f32.mrb[0].mxu0
        %2253 = vmatprep.mubr.f32.mxu0 0.0
        %v2254 = vand.u32 %v707, 4294901760
        %2255 = vmatmul.mubr.f32.gmra.mrb[0].mxu0 %v2254
        %v2256 = vpop.f32.mrb[0].mxu0
        %v2257 = vadd.f32 %v1984, %v2256
        %v2258 = vpop.f32.mrb[0].mxu0
        %2259 = vmatprep.mubr.f32.mxu0 0.0
        %v2260 = vand.u32 %v710, 4294901760
        %2261 = vmatmul.mubr.f32.gmra.mrb[0].mxu0 %v2260
        %v2262 = vpop.f32.mrb[0].mxu0
        %v2263 = vadd.f32 %v1992, %v2262
        %v2264 = vpop.f32.mrb[0].mxu0
        %2265 = vmatprep.mubr.f32.mxu0 0.0
        %v2266 = vand.u32 %v713, 4294901760
        %2267 = vmatmul.mubr.f32.gmra.mrb[0].mxu0 %v2266
        %v2268 = vpop.f32.mrb[0].mxu0
        %v2269 = vadd.f32 %v2000, %v2268
        %v2270 = vpop.f32.mrb[0].mxu0
        %2271 = vdwg.mxu0
        %2272 = vmatprep.subr.mxu0 0.0
        %v2273 = vand.u32 %v607, 4294901760
        %2274 = vmatpush1.msra.mxu0 %v2273
        %2275 = vmatprep.subr.mxu0 0.0
        %v2276 = vand.u32 %v608, 4294901760
        %2277 = vmatpush1.msra.mxu0 %v2276
        %2278 = vmatprep.subr.mxu0 0.0
        %v2279 = vand.u32 %v609, 4294901760
        %2280 = vmatpush1.msra.mxu0 %v2279
        %2281 = vmatprep.subr.mxu0 0.0
        %v2282 = vand.u32 %v610, 4294901760
        %2283 = vmatpush1.msra.mxu0 %v2282
        %2284 = vmatprep.subr.mxu0 0.0
        %2285 = vmatpush1.msra.mxu0 0.0
        %2286 = vmatprep.subr.mxu0 0.0
        %2287 = vmatpush1.msra.mxu0 0.0
        %2288 = vmatprep.subr.mxu0 0.0
        %2289 = vmatpush1.msra.mxu0 0.0
        %2290 = vmatprep.subr.mxu0 0.0
        %2291 = vmatpush1.msra.mxu0 0.0
        %2292 = vmatprep.subr.mxu0 0.0
        %2293 = vmatpush1.msra.mxu0 0.0
        %2294 = vmatprep.subr.mxu0 0.0
        %2295 = vmatpush1.msra.mxu0 0.0
        %2296 = vmatprep.subr.mxu0 0.0
        %2297 = vmatpush1.msra.mxu0 0.0
        %2298 = vmatprep.subr.mxu0 0.0
        %2299 = vmatpush1.msra.mxu0 0.0
        %2300 = vmatprep.subr.mxu0 0.0
        %2301 = vmatpush1.msra.mxu0 0.0
        %2302 = vmatprep.subr.mxu0 0.0
        %2303 = vmatpush1.msra.mxu0 0.0
        %2304 = vmatprep.subr.mxu0 0.0
        %2305 = vmatpush1.msra.mxu0 0.0
        %2306 = vmatprep.subr.mxu0 0.0
        %2307 = vmatpush1.msra.mxu0 0.0
        %2308 = vmatprep.subr.mxu0 0.0
        %2309 = vmatpush1.msra.mxu0 0.0
        %2310 = vmatprep.subr.mxu0 0.0
        %2311 = vmatpush1.msra.mxu0 0.0
        %2312 = vmatprep.subr.mxu0 0.0
        %2313 = vmatpush1.msra.mxu0 0.0
        %2314 = vmatprep.subr.mxu0 0.0
        %2315 = vmatpush1.msra.mxu0 0.0
        %2316 = vmatprep.subr.mxu0 0.0
        %2317 = vmatpush1.msra.mxu0 0.0
        %2318 = vmatprep.subr.mxu0 0.0
        %2319 = vmatpush1.msra.mxu0 0.0
        %2320 = vmatprep.subr.mxu0 0.0
        %2321 = vmatpush1.msra.mxu0 0.0
        %2322 = vmatprep.subr.mxu0 0.0
        %2323 = vmatpush1.msra.mxu0 0.0
        %2324 = vmatprep.subr.mxu0 0.0
        %2325 = vmatpush1.msra.mxu0 0.0
        %2326 = vmatprep.subr.mxu0 0.0
        %2327 = vmatpush1.msra.mxu0 0.0
        %2328 = vmatprep.subr.mxu0 0.0
        %2329 = vmatpush1.msra.mxu0 0.0
        %2330 = vmatprep.subr.mxu0 0.0
        %2331 = vmatpush1.msra.mxu0 0.0
        %2332 = vmatprep.subr.mxu0 0.0
        %2333 = vmatpush1.msra.mxu0 0.0
        %2334 = vmatprep.subr.mxu0 0.0
        %2335 = vmatpush1.msra.mxu0 0.0
        %2336 = vmatprep.subr.mxu0 0.0
        %2337 = vmatpush1.msra.mxu0 0.0
        %2338 = vmatprep.subr.mxu0 0.0
        %2339 = vmatpush1.msra.mxu0 0.0
        %2340 = vmatprep.mubr.f32.mxu0 0.0
        %v2341 = vand.u32 %v620, 4294901760
        %2342 = vmatmul.mubr.f32.gmra.mrb[0].mxu0 %v2341
        %v2343 = vpop.f32.mrb[0].mxu0
        %v2344 = vadd.f32 %v2083, %v2343
        %v2345 = vpop.f32.mrb[0].mxu0
        %2346 = vmatprep.mubr.f32.mxu0 0.0
        %v2347 = vand.u32 %v623, 4294901760
        %2348 = vmatmul.mubr.f32.gmra.mrb[0].mxu0 %v2347
        %v2349 = vpop.f32.mrb[0].mxu0
        %v2350 = vadd.f32 %v2089, %v2349
        %v2351 = vpop.f32.mrb[0].mxu0
        %2352 = vmatprep.mubr.f32.mxu0 0.0
        %v2353 = vand.u32 %v626, 4294901760
        %2354 = vmatmul.mubr.f32.gmra.mrb[0].mxu0 %v2353
        %v2355 = vpop.f32.mrb[0].mxu0
        %v2356 = vadd.f32 %v2095, %v2355
        %v2357 = vpop.f32.mrb[0].mxu0
        %2358 = vmatprep.mubr.f32.mxu0 0.0
        %v2359 = vand.u32 %v629, 4294901760
        %2360 = vmatmul.mubr.f32.gmra.mrb[0].mxu0 %v2359
        %v2361 = vpop.f32.mrb[0].mxu0
        %v2362 = vadd.f32 %v2101, %v2361
        %v2363 = vpop.f32.mrb[0].mxu0
        %2364 = vmatprep.mubr.f32.mxu0 0.0
        %v2365 = vand.u32 %v632, 4294901760
        %2366 = vmatmul.mubr.f32.gmra.mrb[0].mxu0 %v2365
        %v2367 = vpop.f32.mrb[0].mxu0
        %v2368 = vadd.f32 %v2107, %v2367
        %v2369 = vpop.f32.mrb[0].mxu0
        %2370 = vmatprep.mubr.f32.mxu0 0.0
        %v2371 = vand.u32 %v635, 4294901760
        %2372 = vmatmul.mubr.f32.gmra.mrb[0].mxu0 %v2371
        %v2373 = vpop.f32.mrb[0].mxu0
        %v2374 = vadd.f32 %v2113, %v2373
        %v2375 = vpop.f32.mrb[0].mxu0
        %2376 = vmatprep.mubr.f32.mxu0 0.0
        %v2377 = vand.u32 %v638, 4294901760
        %2378 = vmatmul.mubr.f32.gmra.mrb[0].mxu0 %v2377
        %v2379 = vpop.f32.mrb[0].mxu0
        %v2380 = vadd.f32 %v2119, %v2379
        %v2381 = vpop.f32.mrb[0].mxu0
        %2382 = vmatprep.mubr.f32.mxu0 0.0
        %v2383 = vand.u32 %v641, 4294901760
        %2384 = vmatmul.mubr.f32.gmra.mrb[0].mxu0 %v2383
        %v2385 = vpop.f32.mrb[0].mxu0
        %v2386 = vadd.f32 %v2125, %v2385
        %v2387 = vpop.f32.mrb[0].mxu0
        %2388 = vmatprep.mubr.f32.mxu0 0.0
        %v2389 = vand.u32 %v644, 4294901760
        %2390 = vmatmul.mubr.f32.gmra.mrb[0].mxu0 %v2389
        %v2391 = vpop.f32.mrb[0].mxu0
        %v2392 = vadd.f32 %v2131, %v2391
        %v2393 = vpop.f32.mrb[0].mxu0
        %2394 = vmatprep.mubr.f32.mxu0 0.0
        %v2395 = vand.u32 %v647, 4294901760
        %2396 = vmatmul.mubr.f32.gmra.mrb[0].mxu0 %v2395
        %v2397 = vpop.f32.mrb[0].mxu0
        %v2398 = vadd.f32 %v2137, %v2397
        %v2399 = vpop.f32.mrb[0].mxu0
        %2400 = vmatprep.mubr.f32.mxu0 0.0
        %v2401 = vand.u32 %v650, 4294901760
        %2402 = vmatmul.mubr.f32.gmra.mrb[0].mxu0 %v2401
        %v2403 = vpop.f32.mrb[0].mxu0
        %v2404 = vadd.f32 %v2143, %v2403
        %v2405 = vpop.f32.mrb[0].mxu0
        %2406 = vmatprep.mubr.f32.mxu0 0.0
        %v2407 = vand.u32 %v653, 4294901760
        %2408 = vmatmul.mubr.f32.gmra.mrb[0].mxu0 %v2407
        %v2409 = vpop.f32.mrb[0].mxu0
        %v2410 = vadd.f32 %v2149, %v2409
        %v2411 = vpop.f32.mrb[0].mxu0
        %2412 = vmatprep.mubr.f32.mxu0 0.0
        %v2413 = vand.u32 %v656, 4294901760
        %2414 = vmatmul.mubr.f32.gmra.mrb[0].mxu0 %v2413
        %v2415 = vpop.f32.mrb[0].mxu0
        %v2416 = vadd.f32 %v2155, %v2415
        %v2417 = vpop.f32.mrb[0].mxu0
        %2418 = vmatprep.mubr.f32.mxu0 0.0
        %v2419 = vand.u32 %v659, 4294901760
        %2420 = vmatmul.mubr.f32.gmra.mrb[0].mxu0 %v2419
        %v2421 = vpop.f32.mrb[0].mxu0
        %v2422 = vadd.f32 %v2161, %v2421
        %v2423 = vpop.f32.mrb[0].mxu0
        %2424 = vmatprep.mubr.f32.mxu0 0.0
        %v2425 = vand.u32 %v662, 4294901760
        %2426 = vmatmul.mubr.f32.gmra.mrb[0].mxu0 %v2425
        %v2427 = vpop.f32.mrb[0].mxu0
        %v2428 = vadd.f32 %v2167, %v2427
        %v2429 = vpop.f32.mrb[0].mxu0
        %2430 = vmatprep.mubr.f32.mxu0 0.0
        %v2431 = vand.u32 %v665, 4294901760
        %2432 = vmatmul.mubr.f32.gmra.mrb[0].mxu0 %v2431
        %v2433 = vpop.f32.mrb[0].mxu0
        %v2434 = vadd.f32 %v2173, %v2433
        %v2435 = vpop.f32.mrb[0].mxu0
        %2436 = vmatprep.mubr.f32.mxu0 0.0
        %v2437 = vand.u32 %v668, 4294901760
        %2438 = vmatmul.mubr.f32.gmra.mrb[0].mxu0 %v2437
        %v2439 = vpop.f32.mrb[0].mxu0
        %v2440 = vadd.f32 %v2179, %v2439
        %v2441 = vpop.f32.mrb[0].mxu0
        %2442 = vmatprep.mubr.f32.mxu0 0.0
        %v2443 = vand.u32 %v671, 4294901760
        %2444 = vmatmul.mubr.f32.gmra.mrb[0].mxu0 %v2443
        %v2445 = vpop.f32.mrb[0].mxu0
        %v2446 = vadd.f32 %v2185, %v2445
        %v2447 = vpop.f32.mrb[0].mxu0
        %2448 = vmatprep.mubr.f32.mxu0 0.0
        %v2449 = vand.u32 %v674, 4294901760
        %2450 = vmatmul.mubr.f32.gmra.mrb[0].mxu0 %v2449
        %v2451 = vpop.f32.mrb[0].mxu0
        %v2452 = vadd.f32 %v2191, %v2451
        %v2453 = vpop.f32.mrb[0].mxu0
        %2454 = vmatprep.mubr.f32.mxu0 0.0
        %v2455 = vand.u32 %v677, 4294901760
        %2456 = vmatmul.mubr.f32.gmra.mrb[0].mxu0 %v2455
        %v2457 = vpop.f32.mrb[0].mxu0
        %v2458 = vadd.f32 %v2197, %v2457
        %v2459 = vpop.f32.mrb[0].mxu0
        %2460 = vmatprep.mubr.f32.mxu0 0.0
        %v2461 = vand.u32 %v680, 4294901760
        %2462 = vmatmul.mubr.f32.gmra.mrb[0].mxu0 %v2461
        %v2463 = vpop.f32.mrb[0].mxu0
        %v2464 = vadd.f32 %v2203, %v2463
        %v2465 = vpop.f32.mrb[0].mxu0
        %2466 = vmatprep.mubr.f32.mxu0 0.0
        %v2467 = vand.u32 %v683, 4294901760
        %2468 = vmatmul.mubr.f32.gmra.mrb[0].mxu0 %v2467
        %v2469 = vpop.f32.mrb[0].mxu0
        %v2470 = vadd.f32 %v2209, %v2469
        %v2471 = vpop.f32.mrb[0].mxu0
        %2472 = vmatprep.mubr.f32.mxu0 0.0
        %v2473 = vand.u32 %v686, 4294901760
        %2474 = vmatmul.mubr.f32.gmra.mrb[0].mxu0 %v2473
        %v2475 = vpop.f32.mrb[0].mxu0
        %v2476 = vadd.f32 %v2215, %v2475
        %v2477 = vpop.f32.mrb[0].mxu0
        %2478 = vmatprep.mubr.f32.mxu0 0.0
        %v2479 = vand.u32 %v689, 4294901760
        %2480 = vmatmul.mubr.f32.gmra.mrb[0].mxu0 %v2479
        %v2481 = vpop.f32.mrb[0].mxu0
        %v2482 = vadd.f32 %v2221, %v2481
        %v2483 = vpop.f32.mrb[0].mxu0
        %2484 = vmatprep.mubr.f32.mxu0 0.0
        %v2485 = vand.u32 %v692, 4294901760
        %2486 = vmatmul.mubr.f32.gmra.mrb[0].mxu0 %v2485
        %v2487 = vpop.f32.mrb[0].mxu0
        %v2488 = vadd.f32 %v2227, %v2487
        %v2489 = vpop.f32.mrb[0].mxu0
        %2490 = vmatprep.mubr.f32.mxu0 0.0
        %v2491 = vand.u32 %v695, 4294901760
        %2492 = vmatmul.mubr.f32.gmra.mrb[0].mxu0 %v2491
        %v2493 = vpop.f32.mrb[0].mxu0
        %v2494 = vadd.f32 %v2233, %v2493
        %v2495 = vpop.f32.mrb[0].mxu0
        %2496 = vmatprep.mubr.f32.mxu0 0.0
        %v2497 = vand.u32 %v698, 4294901760
        %2498 = vmatmul.mubr.f32.gmra.mrb[0].mxu0 %v2497
        %v2499 = vpop.f32.mrb[0].mxu0
        %v2500 = vadd.f32 %v2239, %v2499
        %v2501 = vpop.f32.mrb[0].mxu0
        %2502 = vmatprep.mubr.f32.mxu0 0.0
        %v2503 = vand.u32 %v701, 4294901760
        %2504 = vmatmul.mubr.f32.gmra.mrb[0].mxu0 %v2503
        %v2505 = vpop.f32.mrb[0].mxu0
        %v2506 = vadd.f32 %v2245, %v2505
        %v2507 = vpop.f32.mrb[0].mxu0
        %2508 = vmatprep.mubr.f32.mxu0 0.0
        %v2509 = vand.u32 %v704, 4294901760
        %2510 = vmatmul.mubr.f32.gmra.mrb[0].mxu0 %v2509
        %v2511 = vpop.f32.mrb[0].mxu0
        %v2512 = vadd.f32 %v2251, %v2511
        %v2513 = vpop.f32.mrb[0].mxu0
        %2514 = vmatprep.mubr.f32.mxu0 0.0
        %v2515 = vand.u32 %v707, 4294901760
        %2516 = vmatmul.mubr.f32.gmra.mrb[0].mxu0 %v2515
        %v2517 = vpop.f32.mrb[0].mxu0
        %v2518 = vadd.f32 %v2257, %v2517
        %v2519 = vpop.f32.mrb[0].mxu0
        %2520 = vmatprep.mubr.f32.mxu0 0.0
        %v2521 = vand.u32 %v710, 4294901760
        %2522 = vmatmul.mubr.f32.gmra.mrb[0].mxu0 %v2521
        %v2523 = vpop.f32.mrb[0].mxu0
        %v2524 = vadd.f32 %v2263, %v2523
        %v2525 = vpop.f32.mrb[0].mxu0
        %2526 = vmatprep.mubr.f32.mxu0 0.0
        %v2527 = vand.u32 %v713, 4294901760
        %2528 = vmatmul.mubr.f32.gmra.mrb[0].mxu0 %v2527
        %v2529 = vpop.f32.mrb[0].mxu0
        %v2530 = vadd.f32 %v2269, %v2529
        %v2531 = vpop.f32.mrb[0].mxu0
        %2532 = vdwg.mxu0
        %v2533 = vmax.f32 %v2344, 0.0
        %v2534 = vmax.f32 %v2350, 0.0
        %v2535 = vmax.f32 %v2356, 0.0
        %v2536 = vmax.f32 %v2362, 0.0
        %v2537 = vmax.f32 %v2368, 0.0
        %v2538 = vmax.f32 %v2374, 0.0
        %v2539 = vmax.f32 %v2380, 0.0
        %v2540 = vmax.f32 %v2386, 0.0
        %v2541 = vmax.f32 %v2392, 0.0
        %v2542 = vmax.f32 %v2398, 0.0
        %v2543 = vmax.f32 %v2404, 0.0
        %v2544 = vmax.f32 %v2410, 0.0
        %v2545 = vmax.f32 %v2416, 0.0
        %v2546 = vmax.f32 %v2422, 0.0
        %v2547 = vmax.f32 %v2428, 0.0
        %v2548 = vmax.f32 %v2434, 0.0
        %v2549 = vmax.f32 %v2440, 0.0
        %v2550 = vmax.f32 %v2446, 0.0
        %v2551 = vmax.f32 %v2452, 0.0
        %v2552 = vmax.f32 %v2458, 0.0
        %v2553 = vmax.f32 %v2464, 0.0
        %v2554 = vmax.f32 %v2470, 0.0
        %v2555 = vmax.f32 %v2476, 0.0
        %v2556 = vmax.f32 %v2482, 0.0
        %v2557 = vmax.f32 %v2488, 0.0
        %v2558 = vmax.f32 %v2494, 0.0
        %v2559 = vmax.f32 %v2500, 0.0
        %v2560 = vmax.f32 %v2506, 0.0
        %v2561 = vmax.f32 %v2512, 0.0
        %v2562 = vmax.f32 %v2518, 0.0
        %v2563 = vmax.f32 %v2524, 0.0
        %v2564 = vmax.f32 %v2530, 0.0
        %v2565 = vld [vmem:[%s484] sm:$0xff]
        %v2566 = vld [vmem:[%s484 + $0x8] sm:$0xff]
        %v2567 = vld [vmem:[%s484 + $0x10] sm:$0xff]
        %v2568 = vld [vmem:[%s484 + $0x18] sm:$0xff]
        %v2569 = vld [vmem:[%s484 + $0x20] sm:$0xff]
        %v2570 = vld [vmem:[%s484 + $0x28] sm:$0xff]
        %v2571 = vld [vmem:[%s484 + $0x30] sm:$0xff]
        %v2572 = vld [vmem:[%s484 + $0x38] sm:$0xff]
        %vm2573 = vcmask 523264
        %v2575 = vsel %vm2573, %v2533, 0
        %v2578 = vsel %vm2573, %v2534, 0
        %v2581 = vsel %vm2573, %v2535, 0
        %v2584 = vsel %vm2573, %v2536, 0
        %v2587 = vsel %vm2573, %v2537, 0
        %v2590 = vsel %vm2573, %v2538, 0
        %v2593 = vsel %vm2573, %v2539, 0
        %v2596 = vsel %vm2573, %v2540, 0
        %v2599 = vsel %vm2573, %v2541, 0
        %v2602 = vsel %vm2573, %v2542, 0
        %v2605 = vsel %vm2573, %v2543, 0
        %v2608 = vsel %vm2573, %v2544, 0
        %v2611 = vsel %vm2573, %v2545, 0
        %v2614 = vsel %vm2573, %v2546, 0
        %v2617 = vsel %vm2573, %v2547, 0
        %v2620 = vsel %vm2573, %v2548, 0
        %v2623 = vsel %vm2573, %v2549, 0
        %v2626 = vsel %vm2573, %v2550, 0
        %v2629 = vsel %vm2573, %v2551, 0
        %v2632 = vsel %vm2573, %v2552, 0
        %v2635 = vsel %vm2573, %v2553, 0
        %v2638 = vsel %vm2573, %v2554, 0
        %v2641 = vsel %vm2573, %v2555, 0
        %v2644 = vsel %vm2573, %v2556, 0
        %v2647 = vsel %vm2573, %v2557, 0
        %v2650 = vsel %vm2573, %v2558, 0
        %v2653 = vsel %vm2573, %v2559, 0
        %v2656 = vsel %vm2573, %v2560, 0
        %v2659 = vsel %vm2573, %v2561, 0
        %v2662 = vsel %vm2573, %v2562, 0
        %v2665 = vsel %vm2573, %v2563, 0
        %v2668 = vsel %vm2573, %v2564, 0
        %2670 = vmatprep.subr.mxu0 0.0
        %v2671 = vand.u32 %v2565, 4294901760
        %2672 = vmatpush1.msra.mxu0 %v2671
        %2673 = vmatprep.subr.mxu0 0.0
        %v2674 = vand.u32 %v2566, 4294901760
        %2675 = vmatpush1.msra.mxu0 %v2674
        %2676 = vmatprep.subr.mxu0 0.0
        %v2677 = vand.u32 %v2567, 4294901760
        %2678 = vmatpush1.msra.mxu0 %v2677
        %2679 = vmatprep.subr.mxu0 0.0
        %v2680 = vand.u32 %v2568, 4294901760
        %2681 = vmatpush1.msra.mxu0 %v2680
        %2682 = vmatprep.subr.mxu0 0.0
        %v2683 = vand.u32 %v2569, 4294901760
        %2684 = vmatpush1.msra.mxu0 %v2683
        %2685 = vmatprep.subr.mxu0 0.0
        %v2686 = vand.u32 %v2570, 4294901760
        %2687 = vmatpush1.msra.mxu0 %v2686
        %2688 = vmatprep.subr.mxu0 0.0
        %v2689 = vand.u32 %v2571, 4294901760
        %2690 = vmatpush1.msra.mxu0 %v2689
        %2691 = vmatprep.subr.mxu0 0.0
        %v2692 = vand.u32 %v2572, 4294901760
        %2693 = vmatpush1.msra.mxu0 %v2692
        %2694 = vmatprep.subr.mxu0 0.0
        %2695 = vmatpush1.msra.mxu0 0.0
        %2696 = vmatprep.subr.mxu0 0.0
        %2697 = vmatpush1.msra.mxu0 0.0
        %2698 = vmatprep.subr.mxu0 0.0
        %2699 = vmatpush1.msra.mxu0 0.0
        %2700 = vmatprep.subr.mxu0 0.0
        %2701 = vmatpush1.msra.mxu0 0.0
        %2702 = vmatprep.subr.mxu0 0.0
        %2703 = vmatpush1.msra.mxu0 0.0
        %2704 = vmatprep.subr.mxu0 0.0
        %2705 = vmatpush1.msra.mxu0 0.0
        %2706 = vmatprep.subr.mxu0 0.0
        %2707 = vmatpush1.msra.mxu0 0.0
        %2708 = vmatprep.subr.mxu0 0.0
        %2709 = vmatpush1.msra.mxu0 0.0
        %2710 = vmatprep.subr.mxu0 0.0
        %2711 = vmatpush1.msra.mxu0 0.0
        %2712 = vmatprep.subr.mxu0 0.0
        %2713 = vmatpush1.msra.mxu0 0.0
        %2714 = vmatprep.subr.mxu0 0.0
        %2715 = vmatpush1.msra.mxu0 0.0
        %2716 = vmatprep.subr.mxu0 0.0
        %2717 = vmatpush1.msra.mxu0 0.0
        %2718 = vmatprep.subr.mxu0 0.0
        %2719 = vmatpush1.msra.mxu0 0.0
        %2720 = vmatprep.subr.mxu0 0.0
        %2721 = vmatpush1.msra.mxu0 0.0
        %2722 = vmatprep.subr.mxu0 0.0
        %2723 = vmatpush1.msra.mxu0 0.0
        %2724 = vmatprep.subr.mxu0 0.0
        %2725 = vmatpush1.msra.mxu0 0.0
        %2726 = vmatprep.subr.mxu0 0.0
        %2727 = vmatpush1.msra.mxu0 0.0
        %2728 = vmatprep.subr.mxu0 0.0
        %2729 = vmatpush1.msra.mxu0 0.0
        %2730 = vmatprep.subr.mxu0 0.0
        %2731 = vmatpush1.msra.mxu0 0.0
        %2732 = vmatprep.subr.mxu0 0.0
        %2733 = vmatpush1.msra.mxu0 0.0
        %2734 = vmatprep.subr.mxu0 0.0
        %2735 = vmatpush1.msra.mxu0 0.0
        %2736 = vmatprep.subr.mxu0 0.0
        %2737 = vmatpush1.msra.mxu0 0.0
        %2738 = vmatprep.subr.mxu0 0.0
        %2739 = vmatpush1.msra.mxu0 0.0
        %2740 = vmatprep.subr.mxu0 0.0
        %2741 = vmatpush1.msra.mxu0 0.0
        %2742 = vmatprep.mubr.f32.mxu0 0.0
        %v2743 = vand.u32 %v2575, 4294901760
        %v2744 = vsub.f32 %v2575, %v2743
        %v2745 = vand.u32 %v2744, 4294901760
        %v2746 = vsub.f32 %v2744, %v2745
        %v2747 = vand.u32 %v2746, 4294901760
        %2748 = vmatmul.mubr.f32.gmra.mrb[0].mxu0 %v2747
        %v2749 = vpop.f32.mrb[0].mxu0
        %v2750 = vadd.f32 0.0, %v2749
        %v2751 = vpop.f32.mrb[0].mxu0
        %2752 = vmatprep.mubr.f32.mxu0 0.0
        %v2753 = vand.u32 %v2578, 4294901760
        %v2754 = vsub.f32 %v2578, %v2753
        %v2755 = vand.u32 %v2754, 4294901760
        %v2756 = vsub.f32 %v2754, %v2755
        %v2757 = vand.u32 %v2756, 4294901760
        %2758 = vmatmul.mubr.f32.gmra.mrb[0].mxu0 %v2757
        %v2759 = vpop.f32.mrb[0].mxu0
        %v2760 = vadd.f32 0.0, %v2759
        %v2761 = vpop.f32.mrb[0].mxu0
        %2762 = vmatprep.mubr.f32.mxu0 0.0
        %v2763 = vand.u32 %v2581, 4294901760
        %v2764 = vsub.f32 %v2581, %v2763
        %v2765 = vand.u32 %v2764, 4294901760
        %v2766 = vsub.f32 %v2764, %v2765
        %v2767 = vand.u32 %v2766, 4294901760
        %2768 = vmatmul.mubr.f32.gmra.mrb[0].mxu0 %v2767
        %v2769 = vpop.f32.mrb[0].mxu0
        %v2770 = vadd.f32 0.0, %v2769
        %v2771 = vpop.f32.mrb[0].mxu0
        %2772 = vmatprep.mubr.f32.mxu0 0.0
        %v2773 = vand.u32 %v2584, 4294901760
        %v2774 = vsub.f32 %v2584, %v2773
        %v2775 = vand.u32 %v2774, 4294901760
        %v2776 = vsub.f32 %v2774, %v2775
        %v2777 = vand.u32 %v2776, 4294901760
        %2778 = vmatmul.mubr.f32.gmra.mrb[0].mxu0 %v2777
        %v2779 = vpop.f32.mrb[0].mxu0
        %v2780 = vadd.f32 0.0, %v2779
        %v2781 = vpop.f32.mrb[0].mxu0
        %2782 = vmatprep.mubr.f32.mxu0 0.0
        %v2783 = vand.u32 %v2587, 4294901760
        %v2784 = vsub.f32 %v2587, %v2783
        %v2785 = vand.u32 %v2784, 4294901760
        %v2786 = vsub.f32 %v2784, %v2785
        %v2787 = vand.u32 %v2786, 4294901760
        %2788 = vmatmul.mubr.f32.gmra.mrb[0].mxu0 %v2787
        %v2789 = vpop.f32.mrb[0].mxu0
        %v2790 = vadd.f32 0.0, %v2789
        %v2791 = vpop.f32.mrb[0].mxu0
        %2792 = vmatprep.mubr.f32.mxu0 0.0
        %v2793 = vand.u32 %v2590, 4294901760
        %v2794 = vsub.f32 %v2590, %v2793
        %v2795 = vand.u32 %v2794, 4294901760
        %v2796 = vsub.f32 %v2794, %v2795
        %v2797 = vand.u32 %v2796, 4294901760
        %2798 = vmatmul.mubr.f32.gmra.mrb[0].mxu0 %v2797
        %v2799 = vpop.f32.mrb[0].mxu0
        %v2800 = vadd.f32 0.0, %v2799
        %v2801 = vpop.f32.mrb[0].mxu0
        %2802 = vmatprep.mubr.f32.mxu0 0.0
        %v2803 = vand.u32 %v2593, 4294901760
        %v2804 = vsub.f32 %v2593, %v2803
        %v2805 = vand.u32 %v2804, 4294901760
        %v2806 = vsub.f32 %v2804, %v2805
        %v2807 = vand.u32 %v2806, 4294901760
        %2808 = vmatmul.mubr.f32.gmra.mrb[0].mxu0 %v2807
        %v2809 = vpop.f32.mrb[0].mxu0
        %v2810 = vadd.f32 0.0, %v2809
        %v2811 = vpop.f32.mrb[0].mxu0
        %2812 = vmatprep.mubr.f32.mxu0 0.0
        %v2813 = vand.u32 %v2596, 4294901760
        %v2814 = vsub.f32 %v2596, %v2813
        %v2815 = vand.u32 %v2814, 4294901760
        %v2816 = vsub.f32 %v2814, %v2815
        %v2817 = vand.u32 %v2816, 4294901760
        %2818 = vmatmul.mubr.f32.gmra.mrb[0].mxu0 %v2817
        %v2819 = vpop.f32.mrb[0].mxu0
        %v2820 = vadd.f32 0.0, %v2819
        %v2821 = vpop.f32.mrb[0].mxu0
        %2822 = vmatprep.mubr.f32.mxu0 0.0
        %v2823 = vand.u32 %v2599, 4294901760
        %v2824 = vsub.f32 %v2599, %v2823
        %v2825 = vand.u32 %v2824, 4294901760
        %v2826 = vsub.f32 %v2824, %v2825
        %v2827 = vand.u32 %v2826, 4294901760
        %2828 = vmatmul.mubr.f32.gmra.mrb[0].mxu0 %v2827
        %v2829 = vpop.f32.mrb[0].mxu0
        %v2830 = vadd.f32 0.0, %v2829
        %v2831 = vpop.f32.mrb[0].mxu0
        %2832 = vmatprep.mubr.f32.mxu0 0.0
        %v2833 = vand.u32 %v2602, 4294901760
        %v2834 = vsub.f32 %v2602, %v2833
        %v2835 = vand.u32 %v2834, 4294901760
        %v2836 = vsub.f32 %v2834, %v2835
        %v2837 = vand.u32 %v2836, 4294901760
        %2838 = vmatmul.mubr.f32.gmra.mrb[0].mxu0 %v2837
        %v2839 = vpop.f32.mrb[0].mxu0
        %v2840 = vadd.f32 0.0, %v2839
        %v2841 = vpop.f32.mrb[0].mxu0
        %2842 = vmatprep.mubr.f32.mxu0 0.0
        %v2843 = vand.u32 %v2605, 4294901760
        %v2844 = vsub.f32 %v2605, %v2843
        %v2845 = vand.u32 %v2844, 4294901760
        %v2846 = vsub.f32 %v2844, %v2845
        %v2847 = vand.u32 %v2846, 4294901760
        %2848 = vmatmul.mubr.f32.gmra.mrb[0].mxu0 %v2847
        %v2849 = vpop.f32.mrb[0].mxu0
        %v2850 = vadd.f32 0.0, %v2849
        %v2851 = vpop.f32.mrb[0].mxu0
        %2852 = vmatprep.mubr.f32.mxu0 0.0
        %v2853 = vand.u32 %v2608, 4294901760
        %v2854 = vsub.f32 %v2608, %v2853
        %v2855 = vand.u32 %v2854, 4294901760
        %v2856 = vsub.f32 %v2854, %v2855
        %v2857 = vand.u32 %v2856, 4294901760
        %2858 = vmatmul.mubr.f32.gmra.mrb[0].mxu0 %v2857
        %v2859 = vpop.f32.mrb[0].mxu0
        %v2860 = vadd.f32 0.0, %v2859
        %v2861 = vpop.f32.mrb[0].mxu0
        %2862 = vmatprep.mubr.f32.mxu0 0.0
        %v2863 = vand.u32 %v2611, 4294901760
        %v2864 = vsub.f32 %v2611, %v2863
        %v2865 = vand.u32 %v2864, 4294901760
        %v2866 = vsub.f32 %v2864, %v2865
        %v2867 = vand.u32 %v2866, 4294901760
        %2868 = vmatmul.mubr.f32.gmra.mrb[0].mxu0 %v2867
        %v2869 = vpop.f32.mrb[0].mxu0
        %v2870 = vadd.f32 0.0, %v2869
        %v2871 = vpop.f32.mrb[0].mxu0
        %2872 = vmatprep.mubr.f32.mxu0 0.0
        %v2873 = vand.u32 %v2614, 4294901760
        %v2874 = vsub.f32 %v2614, %v2873
        %v2875 = vand.u32 %v2874, 4294901760
        %v2876 = vsub.f32 %v2874, %v2875
        %v2877 = vand.u32 %v2876, 4294901760
        %2878 = vmatmul.mubr.f32.gmra.mrb[0].mxu0 %v2877
        %v2879 = vpop.f32.mrb[0].mxu0
        %v2880 = vadd.f32 0.0, %v2879
        %v2881 = vpop.f32.mrb[0].mxu0
        %2882 = vmatprep.mubr.f32.mxu0 0.0
        %v2883 = vand.u32 %v2617, 4294901760
        %v2884 = vsub.f32 %v2617, %v2883
        %v2885 = vand.u32 %v2884, 4294901760
        %v2886 = vsub.f32 %v2884, %v2885
        %v2887 = vand.u32 %v2886, 4294901760
        %2888 = vmatmul.mubr.f32.gmra.mrb[0].mxu0 %v2887
        %v2889 = vpop.f32.mrb[0].mxu0
        %v2890 = vadd.f32 0.0, %v2889
        %v2891 = vpop.f32.mrb[0].mxu0
        %2892 = vmatprep.mubr.f32.mxu0 0.0
        %v2893 = vand.u32 %v2620, 4294901760
        %v2894 = vsub.f32 %v2620, %v2893
        %v2895 = vand.u32 %v2894, 4294901760
        %v2896 = vsub.f32 %v2894, %v2895
        %v2897 = vand.u32 %v2896, 4294901760
        %2898 = vmatmul.mubr.f32.gmra.mrb[0].mxu0 %v2897
        %v2899 = vpop.f32.mrb[0].mxu0
        %v2900 = vadd.f32 0.0, %v2899
        %v2901 = vpop.f32.mrb[0].mxu0
        %2902 = vmatprep.mubr.f32.mxu0 0.0
        %v2903 = vand.u32 %v2623, 4294901760
        %v2904 = vsub.f32 %v2623, %v2903
        %v2905 = vand.u32 %v2904, 4294901760
        %v2906 = vsub.f32 %v2904, %v2905
        %v2907 = vand.u32 %v2906, 4294901760
        %2908 = vmatmul.mubr.f32.gmra.mrb[0].mxu0 %v2907
        %v2909 = vpop.f32.mrb[0].mxu0
        %v2910 = vadd.f32 0.0, %v2909
        %v2911 = vpop.f32.mrb[0].mxu0
        %2912 = vmatprep.mubr.f32.mxu0 0.0
        %v2913 = vand.u32 %v2626, 4294901760
        %v2914 = vsub.f32 %v2626, %v2913
        %v2915 = vand.u32 %v2914, 4294901760
        %v2916 = vsub.f32 %v2914, %v2915
        %v2917 = vand.u32 %v2916, 4294901760
        %2918 = vmatmul.mubr.f32.gmra.mrb[0].mxu0 %v2917
        %v2919 = vpop.f32.mrb[0].mxu0
        %v2920 = vadd.f32 0.0, %v2919
        %v2921 = vpop.f32.mrb[0].mxu0
        %2922 = vmatprep.mubr.f32.mxu0 0.0
        %v2923 = vand.u32 %v2629, 4294901760
        %v2924 = vsub.f32 %v2629, %v2923
        %v2925 = vand.u32 %v2924, 4294901760
        %v2926 = vsub.f32 %v2924, %v2925
        %v2927 = vand.u32 %v2926, 4294901760
        %2928 = vmatmul.mubr.f32.gmra.mrb[0].mxu0 %v2927
        %v2929 = vpop.f32.mrb[0].mxu0
        %v2930 = vadd.f32 0.0, %v2929
        %v2931 = vpop.f32.mrb[0].mxu0
        %2932 = vmatprep.mubr.f32.mxu0 0.0
        %v2933 = vand.u32 %v2632, 4294901760
        %v2934 = vsub.f32 %v2632, %v2933
        %v2935 = vand.u32 %v2934, 4294901760
        %v2936 = vsub.f32 %v2934, %v2935
        %v2937 = vand.u32 %v2936, 4294901760
        %2938 = vmatmul.mubr.f32.gmra.mrb[0].mxu0 %v2937
        %v2939 = vpop.f32.mrb[0].mxu0
        %v2940 = vadd.f32 0.0, %v2939
        %v2941 = vpop.f32.mrb[0].mxu0
        %2942 = vmatprep.mubr.f32.mxu0 0.0
        %v2943 = vand.u32 %v2635, 4294901760
        %v2944 = vsub.f32 %v2635, %v2943
        %v2945 = vand.u32 %v2944, 4294901760
        %v2946 = vsub.f32 %v2944, %v2945
        %v2947 = vand.u32 %v2946, 4294901760
        %2948 = vmatmul.mubr.f32.gmra.mrb[0].mxu0 %v2947
        %v2949 = vpop.f32.mrb[0].mxu0
        %v2950 = vadd.f32 0.0, %v2949
        %v2951 = vpop.f32.mrb[0].mxu0
        %2952 = vmatprep.mubr.f32.mxu0 0.0
        %v2953 = vand.u32 %v2638, 4294901760
        %v2954 = vsub.f32 %v2638, %v2953
        %v2955 = vand.u32 %v2954, 4294901760
        %v2956 = vsub.f32 %v2954, %v2955
        %v2957 = vand.u32 %v2956, 4294901760
        %2958 = vmatmul.mubr.f32.gmra.mrb[0].mxu0 %v2957
        %v2959 = vpop.f32.mrb[0].mxu0
        %v2960 = vadd.f32 0.0, %v2959
        %v2961 = vpop.f32.mrb[0].mxu0
        %2962 = vmatprep.mubr.f32.mxu0 0.0
        %v2963 = vand.u32 %v2641, 4294901760
        %v2964 = vsub.f32 %v2641, %v2963
        %v2965 = vand.u32 %v2964, 4294901760
        %v2966 = vsub.f32 %v2964, %v2965
        %v2967 = vand.u32 %v2966, 4294901760
        %2968 = vmatmul.mubr.f32.gmra.mrb[0].mxu0 %v2967
        %v2969 = vpop.f32.mrb[0].mxu0
        %v2970 = vadd.f32 0.0, %v2969
        %v2971 = vpop.f32.mrb[0].mxu0
        %2972 = vmatprep.mubr.f32.mxu0 0.0
        %v2973 = vand.u32 %v2644, 4294901760
        %v2974 = vsub.f32 %v2644, %v2973
        %v2975 = vand.u32 %v2974, 4294901760
        %v2976 = vsub.f32 %v2974, %v2975
        %v2977 = vand.u32 %v2976, 4294901760
        %2978 = vmatmul.mubr.f32.gmra.mrb[0].mxu0 %v2977
        %v2979 = vpop.f32.mrb[0].mxu0
        %v2980 = vadd.f32 0.0, %v2979
        %v2981 = vpop.f32.mrb[0].mxu0
        %2982 = vmatprep.mubr.f32.mxu0 0.0
        %v2983 = vand.u32 %v2647, 4294901760
        %v2984 = vsub.f32 %v2647, %v2983
        %v2985 = vand.u32 %v2984, 4294901760
        %v2986 = vsub.f32 %v2984, %v2985
        %v2987 = vand.u32 %v2986, 4294901760
        %2988 = vmatmul.mubr.f32.gmra.mrb[0].mxu0 %v2987
        %v2989 = vpop.f32.mrb[0].mxu0
        %v2990 = vadd.f32 0.0, %v2989
        %v2991 = vpop.f32.mrb[0].mxu0
        %2992 = vmatprep.mubr.f32.mxu0 0.0
        %v2993 = vand.u32 %v2650, 4294901760
        %v2994 = vsub.f32 %v2650, %v2993
        %v2995 = vand.u32 %v2994, 4294901760
        %v2996 = vsub.f32 %v2994, %v2995
        %v2997 = vand.u32 %v2996, 4294901760
        %2998 = vmatmul.mubr.f32.gmra.mrb[0].mxu0 %v2997
        %v2999 = vpop.f32.mrb[0].mxu0
        %v3000 = vadd.f32 0.0, %v2999
        %v3001 = vpop.f32.mrb[0].mxu0
        %3002 = vmatprep.mubr.f32.mxu0 0.0
        %v3003 = vand.u32 %v2653, 4294901760
        %v3004 = vsub.f32 %v2653, %v3003
        %v3005 = vand.u32 %v3004, 4294901760
        %v3006 = vsub.f32 %v3004, %v3005
        %v3007 = vand.u32 %v3006, 4294901760
        %3008 = vmatmul.mubr.f32.gmra.mrb[0].mxu0 %v3007
        %v3009 = vpop.f32.mrb[0].mxu0
        %v3010 = vadd.f32 0.0, %v3009
        %v3011 = vpop.f32.mrb[0].mxu0
        %3012 = vmatprep.mubr.f32.mxu0 0.0
        %v3013 = vand.u32 %v2656, 4294901760
        %v3014 = vsub.f32 %v2656, %v3013
        %v3015 = vand.u32 %v3014, 4294901760
        %v3016 = vsub.f32 %v3014, %v3015
        %v3017 = vand.u32 %v3016, 4294901760
        %3018 = vmatmul.mubr.f32.gmra.mrb[0].mxu0 %v3017
        %v3019 = vpop.f32.mrb[0].mxu0
        %v3020 = vadd.f32 0.0, %v3019
        %v3021 = vpop.f32.mrb[0].mxu0
        %3022 = vmatprep.mubr.f32.mxu0 0.0
        %v3023 = vand.u32 %v2659, 4294901760
        %v3024 = vsub.f32 %v2659, %v3023
        %v3025 = vand.u32 %v3024, 4294901760
        %v3026 = vsub.f32 %v3024, %v3025
        %v3027 = vand.u32 %v3026, 4294901760
        %3028 = vmatmul.mubr.f32.gmra.mrb[0].mxu0 %v3027
        %v3029 = vpop.f32.mrb[0].mxu0
        %v3030 = vadd.f32 0.0, %v3029
        %v3031 = vpop.f32.mrb[0].mxu0
        %3032 = vmatprep.mubr.f32.mxu0 0.0
        %v3033 = vand.u32 %v2662, 4294901760
        %v3034 = vsub.f32 %v2662, %v3033
        %v3035 = vand.u32 %v3034, 4294901760
        %v3036 = vsub.f32 %v3034, %v3035
        %v3037 = vand.u32 %v3036, 4294901760
        %3038 = vmatmul.mubr.f32.gmra.mrb[0].mxu0 %v3037
        %v3039 = vpop.f32.mrb[0].mxu0
        %v3040 = vadd.f32 0.0, %v3039
        %v3041 = vpop.f32.mrb[0].mxu0
        %3042 = vmatprep.mubr.f32.mxu0 0.0
        %v3043 = vand.u32 %v2665, 4294901760
        %v3044 = vsub.f32 %v2665, %v3043
        %v3045 = vand.u32 %v3044, 4294901760
        %v3046 = vsub.f32 %v3044, %v3045
        %v3047 = vand.u32 %v3046, 4294901760
        %3048 = vmatmul.mubr.f32.gmra.mrb[0].mxu0 %v3047
        %v3049 = vpop.f32.mrb[0].mxu0
        %v3050 = vadd.f32 0.0, %v3049
        %v3051 = vpop.f32.mrb[0].mxu0
        %3052 = vmatprep.mubr.f32.mxu0 0.0
        %v3053 = vand.u32 %v2668, 4294901760
        %v3054 = vsub.f32 %v2668, %v3053
        %v3055 = vand.u32 %v3054, 4294901760
        %v3056 = vsub.f32 %v3054, %v3055
        %v3057 = vand.u32 %v3056, 4294901760
        %3058 = vmatmul.mubr.f32.gmra.mrb[0].mxu0 %v3057
        %v3059 = vpop.f32.mrb[0].mxu0
        %v3060 = vadd.f32 0.0, %v3059
        %v3061 = vpop.f32.mrb[0].mxu0
        %3062 = vdwg.mxu0
        %3063 = vmatprep.subr.mxu0 0.0
        %v3064 = vand.u32 %v2565, 4294901760
        %v3065 = vsub.f32 %v2565, %v3064
        %v3066 = vand.u32 %v3065, 4294901760
        %v3067 = vsub.f32 %v3065, %v3066
        %v3068 = vand.u32 %v3067, 4294901760
        %3069 = vmatpush1.msra.mxu0 %v3068
        %3070 = vmatprep.subr.mxu0 0.0
        %v3071 = vand.u32 %v2566, 4294901760
        %v3072 = vsub.f32 %v2566, %v3071
        %v3073 = vand.u32 %v3072, 4294901760
        %v3074 = vsub.f32 %v3072, %v3073
        %v3075 = vand.u32 %v3074, 4294901760
        %3076 = vmatpush1.msra.mxu0 %v3075
        %3077 = vmatprep.subr.mxu0 0.0
        %v3078 = vand.u32 %v2567, 4294901760
        %v3079 = vsub.f32 %v2567, %v3078
        %v3080 = vand.u32 %v3079, 4294901760
        %v3081 = vsub.f32 %v3079, %v3080
        %v3082 = vand.u32 %v3081, 4294901760
        %3083 = vmatpush1.msra.mxu0 %v3082
        %3084 = vmatprep.subr.mxu0 0.0
        %v3085 = vand.u32 %v2568, 4294901760
        %v3086 = vsub.f32 %v2568, %v3085
        %v3087 = vand.u32 %v3086, 4294901760
        %v3088 = vsub.f32 %v3086, %v3087
        %v3089 = vand.u32 %v3088, 4294901760
        %3090 = vmatpush1.msra.mxu0 %v3089
        %3091 = vmatprep.subr.mxu0 0.0
        %v3092 = vand.u32 %v2569, 4294901760
        %v3093 = vsub.f32 %v2569, %v3092
        %v3094 = vand.u32 %v3093, 4294901760
        %v3095 = vsub.f32 %v3093, %v3094
        %v3096 = vand.u32 %v3095, 4294901760
        %3097 = vmatpush1.msra.mxu0 %v3096
        %3098 = vmatprep.subr.mxu0 0.0
        %v3099 = vand.u32 %v2570, 4294901760
        %v3100 = vsub.f32 %v2570, %v3099
        %v3101 = vand.u32 %v3100, 4294901760
        %v3102 = vsub.f32 %v3100, %v3101
        %v3103 = vand.u32 %v3102, 4294901760
        %3104 = vmatpush1.msra.mxu0 %v3103
        %3105 = vmatprep.subr.mxu0 0.0
        %v3106 = vand.u32 %v2571, 4294901760
        %v3107 = vsub.f32 %v2571, %v3106
        %v3108 = vand.u32 %v3107, 4294901760
        %v3109 = vsub.f32 %v3107, %v3108
        %v3110 = vand.u32 %v3109, 4294901760
        %3111 = vmatpush1.msra.mxu0 %v3110
        %3112 = vmatprep.subr.mxu0 0.0
        %v3113 = vand.u32 %v2572, 4294901760
        %v3114 = vsub.f32 %v2572, %v3113
        %v3115 = vand.u32 %v3114, 4294901760
        %v3116 = vsub.f32 %v3114, %v3115
        %v3117 = vand.u32 %v3116, 4294901760
        %3118 = vmatpush1.msra.mxu0 %v3117
        %3119 = vmatprep.subr.mxu0 0.0
        %3120 = vmatpush1.msra.mxu0 0.0
        %3121 = vmatprep.subr.mxu0 0.0
        %3122 = vmatpush1.msra.mxu0 0.0
        %3123 = vmatprep.subr.mxu0 0.0
        %3124 = vmatpush1.msra.mxu0 0.0
        %3125 = vmatprep.subr.mxu0 0.0
        %3126 = vmatpush1.msra.mxu0 0.0
        %3127 = vmatprep.subr.mxu0 0.0
        %3128 = vmatpush1.msra.mxu0 0.0
        %3129 = vmatprep.subr.mxu0 0.0
        %3130 = vmatpush1.msra.mxu0 0.0
        %3131 = vmatprep.subr.mxu0 0.0
        %3132 = vmatpush1.msra.mxu0 0.0
        %3133 = vmatprep.subr.mxu0 0.0
        %3134 = vmatpush1.msra.mxu0 0.0
        %3135 = vmatprep.subr.mxu0 0.0
        %3136 = vmatpush1.msra.mxu0 0.0
        %3137 = vmatprep.subr.mxu0 0.0
        %3138 = vmatpush1.msra.mxu0 0.0
        %3139 = vmatprep.subr.mxu0 0.0
        %3140 = vmatpush1.msra.mxu0 0.0
        %3141 = vmatprep.subr.mxu0 0.0
        %3142 = vmatpush1.msra.mxu0 0.0
        %3143 = vmatprep.subr.mxu0 0.0
        %3144 = vmatpush1.msra.mxu0 0.0
        %3145 = vmatprep.subr.mxu0 0.0
        %3146 = vmatpush1.msra.mxu0 0.0
        %3147 = vmatprep.subr.mxu0 0.0
        %3148 = vmatpush1.msra.mxu0 0.0
        %3149 = vmatprep.subr.mxu0 0.0
        %3150 = vmatpush1.msra.mxu0 0.0
        %3151 = vmatprep.subr.mxu0 0.0
        %3152 = vmatpush1.msra.mxu0 0.0
        %3153 = vmatprep.subr.mxu0 0.0
        %3154 = vmatpush1.msra.mxu0 0.0
        %3155 = vmatprep.subr.mxu0 0.0
        %3156 = vmatpush1.msra.mxu0 0.0
        %3157 = vmatprep.subr.mxu0 0.0
        %3158 = vmatpush1.msra.mxu0 0.0
        %3159 = vmatprep.subr.mxu0 0.0
        %3160 = vmatpush1.msra.mxu0 0.0
        %3161 = vmatprep.subr.mxu0 0.0
        %3162 = vmatpush1.msra.mxu0 0.0
        %3163 = vmatprep.subr.mxu0 0.0
        %3164 = vmatpush1.msra.mxu0 0.0
        %3165 = vmatprep.subr.mxu0 0.0
        %3166 = vmatpush1.msra.mxu0 0.0
        %3167 = vmatprep.mubr.f32.mxu0 0.0
        %v3168 = vand.u32 %v2575, 4294901760
        %3169 = vmatmul.mubr.f32.gmra.mrb[0].mxu0 %v3168
        %v3170 = vpop.f32.mrb[0].mxu0
        %v3171 = vadd.f32 %v2750, %v3170
        %v3172 = vpop.f32.mrb[0].mxu0
        %3173 = vmatprep.mubr.f32.mxu0 0.0
        %v3174 = vand.u32 %v2578, 4294901760
        %3175 = vmatmul.mubr.f32.gmra.mrb[0].mxu0 %v3174
        %v3176 = vpop.f32.mrb[0].mxu0
        %v3177 = vadd.f32 %v2760, %v3176
        %v3178 = vpop.f32.mrb[0].mxu0
        %3179 = vmatprep.mubr.f32.mxu0 0.0
        %v3180 = vand.u32 %v2581, 4294901760
        %3181 = vmatmul.mubr.f32.gmra.mrb[0].mxu0 %v3180
        %v3182 = vpop.f32.mrb[0].mxu0
        %v3183 = vadd.f32 %v2770, %v3182
        %v3184 = vpop.f32.mrb[0].mxu0
        %3185 = vmatprep.mubr.f32.mxu0 0.0
        %v3186 = vand.u32 %v2584, 4294901760
        %3187 = vmatmul.mubr.f32.gmra.mrb[0].mxu0 %v3186
        %v3188 = vpop.f32.mrb[0].mxu0
        %v3189 = vadd.f32 %v2780, %v3188
        %v3190 = vpop.f32.mrb[0].mxu0
        %3191 = vmatprep.mubr.f32.mxu0 0.0
        %v3192 = vand.u32 %v2587, 4294901760
        %3193 = vmatmul.mubr.f32.gmra.mrb[0].mxu0 %v3192
        %v3194 = vpop.f32.mrb[0].mxu0
        %v3195 = vadd.f32 %v2790, %v3194
        %v3196 = vpop.f32.mrb[0].mxu0
        %3197 = vmatprep.mubr.f32.mxu0 0.0
        %v3198 = vand.u32 %v2590, 4294901760
        %3199 = vmatmul.mubr.f32.gmra.mrb[0].mxu0 %v3198
        %v3200 = vpop.f32.mrb[0].mxu0
        %v3201 = vadd.f32 %v2800, %v3200
        %v3202 = vpop.f32.mrb[0].mxu0
        %3203 = vmatprep.mubr.f32.mxu0 0.0
        %v3204 = vand.u32 %v2593, 4294901760
        %3205 = vmatmul.mubr.f32.gmra.mrb[0].mxu0 %v3204
        %v3206 = vpop.f32.mrb[0].mxu0
        %v3207 = vadd.f32 %v2810, %v3206
        %v3208 = vpop.f32.mrb[0].mxu0
        %3209 = vmatprep.mubr.f32.mxu0 0.0
        %v3210 = vand.u32 %v2596, 4294901760
        %3211 = vmatmul.mubr.f32.gmra.mrb[0].mxu0 %v3210
        %v3212 = vpop.f32.mrb[0].mxu0
        %v3213 = vadd.f32 %v2820, %v3212
        %v3214 = vpop.f32.mrb[0].mxu0
        %3215 = vmatprep.mubr.f32.mxu0 0.0
        %v3216 = vand.u32 %v2599, 4294901760
        %3217 = vmatmul.mubr.f32.gmra.mrb[0].mxu0 %v3216
        %v3218 = vpop.f32.mrb[0].mxu0
        %v3219 = vadd.f32 %v2830, %v3218
        %v3220 = vpop.f32.mrb[0].mxu0
        %3221 = vmatprep.mubr.f32.mxu0 0.0
        %v3222 = vand.u32 %v2602, 4294901760
        %3223 = vmatmul.mubr.f32.gmra.mrb[0].mxu0 %v3222
        %v3224 = vpop.f32.mrb[0].mxu0
        %v3225 = vadd.f32 %v2840, %v3224
        %v3226 = vpop.f32.mrb[0].mxu0
        %3227 = vmatprep.mubr.f32.mxu0 0.0
        %v3228 = vand.u32 %v2605, 4294901760
        %3229 = vmatmul.mubr.f32.gmra.mrb[0].mxu0 %v3228
        %v3230 = vpop.f32.mrb[0].mxu0
        %v3231 = vadd.f32 %v2850, %v3230
        %v3232 = vpop.f32.mrb[0].mxu0
        %3233 = vmatprep.mubr.f32.mxu0 0.0
        %v3234 = vand.u32 %v2608, 4294901760
        %3235 = vmatmul.mubr.f32.gmra.mrb[0].mxu0 %v3234
        %v3236 = vpop.f32.mrb[0].mxu0
        %v3237 = vadd.f32 %v2860, %v3236
        %v3238 = vpop.f32.mrb[0].mxu0
        %3239 = vmatprep.mubr.f32.mxu0 0.0
        %v3240 = vand.u32 %v2611, 4294901760
        %3241 = vmatmul.mubr.f32.gmra.mrb[0].mxu0 %v3240
        %v3242 = vpop.f32.mrb[0].mxu0
        %v3243 = vadd.f32 %v2870, %v3242
        %v3244 = vpop.f32.mrb[0].mxu0
        %3245 = vmatprep.mubr.f32.mxu0 0.0
        %v3246 = vand.u32 %v2614, 4294901760
        %3247 = vmatmul.mubr.f32.gmra.mrb[0].mxu0 %v3246
        %v3248 = vpop.f32.mrb[0].mxu0
        %v3249 = vadd.f32 %v2880, %v3248
        %v3250 = vpop.f32.mrb[0].mxu0
        %3251 = vmatprep.mubr.f32.mxu0 0.0
        %v3252 = vand.u32 %v2617, 4294901760
        %3253 = vmatmul.mubr.f32.gmra.mrb[0].mxu0 %v3252
        %v3254 = vpop.f32.mrb[0].mxu0
        %v3255 = vadd.f32 %v2890, %v3254
        %v3256 = vpop.f32.mrb[0].mxu0
        %3257 = vmatprep.mubr.f32.mxu0 0.0
        %v3258 = vand.u32 %v2620, 4294901760
        %3259 = vmatmul.mubr.f32.gmra.mrb[0].mxu0 %v3258
        %v3260 = vpop.f32.mrb[0].mxu0
        %v3261 = vadd.f32 %v2900, %v3260
        %v3262 = vpop.f32.mrb[0].mxu0
        %3263 = vmatprep.mubr.f32.mxu0 0.0
        %v3264 = vand.u32 %v2623, 4294901760
        %3265 = vmatmul.mubr.f32.gmra.mrb[0].mxu0 %v3264
        %v3266 = vpop.f32.mrb[0].mxu0
        %v3267 = vadd.f32 %v2910, %v3266
        %v3268 = vpop.f32.mrb[0].mxu0
        %3269 = vmatprep.mubr.f32.mxu0 0.0
        %v3270 = vand.u32 %v2626, 4294901760
        %3271 = vmatmul.mubr.f32.gmra.mrb[0].mxu0 %v3270
        %v3272 = vpop.f32.mrb[0].mxu0
        %v3273 = vadd.f32 %v2920, %v3272
        %v3274 = vpop.f32.mrb[0].mxu0
        %3275 = vmatprep.mubr.f32.mxu0 0.0
        %v3276 = vand.u32 %v2629, 4294901760
        %3277 = vmatmul.mubr.f32.gmra.mrb[0].mxu0 %v3276
        %v3278 = vpop.f32.mrb[0].mxu0
        %v3279 = vadd.f32 %v2930, %v3278
        %v3280 = vpop.f32.mrb[0].mxu0
        %3281 = vmatprep.mubr.f32.mxu0 0.0
        %v3282 = vand.u32 %v2632, 4294901760
        %3283 = vmatmul.mubr.f32.gmra.mrb[0].mxu0 %v3282
        %v3284 = vpop.f32.mrb[0].mxu0
        %v3285 = vadd.f32 %v2940, %v3284
        %v3286 = vpop.f32.mrb[0].mxu0
        %3287 = vmatprep.mubr.f32.mxu0 0.0
        %v3288 = vand.u32 %v2635, 4294901760
        %3289 = vmatmul.mubr.f32.gmra.mrb[0].mxu0 %v3288
        %v3290 = vpop.f32.mrb[0].mxu0
        %v3291 = vadd.f32 %v2950, %v3290
        %v3292 = vpop.f32.mrb[0].mxu0
        %3293 = vmatprep.mubr.f32.mxu0 0.0
        %v3294 = vand.u32 %v2638, 4294901760
        %3295 = vmatmul.mubr.f32.gmra.mrb[0].mxu0 %v3294
        %v3296 = vpop.f32.mrb[0].mxu0
        %v3297 = vadd.f32 %v2960, %v3296
        %v3298 = vpop.f32.mrb[0].mxu0
        %3299 = vmatprep.mubr.f32.mxu0 0.0
        %v3300 = vand.u32 %v2641, 4294901760
        %3301 = vmatmul.mubr.f32.gmra.mrb[0].mxu0 %v3300
        %v3302 = vpop.f32.mrb[0].mxu0
        %v3303 = vadd.f32 %v2970, %v3302
        %v3304 = vpop.f32.mrb[0].mxu0
        %3305 = vmatprep.mubr.f32.mxu0 0.0
        %v3306 = vand.u32 %v2644, 4294901760
        %3307 = vmatmul.mubr.f32.gmra.mrb[0].mxu0 %v3306
        %v3308 = vpop.f32.mrb[0].mxu0
        %v3309 = vadd.f32 %v2980, %v3308
        %v3310 = vpop.f32.mrb[0].mxu0
        %3311 = vmatprep.mubr.f32.mxu0 0.0
        %v3312 = vand.u32 %v2647, 4294901760
        %3313 = vmatmul.mubr.f32.gmra.mrb[0].mxu0 %v3312
        %v3314 = vpop.f32.mrb[0].mxu0
        %v3315 = vadd.f32 %v2990, %v3314
        %v3316 = vpop.f32.mrb[0].mxu0
        %3317 = vmatprep.mubr.f32.mxu0 0.0
        %v3318 = vand.u32 %v2650, 4294901760
        %3319 = vmatmul.mubr.f32.gmra.mrb[0].mxu0 %v3318
        %v3320 = vpop.f32.mrb[0].mxu0
        %v3321 = vadd.f32 %v3000, %v3320
        %v3322 = vpop.f32.mrb[0].mxu0
        %3323 = vmatprep.mubr.f32.mxu0 0.0
        %v3324 = vand.u32 %v2653, 4294901760
        %3325 = vmatmul.mubr.f32.gmra.mrb[0].mxu0 %v3324
        %v3326 = vpop.f32.mrb[0].mxu0
        %v3327 = vadd.f32 %v3010, %v3326
        %v3328 = vpop.f32.mrb[0].mxu0
        %3329 = vmatprep.mubr.f32.mxu0 0.0
        %v3330 = vand.u32 %v2656, 4294901760
        %3331 = vmatmul.mubr.f32.gmra.mrb[0].mxu0 %v3330
        %v3332 = vpop.f32.mrb[0].mxu0
        %v3333 = vadd.f32 %v3020, %v3332
        %v3334 = vpop.f32.mrb[0].mxu0
        %3335 = vmatprep.mubr.f32.mxu0 0.0
        %v3336 = vand.u32 %v2659, 4294901760
        %3337 = vmatmul.mubr.f32.gmra.mrb[0].mxu0 %v3336
        %v3338 = vpop.f32.mrb[0].mxu0
        %v3339 = vadd.f32 %v3030, %v3338
        %v3340 = vpop.f32.mrb[0].mxu0
        %3341 = vmatprep.mubr.f32.mxu0 0.0
        %v3342 = vand.u32 %v2662, 4294901760
        %3343 = vmatmul.mubr.f32.gmra.mrb[0].mxu0 %v3342
        %v3344 = vpop.f32.mrb[0].mxu0
        %v3345 = vadd.f32 %v3040, %v3344
        %v3346 = vpop.f32.mrb[0].mxu0
        %3347 = vmatprep.mubr.f32.mxu0 0.0
        %v3348 = vand.u32 %v2665, 4294901760
        %3349 = vmatmul.mubr.f32.gmra.mrb[0].mxu0 %v3348
        %v3350 = vpop.f32.mrb[0].mxu0
        %v3351 = vadd.f32 %v3050, %v3350
        %v3352 = vpop.f32.mrb[0].mxu0
        %3353 = vmatprep.mubr.f32.mxu0 0.0
        %v3354 = vand.u32 %v2668, 4294901760
        %3355 = vmatmul.mubr.f32.gmra.mrb[0].mxu0 %v3354
        %v3356 = vpop.f32.mrb[0].mxu0
        %v3357 = vadd.f32 %v3060, %v3356
        %v3358 = vpop.f32.mrb[0].mxu0
        %3359 = vdwg.mxu0
        %3360 = vmatprep.subr.mxu0 0.0
        %v3361 = vand.u32 %v2565, 4294901760
        %v3362 = vsub.f32 %v2565, %v3361
        %3363 = vmatpush1.msra.mxu0 %v3362
        %3364 = vmatprep.subr.mxu0 0.0
        %v3365 = vand.u32 %v2566, 4294901760
        %v3366 = vsub.f32 %v2566, %v3365
        %3367 = vmatpush1.msra.mxu0 %v3366
        %3368 = vmatprep.subr.mxu0 0.0
        %v3369 = vand.u32 %v2567, 4294901760
        %v3370 = vsub.f32 %v2567, %v3369
        %3371 = vmatpush1.msra.mxu0 %v3370
        %3372 = vmatprep.subr.mxu0 0.0
        %v3373 = vand.u32 %v2568, 4294901760
        %v3374 = vsub.f32 %v2568, %v3373
        %3375 = vmatpush1.msra.mxu0 %v3374
        %3376 = vmatprep.subr.mxu0 0.0
        %v3377 = vand.u32 %v2569, 4294901760
        %v3378 = vsub.f32 %v2569, %v3377
        %3379 = vmatpush1.msra.mxu0 %v3378
        %3380 = vmatprep.subr.mxu0 0.0
        %v3381 = vand.u32 %v2570, 4294901760
        %v3382 = vsub.f32 %v2570, %v3381
        %3383 = vmatpush1.msra.mxu0 %v3382
        %3384 = vmatprep.subr.mxu0 0.0
        %v3385 = vand.u32 %v2571, 4294901760
        %v3386 = vsub.f32 %v2571, %v3385
        %3387 = vmatpush1.msra.mxu0 %v3386
        %3388 = vmatprep.subr.mxu0 0.0
        %v3389 = vand.u32 %v2572, 4294901760
        %v3390 = vsub.f32 %v2572, %v3389
        %3391 = vmatpush1.msra.mxu0 %v3390
        %3392 = vmatprep.subr.mxu0 0.0
        %3393 = vmatpush1.msra.mxu0 0.0
        %3394 = vmatprep.subr.mxu0 0.0
        %3395 = vmatpush1.msra.mxu0 0.0
        %3396 = vmatprep.subr.mxu0 0.0
        %3397 = vmatpush1.msra.mxu0 0.0
        %3398 = vmatprep.subr.mxu0 0.0
        %3399 = vmatpush1.msra.mxu0 0.0
        %3400 = vmatprep.subr.mxu0 0.0
        %3401 = vmatpush1.msra.mxu0 0.0
        %3402 = vmatprep.subr.mxu0 0.0
        %3403 = vmatpush1.msra.mxu0 0.0
        %3404 = vmatprep.subr.mxu0 0.0
        %3405 = vmatpush1.msra.mxu0 0.0
        %3406 = vmatprep.subr.mxu0 0.0
        %3407 = vmatpush1.msra.mxu0 0.0
        %3408 = vmatprep.subr.mxu0 0.0
        %3409 = vmatpush1.msra.mxu0 0.0
        %3410 = vmatprep.subr.mxu0 0.0
        %3411 = vmatpush1.msra.mxu0 0.0
        %3412 = vmatprep.subr.mxu0 0.0
        %3413 = vmatpush1.msra.mxu0 0.0
        %3414 = vmatprep.subr.mxu0 0.0
        %3415 = vmatpush1.msra.mxu0 0.0
        %3416 = vmatprep.subr.mxu0 0.0
        %3417 = vmatpush1.msra.mxu0 0.0
        %3418 = vmatprep.subr.mxu0 0.0
        %3419 = vmatpush1.msra.mxu0 0.0
        %3420 = vmatprep.subr.mxu0 0.0
        %3421 = vmatpush1.msra.mxu0 0.0
        %3422 = vmatprep.subr.mxu0 0.0
        %3423 = vmatpush1.msra.mxu0 0.0
        %3424 = vmatprep.subr.mxu0 0.0
        %3425 = vmatpush1.msra.mxu0 0.0
        %3426 = vmatprep.subr.mxu0 0.0
        %3427 = vmatpush1.msra.mxu0 0.0
        %3428 = vmatprep.subr.mxu0 0.0
        %3429 = vmatpush1.msra.mxu0 0.0
        %3430 = vmatprep.subr.mxu0 0.0
        %3431 = vmatpush1.msra.mxu0 0.0
        %3432 = vmatprep.subr.mxu0 0.0
        %3433 = vmatpush1.msra.mxu0 0.0
        %3434 = vmatprep.subr.mxu0 0.0
        %3435 = vmatpush1.msra.mxu0 0.0
        %3436 = vmatprep.subr.mxu0 0.0
        %3437 = vmatpush1.msra.mxu0 0.0
        %3438 = vmatprep.subr.mxu0 0.0
        %3439 = vmatpush1.msra.mxu0 0.0
        %3440 = vmatprep.mubr.f32.mxu0 0.0
        %v3441 = vand.u32 %v2575, 4294901760
        %v3442 = vsub.f32 %v2575, %v3441
        %3443 = vmatmul.mubr.f32.gmra.mrb[0].mxu0 %v3442
        %v3444 = vpop.f32.mrb[0].mxu0
        %v3445 = vadd.f32 %v3171, %v3444
        %v3446 = vpop.f32.mrb[0].mxu0
        %3447 = vmatprep.mubr.f32.mxu0 0.0
        %v3448 = vand.u32 %v2578, 4294901760
        %v3449 = vsub.f32 %v2578, %v3448
        %3450 = vmatmul.mubr.f32.gmra.mrb[0].mxu0 %v3449
        %v3451 = vpop.f32.mrb[0].mxu0
        %v3452 = vadd.f32 %v3177, %v3451
        %v3453 = vpop.f32.mrb[0].mxu0
        %3454 = vmatprep.mubr.f32.mxu0 0.0
        %v3455 = vand.u32 %v2581, 4294901760
        %v3456 = vsub.f32 %v2581, %v3455
        %3457 = vmatmul.mubr.f32.gmra.mrb[0].mxu0 %v3456
        %v3458 = vpop.f32.mrb[0].mxu0
        %v3459 = vadd.f32 %v3183, %v3458
        %v3460 = vpop.f32.mrb[0].mxu0
        %3461 = vmatprep.mubr.f32.mxu0 0.0
        %v3462 = vand.u32 %v2584, 4294901760
        %v3463 = vsub.f32 %v2584, %v3462
        %3464 = vmatmul.mubr.f32.gmra.mrb[0].mxu0 %v3463
        %v3465 = vpop.f32.mrb[0].mxu0
        %v3466 = vadd.f32 %v3189, %v3465
        %v3467 = vpop.f32.mrb[0].mxu0
        %3468 = vmatprep.mubr.f32.mxu0 0.0
        %v3469 = vand.u32 %v2587, 4294901760
        %v3470 = vsub.f32 %v2587, %v3469
        %3471 = vmatmul.mubr.f32.gmra.mrb[0].mxu0 %v3470
        %v3472 = vpop.f32.mrb[0].mxu0
        %v3473 = vadd.f32 %v3195, %v3472
        %v3474 = vpop.f32.mrb[0].mxu0
        %3475 = vmatprep.mubr.f32.mxu0 0.0
        %v3476 = vand.u32 %v2590, 4294901760
        %v3477 = vsub.f32 %v2590, %v3476
        %3478 = vmatmul.mubr.f32.gmra.mrb[0].mxu0 %v3477
        %v3479 = vpop.f32.mrb[0].mxu0
        %v3480 = vadd.f32 %v3201, %v3479
        %v3481 = vpop.f32.mrb[0].mxu0
        %3482 = vmatprep.mubr.f32.mxu0 0.0
        %v3483 = vand.u32 %v2593, 4294901760
        %v3484 = vsub.f32 %v2593, %v3483
        %3485 = vmatmul.mubr.f32.gmra.mrb[0].mxu0 %v3484
        %v3486 = vpop.f32.mrb[0].mxu0
        %v3487 = vadd.f32 %v3207, %v3486
        %v3488 = vpop.f32.mrb[0].mxu0
        %3489 = vmatprep.mubr.f32.mxu0 0.0
        %v3490 = vand.u32 %v2596, 4294901760
        %v3491 = vsub.f32 %v2596, %v3490
        %3492 = vmatmul.mubr.f32.gmra.mrb[0].mxu0 %v3491
        %v3493 = vpop.f32.mrb[0].mxu0
        %v3494 = vadd.f32 %v3213, %v3493
        %v3495 = vpop.f32.mrb[0].mxu0
        %3496 = vmatprep.mubr.f32.mxu0 0.0
        %v3497 = vand.u32 %v2599, 4294901760
        %v3498 = vsub.f32 %v2599, %v3497
        %3499 = vmatmul.mubr.f32.gmra.mrb[0].mxu0 %v3498
        %v3500 = vpop.f32.mrb[0].mxu0
        %v3501 = vadd.f32 %v3219, %v3500
        %v3502 = vpop.f32.mrb[0].mxu0
        %3503 = vmatprep.mubr.f32.mxu0 0.0
        %v3504 = vand.u32 %v2602, 4294901760
        %v3505 = vsub.f32 %v2602, %v3504
        %3506 = vmatmul.mubr.f32.gmra.mrb[0].mxu0 %v3505
        %v3507 = vpop.f32.mrb[0].mxu0
        %v3508 = vadd.f32 %v3225, %v3507
        %v3509 = vpop.f32.mrb[0].mxu0
        %3510 = vmatprep.mubr.f32.mxu0 0.0
        %v3511 = vand.u32 %v2605, 4294901760
        %v3512 = vsub.f32 %v2605, %v3511
        %3513 = vmatmul.mubr.f32.gmra.mrb[0].mxu0 %v3512
        %v3514 = vpop.f32.mrb[0].mxu0
        %v3515 = vadd.f32 %v3231, %v3514
        %v3516 = vpop.f32.mrb[0].mxu0
        %3517 = vmatprep.mubr.f32.mxu0 0.0
        %v3518 = vand.u32 %v2608, 4294901760
        %v3519 = vsub.f32 %v2608, %v3518
        %3520 = vmatmul.mubr.f32.gmra.mrb[0].mxu0 %v3519
        %v3521 = vpop.f32.mrb[0].mxu0
        %v3522 = vadd.f32 %v3237, %v3521
        %v3523 = vpop.f32.mrb[0].mxu0
        %3524 = vmatprep.mubr.f32.mxu0 0.0
        %v3525 = vand.u32 %v2611, 4294901760
        %v3526 = vsub.f32 %v2611, %v3525
        %3527 = vmatmul.mubr.f32.gmra.mrb[0].mxu0 %v3526
        %v3528 = vpop.f32.mrb[0].mxu0
        %v3529 = vadd.f32 %v3243, %v3528
        %v3530 = vpop.f32.mrb[0].mxu0
        %3531 = vmatprep.mubr.f32.mxu0 0.0
        %v3532 = vand.u32 %v2614, 4294901760
        %v3533 = vsub.f32 %v2614, %v3532
        %3534 = vmatmul.mubr.f32.gmra.mrb[0].mxu0 %v3533
        %v3535 = vpop.f32.mrb[0].mxu0
        %v3536 = vadd.f32 %v3249, %v3535
        %v3537 = vpop.f32.mrb[0].mxu0
        %3538 = vmatprep.mubr.f32.mxu0 0.0
        %v3539 = vand.u32 %v2617, 4294901760
        %v3540 = vsub.f32 %v2617, %v3539
        %3541 = vmatmul.mubr.f32.gmra.mrb[0].mxu0 %v3540
        %v3542 = vpop.f32.mrb[0].mxu0
        %v3543 = vadd.f32 %v3255, %v3542
        %v3544 = vpop.f32.mrb[0].mxu0
        %3545 = vmatprep.mubr.f32.mxu0 0.0
        %v3546 = vand.u32 %v2620, 4294901760
        %v3547 = vsub.f32 %v2620, %v3546
        %3548 = vmatmul.mubr.f32.gmra.mrb[0].mxu0 %v3547
        %v3549 = vpop.f32.mrb[0].mxu0
        %v3550 = vadd.f32 %v3261, %v3549
        %v3551 = vpop.f32.mrb[0].mxu0
        %3552 = vmatprep.mubr.f32.mxu0 0.0
        %v3553 = vand.u32 %v2623, 4294901760
        %v3554 = vsub.f32 %v2623, %v3553
        %3555 = vmatmul.mubr.f32.gmra.mrb[0].mxu0 %v3554
        %v3556 = vpop.f32.mrb[0].mxu0
        %v3557 = vadd.f32 %v3267, %v3556
        %v3558 = vpop.f32.mrb[0].mxu0
        %3559 = vmatprep.mubr.f32.mxu0 0.0
        %v3560 = vand.u32 %v2626, 4294901760
        %v3561 = vsub.f32 %v2626, %v3560
        %3562 = vmatmul.mubr.f32.gmra.mrb[0].mxu0 %v3561
        %v3563 = vpop.f32.mrb[0].mxu0
        %v3564 = vadd.f32 %v3273, %v3563
        %v3565 = vpop.f32.mrb[0].mxu0
        %3566 = vmatprep.mubr.f32.mxu0 0.0
        %v3567 = vand.u32 %v2629, 4294901760
        %v3568 = vsub.f32 %v2629, %v3567
        %3569 = vmatmul.mubr.f32.gmra.mrb[0].mxu0 %v3568
        %v3570 = vpop.f32.mrb[0].mxu0
        %v3571 = vadd.f32 %v3279, %v3570
        %v3572 = vpop.f32.mrb[0].mxu0
        %3573 = vmatprep.mubr.f32.mxu0 0.0
        %v3574 = vand.u32 %v2632, 4294901760
        %v3575 = vsub.f32 %v2632, %v3574
        %3576 = vmatmul.mubr.f32.gmra.mrb[0].mxu0 %v3575
        %v3577 = vpop.f32.mrb[0].mxu0
        %v3578 = vadd.f32 %v3285, %v3577
        %v3579 = vpop.f32.mrb[0].mxu0
        %3580 = vmatprep.mubr.f32.mxu0 0.0
        %v3581 = vand.u32 %v2635, 4294901760
        %v3582 = vsub.f32 %v2635, %v3581
        %3583 = vmatmul.mubr.f32.gmra.mrb[0].mxu0 %v3582
        %v3584 = vpop.f32.mrb[0].mxu0
        %v3585 = vadd.f32 %v3291, %v3584
        %v3586 = vpop.f32.mrb[0].mxu0
        %3587 = vmatprep.mubr.f32.mxu0 0.0
        %v3588 = vand.u32 %v2638, 4294901760
        %v3589 = vsub.f32 %v2638, %v3588
        %3590 = vmatmul.mubr.f32.gmra.mrb[0].mxu0 %v3589
        %v3591 = vpop.f32.mrb[0].mxu0
        %v3592 = vadd.f32 %v3297, %v3591
        %v3593 = vpop.f32.mrb[0].mxu0
        %3594 = vmatprep.mubr.f32.mxu0 0.0
        %v3595 = vand.u32 %v2641, 4294901760
        %v3596 = vsub.f32 %v2641, %v3595
        %3597 = vmatmul.mubr.f32.gmra.mrb[0].mxu0 %v3596
        %v3598 = vpop.f32.mrb[0].mxu0
        %v3599 = vadd.f32 %v3303, %v3598
        %v3600 = vpop.f32.mrb[0].mxu0
        %3601 = vmatprep.mubr.f32.mxu0 0.0
        %v3602 = vand.u32 %v2644, 4294901760
        %v3603 = vsub.f32 %v2644, %v3602
        %3604 = vmatmul.mubr.f32.gmra.mrb[0].mxu0 %v3603
        %v3605 = vpop.f32.mrb[0].mxu0
        %v3606 = vadd.f32 %v3309, %v3605
        %v3607 = vpop.f32.mrb[0].mxu0
        %3608 = vmatprep.mubr.f32.mxu0 0.0
        %v3609 = vand.u32 %v2647, 4294901760
        %v3610 = vsub.f32 %v2647, %v3609
        %3611 = vmatmul.mubr.f32.gmra.mrb[0].mxu0 %v3610
        %v3612 = vpop.f32.mrb[0].mxu0
        %v3613 = vadd.f32 %v3315, %v3612
        %v3614 = vpop.f32.mrb[0].mxu0
        %3615 = vmatprep.mubr.f32.mxu0 0.0
        %v3616 = vand.u32 %v2650, 4294901760
        %v3617 = vsub.f32 %v2650, %v3616
        %3618 = vmatmul.mubr.f32.gmra.mrb[0].mxu0 %v3617
        %v3619 = vpop.f32.mrb[0].mxu0
        %v3620 = vadd.f32 %v3321, %v3619
        %v3621 = vpop.f32.mrb[0].mxu0
        %3622 = vmatprep.mubr.f32.mxu0 0.0
        %v3623 = vand.u32 %v2653, 4294901760
        %v3624 = vsub.f32 %v2653, %v3623
        %3625 = vmatmul.mubr.f32.gmra.mrb[0].mxu0 %v3624
        %v3626 = vpop.f32.mrb[0].mxu0
        %v3627 = vadd.f32 %v3327, %v3626
        %v3628 = vpop.f32.mrb[0].mxu0
        %3629 = vmatprep.mubr.f32.mxu0 0.0
        %v3630 = vand.u32 %v2656, 4294901760
        %v3631 = vsub.f32 %v2656, %v3630
        %3632 = vmatmul.mubr.f32.gmra.mrb[0].mxu0 %v3631
        %v3633 = vpop.f32.mrb[0].mxu0
        %v3634 = vadd.f32 %v3333, %v3633
        %v3635 = vpop.f32.mrb[0].mxu0
        %3636 = vmatprep.mubr.f32.mxu0 0.0
        %v3637 = vand.u32 %v2659, 4294901760
        %v3638 = vsub.f32 %v2659, %v3637
        %3639 = vmatmul.mubr.f32.gmra.mrb[0].mxu0 %v3638
        %v3640 = vpop.f32.mrb[0].mxu0
        %v3641 = vadd.f32 %v3339, %v3640
        %v3642 = vpop.f32.mrb[0].mxu0
        %3643 = vmatprep.mubr.f32.mxu0 0.0
        %v3644 = vand.u32 %v2662, 4294901760
        %v3645 = vsub.f32 %v2662, %v3644
        %3646 = vmatmul.mubr.f32.gmra.mrb[0].mxu0 %v3645
        %v3647 = vpop.f32.mrb[0].mxu0
        %v3648 = vadd.f32 %v3345, %v3647
        %v3649 = vpop.f32.mrb[0].mxu0
        %3650 = vmatprep.mubr.f32.mxu0 0.0
        %v3651 = vand.u32 %v2665, 4294901760
        %v3652 = vsub.f32 %v2665, %v3651
        %3653 = vmatmul.mubr.f32.gmra.mrb[0].mxu0 %v3652
        %v3654 = vpop.f32.mrb[0].mxu0
        %v3655 = vadd.f32 %v3351, %v3654
        %v3656 = vpop.f32.mrb[0].mxu0
        %3657 = vmatprep.mubr.f32.mxu0 0.0
        %v3658 = vand.u32 %v2668, 4294901760
        %v3659 = vsub.f32 %v2668, %v3658
        %3660 = vmatmul.mubr.f32.gmra.mrb[0].mxu0 %v3659
        %v3661 = vpop.f32.mrb[0].mxu0
        %v3662 = vadd.f32 %v3357, %v3661
        %v3663 = vpop.f32.mrb[0].mxu0
        %3664 = vdwg.mxu0
        %3665 = vmatprep.subr.mxu0 0.0
        %v3666 = vand.u32 %v2565, 4294901760
        %3667 = vmatpush1.msra.mxu0 %v3666
        %3668 = vmatprep.subr.mxu0 0.0
        %v3669 = vand.u32 %v2566, 4294901760
        %3670 = vmatpush1.msra.mxu0 %v3669
        %3671 = vmatprep.subr.mxu0 0.0
        %v3672 = vand.u32 %v2567, 4294901760
        %3673 = vmatpush1.msra.mxu0 %v3672
        %3674 = vmatprep.subr.mxu0 0.0
        %v3675 = vand.u32 %v2568, 4294901760
        %3676 = vmatpush1.msra.mxu0 %v3675
        %3677 = vmatprep.subr.mxu0 0.0
        %v3678 = vand.u32 %v2569, 4294901760
        %3679 = vmatpush1.msra.mxu0 %v3678
        %3680 = vmatprep.subr.mxu0 0.0
        %v3681 = vand.u32 %v2570, 4294901760
        %3682 = vmatpush1.msra.mxu0 %v3681
        %3683 = vmatprep.subr.mxu0 0.0
        %v3684 = vand.u32 %v2571, 4294901760
        %3685 = vmatpush1.msra.mxu0 %v3684
        %3686 = vmatprep.subr.mxu0 0.0
        %v3687 = vand.u32 %v2572, 4294901760
        %3688 = vmatpush1.msra.mxu0 %v3687
        %3689 = vmatprep.subr.mxu0 0.0
        %3690 = vmatpush1.msra.mxu0 0.0
        %3691 = vmatprep.subr.mxu0 0.0
        %3692 = vmatpush1.msra.mxu0 0.0
        %3693 = vmatprep.subr.mxu0 0.0
        %3694 = vmatpush1.msra.mxu0 0.0
        %3695 = vmatprep.subr.mxu0 0.0
        %3696 = vmatpush1.msra.mxu0 0.0
        %3697 = vmatprep.subr.mxu0 0.0
        %3698 = vmatpush1.msra.mxu0 0.0
        %3699 = vmatprep.subr.mxu0 0.0
        %3700 = vmatpush1.msra.mxu0 0.0
        %3701 = vmatprep.subr.mxu0 0.0
        %3702 = vmatpush1.msra.mxu0 0.0
        %3703 = vmatprep.subr.mxu0 0.0
        %3704 = vmatpush1.msra.mxu0 0.0
        %3705 = vmatprep.subr.mxu0 0.0
        %3706 = vmatpush1.msra.mxu0 0.0
        %3707 = vmatprep.subr.mxu0 0.0
        %3708 = vmatpush1.msra.mxu0 0.0
        %3709 = vmatprep.subr.mxu0 0.0
        %3710 = vmatpush1.msra.mxu0 0.0
        %3711 = vmatprep.subr.mxu0 0.0
        %3712 = vmatpush1.msra.mxu0 0.0
        %3713 = vmatprep.subr.mxu0 0.0
        %3714 = vmatpush1.msra.mxu0 0.0
        %3715 = vmatprep.subr.mxu0 0.0
        %3716 = vmatpush1.msra.mxu0 0.0
        %3717 = vmatprep.subr.mxu0 0.0
        %3718 = vmatpush1.msra.mxu0 0.0
        %3719 = vmatprep.subr.mxu0 0.0
        %3720 = vmatpush1.msra.mxu0 0.0
        %3721 = vmatprep.subr.mxu0 0.0
        %3722 = vmatpush1.msra.mxu0 0.0
        %3723 = vmatprep.subr.mxu0 0.0
        %3724 = vmatpush1.msra.mxu0 0.0
        %3725 = vmatprep.subr.mxu0 0.0
        %3726 = vmatpush1.msra.mxu0 0.0
        %3727 = vmatprep.subr.mxu0 0.0
        %3728 = vmatpush1.msra.mxu0 0.0
        %3729 = vmatprep.subr.mxu0 0.0
        %3730 = vmatpush1.msra.mxu0 0.0
        %3731 = vmatprep.subr.mxu0 0.0
        %3732 = vmatpush1.msra.mxu0 0.0
        %3733 = vmatprep.subr.mxu0 0.0
        %3734 = vmatpush1.msra.mxu0 0.0
        %3735 = vmatprep.subr.mxu0 0.0
        %3736 = vmatpush1.msra.mxu0 0.0
        %3737 = vmatprep.mubr.f32.mxu0 0.0
        %v3738 = vand.u32 %v2575, 4294901760
        %v3739 = vsub.f32 %v2575, %v3738
        %v3740 = vand.u32 %v3739, 4294901760
        %3741 = vmatmul.mubr.f32.gmra.mrb[0].mxu0 %v3740
        %v3742 = vpop.f32.mrb[0].mxu0
        %v3743 = vadd.f32 %v3445, %v3742
        %v3744 = vpop.f32.mrb[0].mxu0
        %3745 = vmatprep.mubr.f32.mxu0 0.0
        %v3746 = vand.u32 %v2578, 4294901760
        %v3747 = vsub.f32 %v2578, %v3746
        %v3748 = vand.u32 %v3747, 4294901760
        %3749 = vmatmul.mubr.f32.gmra.mrb[0].mxu0 %v3748
        %v3750 = vpop.f32.mrb[0].mxu0
        %v3751 = vadd.f32 %v3452, %v3750
        %v3752 = vpop.f32.mrb[0].mxu0
        %3753 = vmatprep.mubr.f32.mxu0 0.0
        %v3754 = vand.u32 %v2581, 4294901760
        %v3755 = vsub.f32 %v2581, %v3754
        %v3756 = vand.u32 %v3755, 4294901760
        %3757 = vmatmul.mubr.f32.gmra.mrb[0].mxu0 %v3756
        %v3758 = vpop.f32.mrb[0].mxu0
        %v3759 = vadd.f32 %v3459, %v3758
        %v3760 = vpop.f32.mrb[0].mxu0
        %3761 = vmatprep.mubr.f32.mxu0 0.0
        %v3762 = vand.u32 %v2584, 4294901760
        %v3763 = vsub.f32 %v2584, %v3762
        %v3764 = vand.u32 %v3763, 4294901760
        %3765 = vmatmul.mubr.f32.gmra.mrb[0].mxu0 %v3764
        %v3766 = vpop.f32.mrb[0].mxu0
        %v3767 = vadd.f32 %v3466, %v3766
        %v3768 = vpop.f32.mrb[0].mxu0
        %3769 = vmatprep.mubr.f32.mxu0 0.0
        %v3770 = vand.u32 %v2587, 4294901760
        %v3771 = vsub.f32 %v2587, %v3770
        %v3772 = vand.u32 %v3771, 4294901760
        %3773 = vmatmul.mubr.f32.gmra.mrb[0].mxu0 %v3772
        %v3774 = vpop.f32.mrb[0].mxu0
        %v3775 = vadd.f32 %v3473, %v3774
        %v3776 = vpop.f32.mrb[0].mxu0
        %3777 = vmatprep.mubr.f32.mxu0 0.0
        %v3778 = vand.u32 %v2590, 4294901760
        %v3779 = vsub.f32 %v2590, %v3778
        %v3780 = vand.u32 %v3779, 4294901760
        %3781 = vmatmul.mubr.f32.gmra.mrb[0].mxu0 %v3780
        %v3782 = vpop.f32.mrb[0].mxu0
        %v3783 = vadd.f32 %v3480, %v3782
        %v3784 = vpop.f32.mrb[0].mxu0
        %3785 = vmatprep.mubr.f32.mxu0 0.0
        %v3786 = vand.u32 %v2593, 4294901760
        %v3787 = vsub.f32 %v2593, %v3786
        %v3788 = vand.u32 %v3787, 4294901760
        %3789 = vmatmul.mubr.f32.gmra.mrb[0].mxu0 %v3788
        %v3790 = vpop.f32.mrb[0].mxu0
        %v3791 = vadd.f32 %v3487, %v3790
        %v3792 = vpop.f32.mrb[0].mxu0
        %3793 = vmatprep.mubr.f32.mxu0 0.0
        %v3794 = vand.u32 %v2596, 4294901760
        %v3795 = vsub.f32 %v2596, %v3794
        %v3796 = vand.u32 %v3795, 4294901760
        %3797 = vmatmul.mubr.f32.gmra.mrb[0].mxu0 %v3796
        %v3798 = vpop.f32.mrb[0].mxu0
        %v3799 = vadd.f32 %v3494, %v3798
        %v3800 = vpop.f32.mrb[0].mxu0
        %3801 = vmatprep.mubr.f32.mxu0 0.0
        %v3802 = vand.u32 %v2599, 4294901760
        %v3803 = vsub.f32 %v2599, %v3802
        %v3804 = vand.u32 %v3803, 4294901760
        %3805 = vmatmul.mubr.f32.gmra.mrb[0].mxu0 %v3804
        %v3806 = vpop.f32.mrb[0].mxu0
        %v3807 = vadd.f32 %v3501, %v3806
        %v3808 = vpop.f32.mrb[0].mxu0
        %3809 = vmatprep.mubr.f32.mxu0 0.0
        %v3810 = vand.u32 %v2602, 4294901760
        %v3811 = vsub.f32 %v2602, %v3810
        %v3812 = vand.u32 %v3811, 4294901760
        %3813 = vmatmul.mubr.f32.gmra.mrb[0].mxu0 %v3812
        %v3814 = vpop.f32.mrb[0].mxu0
        %v3815 = vadd.f32 %v3508, %v3814
        %v3816 = vpop.f32.mrb[0].mxu0
        %3817 = vmatprep.mubr.f32.mxu0 0.0
        %v3818 = vand.u32 %v2605, 4294901760
        %v3819 = vsub.f32 %v2605, %v3818
        %v3820 = vand.u32 %v3819, 4294901760
        %3821 = vmatmul.mubr.f32.gmra.mrb[0].mxu0 %v3820
        %v3822 = vpop.f32.mrb[0].mxu0
        %v3823 = vadd.f32 %v3515, %v3822
        %v3824 = vpop.f32.mrb[0].mxu0
        %3825 = vmatprep.mubr.f32.mxu0 0.0
        %v3826 = vand.u32 %v2608, 4294901760
        %v3827 = vsub.f32 %v2608, %v3826
        %v3828 = vand.u32 %v3827, 4294901760
        %3829 = vmatmul.mubr.f32.gmra.mrb[0].mxu0 %v3828
        %v3830 = vpop.f32.mrb[0].mxu0
        %v3831 = vadd.f32 %v3522, %v3830
        %v3832 = vpop.f32.mrb[0].mxu0
        %3833 = vmatprep.mubr.f32.mxu0 0.0
        %v3834 = vand.u32 %v2611, 4294901760
        %v3835 = vsub.f32 %v2611, %v3834
        %v3836 = vand.u32 %v3835, 4294901760
        %3837 = vmatmul.mubr.f32.gmra.mrb[0].mxu0 %v3836
        %v3838 = vpop.f32.mrb[0].mxu0
        %v3839 = vadd.f32 %v3529, %v3838
        %v3840 = vpop.f32.mrb[0].mxu0
        %3841 = vmatprep.mubr.f32.mxu0 0.0
        %v3842 = vand.u32 %v2614, 4294901760
        %v3843 = vsub.f32 %v2614, %v3842
        %v3844 = vand.u32 %v3843, 4294901760
        %3845 = vmatmul.mubr.f32.gmra.mrb[0].mxu0 %v3844
        %v3846 = vpop.f32.mrb[0].mxu0
        %v3847 = vadd.f32 %v3536, %v3846
        %v3848 = vpop.f32.mrb[0].mxu0
        %3849 = vmatprep.mubr.f32.mxu0 0.0
        %v3850 = vand.u32 %v2617, 4294901760
        %v3851 = vsub.f32 %v2617, %v3850
        %v3852 = vand.u32 %v3851, 4294901760
        %3853 = vmatmul.mubr.f32.gmra.mrb[0].mxu0 %v3852
        %v3854 = vpop.f32.mrb[0].mxu0
        %v3855 = vadd.f32 %v3543, %v3854
        %v3856 = vpop.f32.mrb[0].mxu0
        %3857 = vmatprep.mubr.f32.mxu0 0.0
        %v3858 = vand.u32 %v2620, 4294901760
        %v3859 = vsub.f32 %v2620, %v3858
        %v3860 = vand.u32 %v3859, 4294901760
        %3861 = vmatmul.mubr.f32.gmra.mrb[0].mxu0 %v3860
        %v3862 = vpop.f32.mrb[0].mxu0
        %v3863 = vadd.f32 %v3550, %v3862
        %v3864 = vpop.f32.mrb[0].mxu0
        %3865 = vmatprep.mubr.f32.mxu0 0.0
        %v3866 = vand.u32 %v2623, 4294901760
        %v3867 = vsub.f32 %v2623, %v3866
        %v3868 = vand.u32 %v3867, 4294901760
        %3869 = vmatmul.mubr.f32.gmra.mrb[0].mxu0 %v3868
        %v3870 = vpop.f32.mrb[0].mxu0
        %v3871 = vadd.f32 %v3557, %v3870
        %v3872 = vpop.f32.mrb[0].mxu0
        %3873 = vmatprep.mubr.f32.mxu0 0.0
        %v3874 = vand.u32 %v2626, 4294901760
        %v3875 = vsub.f32 %v2626, %v3874
        %v3876 = vand.u32 %v3875, 4294901760
        %3877 = vmatmul.mubr.f32.gmra.mrb[0].mxu0 %v3876
        %v3878 = vpop.f32.mrb[0].mxu0
        %v3879 = vadd.f32 %v3564, %v3878
        %v3880 = vpop.f32.mrb[0].mxu0
        %3881 = vmatprep.mubr.f32.mxu0 0.0
        %v3882 = vand.u32 %v2629, 4294901760
        %v3883 = vsub.f32 %v2629, %v3882
        %v3884 = vand.u32 %v3883, 4294901760
        %3885 = vmatmul.mubr.f32.gmra.mrb[0].mxu0 %v3884
        %v3886 = vpop.f32.mrb[0].mxu0
        %v3887 = vadd.f32 %v3571, %v3886
        %v3888 = vpop.f32.mrb[0].mxu0
        %3889 = vmatprep.mubr.f32.mxu0 0.0
        %v3890 = vand.u32 %v2632, 4294901760
        %v3891 = vsub.f32 %v2632, %v3890
        %v3892 = vand.u32 %v3891, 4294901760
        %3893 = vmatmul.mubr.f32.gmra.mrb[0].mxu0 %v3892
        %v3894 = vpop.f32.mrb[0].mxu0
        %v3895 = vadd.f32 %v3578, %v3894
        %v3896 = vpop.f32.mrb[0].mxu0
        %3897 = vmatprep.mubr.f32.mxu0 0.0
        %v3898 = vand.u32 %v2635, 4294901760
        %v3899 = vsub.f32 %v2635, %v3898
        %v3900 = vand.u32 %v3899, 4294901760
        %3901 = vmatmul.mubr.f32.gmra.mrb[0].mxu0 %v3900
        %v3902 = vpop.f32.mrb[0].mxu0
        %v3903 = vadd.f32 %v3585, %v3902
        %v3904 = vpop.f32.mrb[0].mxu0
        %3905 = vmatprep.mubr.f32.mxu0 0.0
        %v3906 = vand.u32 %v2638, 4294901760
        %v3907 = vsub.f32 %v2638, %v3906
        %v3908 = vand.u32 %v3907, 4294901760
        %3909 = vmatmul.mubr.f32.gmra.mrb[0].mxu0 %v3908
        %v3910 = vpop.f32.mrb[0].mxu0
        %v3911 = vadd.f32 %v3592, %v3910
        %v3912 = vpop.f32.mrb[0].mxu0
        %3913 = vmatprep.mubr.f32.mxu0 0.0
        %v3914 = vand.u32 %v2641, 4294901760
        %v3915 = vsub.f32 %v2641, %v3914
        %v3916 = vand.u32 %v3915, 4294901760
        %3917 = vmatmul.mubr.f32.gmra.mrb[0].mxu0 %v3916
        %v3918 = vpop.f32.mrb[0].mxu0
        %v3919 = vadd.f32 %v3599, %v3918
        %v3920 = vpop.f32.mrb[0].mxu0
        %3921 = vmatprep.mubr.f32.mxu0 0.0
        %v3922 = vand.u32 %v2644, 4294901760
        %v3923 = vsub.f32 %v2644, %v3922
        %v3924 = vand.u32 %v3923, 4294901760
        %3925 = vmatmul.mubr.f32.gmra.mrb[0].mxu0 %v3924
        %v3926 = vpop.f32.mrb[0].mxu0
        %v3927 = vadd.f32 %v3606, %v3926
        %v3928 = vpop.f32.mrb[0].mxu0
        %3929 = vmatprep.mubr.f32.mxu0 0.0
        %v3930 = vand.u32 %v2647, 4294901760
        %v3931 = vsub.f32 %v2647, %v3930
        %v3932 = vand.u32 %v3931, 4294901760
        %3933 = vmatmul.mubr.f32.gmra.mrb[0].mxu0 %v3932
        %v3934 = vpop.f32.mrb[0].mxu0
        %v3935 = vadd.f32 %v3613, %v3934
        %v3936 = vpop.f32.mrb[0].mxu0
        %3937 = vmatprep.mubr.f32.mxu0 0.0
        %v3938 = vand.u32 %v2650, 4294901760
        %v3939 = vsub.f32 %v2650, %v3938
        %v3940 = vand.u32 %v3939, 4294901760
        %3941 = vmatmul.mubr.f32.gmra.mrb[0].mxu0 %v3940
        %v3942 = vpop.f32.mrb[0].mxu0
        %v3943 = vadd.f32 %v3620, %v3942
        %v3944 = vpop.f32.mrb[0].mxu0
        %3945 = vmatprep.mubr.f32.mxu0 0.0
        %v3946 = vand.u32 %v2653, 4294901760
        %v3947 = vsub.f32 %v2653, %v3946
        %v3948 = vand.u32 %v3947, 4294901760
        %3949 = vmatmul.mubr.f32.gmra.mrb[0].mxu0 %v3948
        %v3950 = vpop.f32.mrb[0].mxu0
        %v3951 = vadd.f32 %v3627, %v3950
        %v3952 = vpop.f32.mrb[0].mxu0
        %3953 = vmatprep.mubr.f32.mxu0 0.0
        %v3954 = vand.u32 %v2656, 4294901760
        %v3955 = vsub.f32 %v2656, %v3954
        %v3956 = vand.u32 %v3955, 4294901760
        %3957 = vmatmul.mubr.f32.gmra.mrb[0].mxu0 %v3956
        %v3958 = vpop.f32.mrb[0].mxu0
        %v3959 = vadd.f32 %v3634, %v3958
        %v3960 = vpop.f32.mrb[0].mxu0
        %3961 = vmatprep.mubr.f32.mxu0 0.0
        %v3962 = vand.u32 %v2659, 4294901760
        %v3963 = vsub.f32 %v2659, %v3962
        %v3964 = vand.u32 %v3963, 4294901760
        %3965 = vmatmul.mubr.f32.gmra.mrb[0].mxu0 %v3964
        %v3966 = vpop.f32.mrb[0].mxu0
        %v3967 = vadd.f32 %v3641, %v3966
        %v3968 = vpop.f32.mrb[0].mxu0
        %3969 = vmatprep.mubr.f32.mxu0 0.0
        %v3970 = vand.u32 %v2662, 4294901760
        %v3971 = vsub.f32 %v2662, %v3970
        %v3972 = vand.u32 %v3971, 4294901760
        %3973 = vmatmul.mubr.f32.gmra.mrb[0].mxu0 %v3972
        %v3974 = vpop.f32.mrb[0].mxu0
        %v3975 = vadd.f32 %v3648, %v3974
        %v3976 = vpop.f32.mrb[0].mxu0
        %3977 = vmatprep.mubr.f32.mxu0 0.0
        %v3978 = vand.u32 %v2665, 4294901760
        %v3979 = vsub.f32 %v2665, %v3978
        %v3980 = vand.u32 %v3979, 4294901760
        %3981 = vmatmul.mubr.f32.gmra.mrb[0].mxu0 %v3980
        %v3982 = vpop.f32.mrb[0].mxu0
        %v3983 = vadd.f32 %v3655, %v3982
        %v3984 = vpop.f32.mrb[0].mxu0
        %3985 = vmatprep.mubr.f32.mxu0 0.0
        %v3986 = vand.u32 %v2668, 4294901760
        %v3987 = vsub.f32 %v2668, %v3986
        %v3988 = vand.u32 %v3987, 4294901760
        %3989 = vmatmul.mubr.f32.gmra.mrb[0].mxu0 %v3988
        %v3990 = vpop.f32.mrb[0].mxu0
        %v3991 = vadd.f32 %v3662, %v3990
        %v3992 = vpop.f32.mrb[0].mxu0
        %3993 = vdwg.mxu0
        %3994 = vmatprep.subr.mxu0 0.0
        %v3995 = vand.u32 %v2565, 4294901760
        %v3996 = vsub.f32 %v2565, %v3995
        %v3997 = vand.u32 %v3996, 4294901760
        %3998 = vmatpush1.msra.mxu0 %v3997
        %3999 = vmatprep.subr.mxu0 0.0
        %v4000 = vand.u32 %v2566, 4294901760
        %v4001 = vsub.f32 %v2566, %v4000
        %v4002 = vand.u32 %v4001, 4294901760
        %4003 = vmatpush1.msra.mxu0 %v4002
        %4004 = vmatprep.subr.mxu0 0.0
        %v4005 = vand.u32 %v2567, 4294901760
        %v4006 = vsub.f32 %v2567, %v4005
        %v4007 = vand.u32 %v4006, 4294901760
        %4008 = vmatpush1.msra.mxu0 %v4007
        %4009 = vmatprep.subr.mxu0 0.0
        %v4010 = vand.u32 %v2568, 4294901760
        %v4011 = vsub.f32 %v2568, %v4010
        %v4012 = vand.u32 %v4011, 4294901760
        %4013 = vmatpush1.msra.mxu0 %v4012
        %4014 = vmatprep.subr.mxu0 0.0
        %v4015 = vand.u32 %v2569, 4294901760
        %v4016 = vsub.f32 %v2569, %v4015
        %v4017 = vand.u32 %v4016, 4294901760
        %4018 = vmatpush1.msra.mxu0 %v4017
        %4019 = vmatprep.subr.mxu0 0.0
        %v4020 = vand.u32 %v2570, 4294901760
        %v4021 = vsub.f32 %v2570, %v4020
        %v4022 = vand.u32 %v4021, 4294901760
        %4023 = vmatpush1.msra.mxu0 %v4022
        %4024 = vmatprep.subr.mxu0 0.0
        %v4025 = vand.u32 %v2571, 4294901760
        %v4026 = vsub.f32 %v2571, %v4025
        %v4027 = vand.u32 %v4026, 4294901760
        %4028 = vmatpush1.msra.mxu0 %v4027
        %4029 = vmatprep.subr.mxu0 0.0
        %v4030 = vand.u32 %v2572, 4294901760
        %v4031 = vsub.f32 %v2572, %v4030
        %v4032 = vand.u32 %v4031, 4294901760
        %4033 = vmatpush1.msra.mxu0 %v4032
        %4034 = vmatprep.subr.mxu0 0.0
        %4035 = vmatpush1.msra.mxu0 0.0
        %4036 = vmatprep.subr.mxu0 0.0
        %4037 = vmatpush1.msra.mxu0 0.0
        %4038 = vmatprep.subr.mxu0 0.0
        %4039 = vmatpush1.msra.mxu0 0.0
        %4040 = vmatprep.subr.mxu0 0.0
        %4041 = vmatpush1.msra.mxu0 0.0
        %4042 = vmatprep.subr.mxu0 0.0
        %4043 = vmatpush1.msra.mxu0 0.0
        %4044 = vmatprep.subr.mxu0 0.0
        %4045 = vmatpush1.msra.mxu0 0.0
        %4046 = vmatprep.subr.mxu0 0.0
        %4047 = vmatpush1.msra.mxu0 0.0
        %4048 = vmatprep.subr.mxu0 0.0
        %4049 = vmatpush1.msra.mxu0 0.0
        %4050 = vmatprep.subr.mxu0 0.0
        %4051 = vmatpush1.msra.mxu0 0.0
        %4052 = vmatprep.subr.mxu0 0.0
        %4053 = vmatpush1.msra.mxu0 0.0
        %4054 = vmatprep.subr.mxu0 0.0
        %4055 = vmatpush1.msra.mxu0 0.0
        %4056 = vmatprep.subr.mxu0 0.0
        %4057 = vmatpush1.msra.mxu0 0.0
        %4058 = vmatprep.subr.mxu0 0.0
        %4059 = vmatpush1.msra.mxu0 0.0
        %4060 = vmatprep.subr.mxu0 0.0
        %4061 = vmatpush1.msra.mxu0 0.0
        %4062 = vmatprep.subr.mxu0 0.0
        %4063 = vmatpush1.msra.mxu0 0.0
        %4064 = vmatprep.subr.mxu0 0.0
        %4065 = vmatpush1.msra.mxu0 0.0
        %4066 = vmatprep.subr.mxu0 0.0
        %4067 = vmatpush1.msra.mxu0 0.0
        %4068 = vmatprep.subr.mxu0 0.0
        %4069 = vmatpush1.msra.mxu0 0.0
        %4070 = vmatprep.subr.mxu0 0.0
        %4071 = vmatpush1.msra.mxu0 0.0
        %4072 = vmatprep.subr.mxu0 0.0
        %4073 = vmatpush1.msra.mxu0 0.0
        %4074 = vmatprep.subr.mxu0 0.0
        %4075 = vmatpush1.msra.mxu0 0.0
        %4076 = vmatprep.subr.mxu0 0.0
        %4077 = vmatpush1.msra.mxu0 0.0
        %4078 = vmatprep.subr.mxu0 0.0
        %4079 = vmatpush1.msra.mxu0 0.0
        %4080 = vmatprep.subr.mxu0 0.0
        %4081 = vmatpush1.msra.mxu0 0.0
        %4082 = vmatprep.mubr.f32.mxu0 0.0
        %v4083 = vand.u32 %v2575, 4294901760
        %4084 = vmatmul.mubr.f32.gmra.mrb[0].mxu0 %v4083
        %v4085 = vpop.f32.mrb[0].mxu0
        %v4086 = vadd.f32 %v3743, %v4085
        %v4087 = vpop.f32.mrb[0].mxu0
        %4088 = vmatprep.mubr.f32.mxu0 0.0
        %v4089 = vand.u32 %v2578, 4294901760
        %4090 = vmatmul.mubr.f32.gmra.mrb[0].mxu0 %v4089
        %v4091 = vpop.f32.mrb[0].mxu0
        %v4092 = vadd.f32 %v3751, %v4091
        %v4093 = vpop.f32.mrb[0].mxu0
        %4094 = vmatprep.mubr.f32.mxu0 0.0
        %v4095 = vand.u32 %v2581, 4294901760
        %4096 = vmatmul.mubr.f32.gmra.mrb[0].mxu0 %v4095
        %v4097 = vpop.f32.mrb[0].mxu0
        %v4098 = vadd.f32 %v3759, %v4097
        %v4099 = vpop.f32.mrb[0].mxu0
        %4100 = vmatprep.mubr.f32.mxu0 0.0
        %v4101 = vand.u32 %v2584, 4294901760
        %4102 = vmatmul.mubr.f32.gmra.mrb[0].mxu0 %v4101
        %v4103 = vpop.f32.mrb[0].mxu0
        %v4104 = vadd.f32 %v3767, %v4103
        %v4105 = vpop.f32.mrb[0].mxu0
        %4106 = vmatprep.mubr.f32.mxu0 0.0
        %v4107 = vand.u32 %v2587, 4294901760
        %4108 = vmatmul.mubr.f32.gmra.mrb[0].mxu0 %v4107
        %v4109 = vpop.f32.mrb[0].mxu0
        %v4110 = vadd.f32 %v3775, %v4109
        %v4111 = vpop.f32.mrb[0].mxu0
        %4112 = vmatprep.mubr.f32.mxu0 0.0
        %v4113 = vand.u32 %v2590, 4294901760
        %4114 = vmatmul.mubr.f32.gmra.mrb[0].mxu0 %v4113
        %v4115 = vpop.f32.mrb[0].mxu0
        %v4116 = vadd.f32 %v3783, %v4115
        %v4117 = vpop.f32.mrb[0].mxu0
        %4118 = vmatprep.mubr.f32.mxu0 0.0
        %v4119 = vand.u32 %v2593, 4294901760
        %4120 = vmatmul.mubr.f32.gmra.mrb[0].mxu0 %v4119
        %v4121 = vpop.f32.mrb[0].mxu0
        %v4122 = vadd.f32 %v3791, %v4121
        %v4123 = vpop.f32.mrb[0].mxu0
        %4124 = vmatprep.mubr.f32.mxu0 0.0
        %v4125 = vand.u32 %v2596, 4294901760
        %4126 = vmatmul.mubr.f32.gmra.mrb[0].mxu0 %v4125
        %v4127 = vpop.f32.mrb[0].mxu0
        %v4128 = vadd.f32 %v3799, %v4127
        %v4129 = vpop.f32.mrb[0].mxu0
        %4130 = vmatprep.mubr.f32.mxu0 0.0
        %v4131 = vand.u32 %v2599, 4294901760
        %4132 = vmatmul.mubr.f32.gmra.mrb[0].mxu0 %v4131
        %v4133 = vpop.f32.mrb[0].mxu0
        %v4134 = vadd.f32 %v3807, %v4133
        %v4135 = vpop.f32.mrb[0].mxu0
        %4136 = vmatprep.mubr.f32.mxu0 0.0
        %v4137 = vand.u32 %v2602, 4294901760
        %4138 = vmatmul.mubr.f32.gmra.mrb[0].mxu0 %v4137
        %v4139 = vpop.f32.mrb[0].mxu0
        %v4140 = vadd.f32 %v3815, %v4139
        %v4141 = vpop.f32.mrb[0].mxu0
        %4142 = vmatprep.mubr.f32.mxu0 0.0
        %v4143 = vand.u32 %v2605, 4294901760
        %4144 = vmatmul.mubr.f32.gmra.mrb[0].mxu0 %v4143
        %v4145 = vpop.f32.mrb[0].mxu0
        %v4146 = vadd.f32 %v3823, %v4145
        %v4147 = vpop.f32.mrb[0].mxu0
        %4148 = vmatprep.mubr.f32.mxu0 0.0
        %v4149 = vand.u32 %v2608, 4294901760
        %4150 = vmatmul.mubr.f32.gmra.mrb[0].mxu0 %v4149
        %v4151 = vpop.f32.mrb[0].mxu0
        %v4152 = vadd.f32 %v3831, %v4151
        %v4153 = vpop.f32.mrb[0].mxu0
        %4154 = vmatprep.mubr.f32.mxu0 0.0
        %v4155 = vand.u32 %v2611, 4294901760
        %4156 = vmatmul.mubr.f32.gmra.mrb[0].mxu0 %v4155
        %v4157 = vpop.f32.mrb[0].mxu0
        %v4158 = vadd.f32 %v3839, %v4157
        %v4159 = vpop.f32.mrb[0].mxu0
        %4160 = vmatprep.mubr.f32.mxu0 0.0
        %v4161 = vand.u32 %v2614, 4294901760
        %4162 = vmatmul.mubr.f32.gmra.mrb[0].mxu0 %v4161
        %v4163 = vpop.f32.mrb[0].mxu0
        %v4164 = vadd.f32 %v3847, %v4163
        %v4165 = vpop.f32.mrb[0].mxu0
        %4166 = vmatprep.mubr.f32.mxu0 0.0
        %v4167 = vand.u32 %v2617, 4294901760
        %4168 = vmatmul.mubr.f32.gmra.mrb[0].mxu0 %v4167
        %v4169 = vpop.f32.mrb[0].mxu0
        %v4170 = vadd.f32 %v3855, %v4169
        %v4171 = vpop.f32.mrb[0].mxu0
        %4172 = vmatprep.mubr.f32.mxu0 0.0
        %v4173 = vand.u32 %v2620, 4294901760
        %4174 = vmatmul.mubr.f32.gmra.mrb[0].mxu0 %v4173
        %v4175 = vpop.f32.mrb[0].mxu0
        %v4176 = vadd.f32 %v3863, %v4175
        %v4177 = vpop.f32.mrb[0].mxu0
        %4178 = vmatprep.mubr.f32.mxu0 0.0
        %v4179 = vand.u32 %v2623, 4294901760
        %4180 = vmatmul.mubr.f32.gmra.mrb[0].mxu0 %v4179
        %v4181 = vpop.f32.mrb[0].mxu0
        %v4182 = vadd.f32 %v3871, %v4181
        %v4183 = vpop.f32.mrb[0].mxu0
        %4184 = vmatprep.mubr.f32.mxu0 0.0
        %v4185 = vand.u32 %v2626, 4294901760
        %4186 = vmatmul.mubr.f32.gmra.mrb[0].mxu0 %v4185
        %v4187 = vpop.f32.mrb[0].mxu0
        %v4188 = vadd.f32 %v3879, %v4187
        %v4189 = vpop.f32.mrb[0].mxu0
        %4190 = vmatprep.mubr.f32.mxu0 0.0
        %v4191 = vand.u32 %v2629, 4294901760
        %4192 = vmatmul.mubr.f32.gmra.mrb[0].mxu0 %v4191
        %v4193 = vpop.f32.mrb[0].mxu0
        %v4194 = vadd.f32 %v3887, %v4193
        %v4195 = vpop.f32.mrb[0].mxu0
        %4196 = vmatprep.mubr.f32.mxu0 0.0
        %v4197 = vand.u32 %v2632, 4294901760
        %4198 = vmatmul.mubr.f32.gmra.mrb[0].mxu0 %v4197
        %v4199 = vpop.f32.mrb[0].mxu0
        %v4200 = vadd.f32 %v3895, %v4199
        %v4201 = vpop.f32.mrb[0].mxu0
        %4202 = vmatprep.mubr.f32.mxu0 0.0
        %v4203 = vand.u32 %v2635, 4294901760
        %4204 = vmatmul.mubr.f32.gmra.mrb[0].mxu0 %v4203
        %v4205 = vpop.f32.mrb[0].mxu0
        %v4206 = vadd.f32 %v3903, %v4205
        %v4207 = vpop.f32.mrb[0].mxu0
        %4208 = vmatprep.mubr.f32.mxu0 0.0
        %v4209 = vand.u32 %v2638, 4294901760
        %4210 = vmatmul.mubr.f32.gmra.mrb[0].mxu0 %v4209
        %v4211 = vpop.f32.mrb[0].mxu0
        %v4212 = vadd.f32 %v3911, %v4211
        %v4213 = vpop.f32.mrb[0].mxu0
        %4214 = vmatprep.mubr.f32.mxu0 0.0
        %v4215 = vand.u32 %v2641, 4294901760
        %4216 = vmatmul.mubr.f32.gmra.mrb[0].mxu0 %v4215
        %v4217 = vpop.f32.mrb[0].mxu0
        %v4218 = vadd.f32 %v3919, %v4217
        %v4219 = vpop.f32.mrb[0].mxu0
        %4220 = vmatprep.mubr.f32.mxu0 0.0
        %v4221 = vand.u32 %v2644, 4294901760
        %4222 = vmatmul.mubr.f32.gmra.mrb[0].mxu0 %v4221
        %v4223 = vpop.f32.mrb[0].mxu0
        %v4224 = vadd.f32 %v3927, %v4223
        %v4225 = vpop.f32.mrb[0].mxu0
        %4226 = vmatprep.mubr.f32.mxu0 0.0
        %v4227 = vand.u32 %v2647, 4294901760
        %4228 = vmatmul.mubr.f32.gmra.mrb[0].mxu0 %v4227
        %v4229 = vpop.f32.mrb[0].mxu0
        %v4230 = vadd.f32 %v3935, %v4229
        %v4231 = vpop.f32.mrb[0].mxu0
        %4232 = vmatprep.mubr.f32.mxu0 0.0
        %v4233 = vand.u32 %v2650, 4294901760
        %4234 = vmatmul.mubr.f32.gmra.mrb[0].mxu0 %v4233
        %v4235 = vpop.f32.mrb[0].mxu0
        %v4236 = vadd.f32 %v3943, %v4235
        %v4237 = vpop.f32.mrb[0].mxu0
        %4238 = vmatprep.mubr.f32.mxu0 0.0
        %v4239 = vand.u32 %v2653, 4294901760
        %4240 = vmatmul.mubr.f32.gmra.mrb[0].mxu0 %v4239
        %v4241 = vpop.f32.mrb[0].mxu0
        %v4242 = vadd.f32 %v3951, %v4241
        %v4243 = vpop.f32.mrb[0].mxu0
        %4244 = vmatprep.mubr.f32.mxu0 0.0
        %v4245 = vand.u32 %v2656, 4294901760
        %4246 = vmatmul.mubr.f32.gmra.mrb[0].mxu0 %v4245
        %v4247 = vpop.f32.mrb[0].mxu0
        %v4248 = vadd.f32 %v3959, %v4247
        %v4249 = vpop.f32.mrb[0].mxu0
        %4250 = vmatprep.mubr.f32.mxu0 0.0
        %v4251 = vand.u32 %v2659, 4294901760
        %4252 = vmatmul.mubr.f32.gmra.mrb[0].mxu0 %v4251
        %v4253 = vpop.f32.mrb[0].mxu0
        %v4254 = vadd.f32 %v3967, %v4253
        %v4255 = vpop.f32.mrb[0].mxu0
        %4256 = vmatprep.mubr.f32.mxu0 0.0
        %v4257 = vand.u32 %v2662, 4294901760
        %4258 = vmatmul.mubr.f32.gmra.mrb[0].mxu0 %v4257
        %v4259 = vpop.f32.mrb[0].mxu0
        %v4260 = vadd.f32 %v3975, %v4259
        %v4261 = vpop.f32.mrb[0].mxu0
        %4262 = vmatprep.mubr.f32.mxu0 0.0
        %v4263 = vand.u32 %v2665, 4294901760
        %4264 = vmatmul.mubr.f32.gmra.mrb[0].mxu0 %v4263
        %v4265 = vpop.f32.mrb[0].mxu0
        %v4266 = vadd.f32 %v3983, %v4265
        %v4267 = vpop.f32.mrb[0].mxu0
        %4268 = vmatprep.mubr.f32.mxu0 0.0
        %v4269 = vand.u32 %v2668, 4294901760
        %4270 = vmatmul.mubr.f32.gmra.mrb[0].mxu0 %v4269
        %v4271 = vpop.f32.mrb[0].mxu0
        %v4272 = vadd.f32 %v3991, %v4271
        %v4273 = vpop.f32.mrb[0].mxu0
        %4274 = vdwg.mxu0
        %4275 = vmatprep.subr.mxu0 0.0
        %v4276 = vand.u32 %v2565, 4294901760
        %4277 = vmatpush1.msra.mxu0 %v4276
        %4278 = vmatprep.subr.mxu0 0.0
        %v4279 = vand.u32 %v2566, 4294901760
        %4280 = vmatpush1.msra.mxu0 %v4279
        %4281 = vmatprep.subr.mxu0 0.0
        %v4282 = vand.u32 %v2567, 4294901760
        %4283 = vmatpush1.msra.mxu0 %v4282
        %4284 = vmatprep.subr.mxu0 0.0
        %v4285 = vand.u32 %v2568, 4294901760
        %4286 = vmatpush1.msra.mxu0 %v4285
        %4287 = vmatprep.subr.mxu0 0.0
        %v4288 = vand.u32 %v2569, 4294901760
        %4289 = vmatpush1.msra.mxu0 %v4288
        %4290 = vmatprep.subr.mxu0 0.0
        %v4291 = vand.u32 %v2570, 4294901760
        %4292 = vmatpush1.msra.mxu0 %v4291
        %4293 = vmatprep.subr.mxu0 0.0
        %v4294 = vand.u32 %v2571, 4294901760
        %4295 = vmatpush1.msra.mxu0 %v4294
        %4296 = vmatprep.subr.mxu0 0.0
        %v4297 = vand.u32 %v2572, 4294901760
        %4298 = vmatpush1.msra.mxu0 %v4297
        %4299 = vmatprep.subr.mxu0 0.0
        %4300 = vmatpush1.msra.mxu0 0.0
        %4301 = vmatprep.subr.mxu0 0.0
        %4302 = vmatpush1.msra.mxu0 0.0
        %4303 = vmatprep.subr.mxu0 0.0
        %4304 = vmatpush1.msra.mxu0 0.0
        %4305 = vmatprep.subr.mxu0 0.0
        %4306 = vmatpush1.msra.mxu0 0.0
        %4307 = vmatprep.subr.mxu0 0.0
        %4308 = vmatpush1.msra.mxu0 0.0
        %4309 = vmatprep.subr.mxu0 0.0
        %4310 = vmatpush1.msra.mxu0 0.0
        %4311 = vmatprep.subr.mxu0 0.0
        %4312 = vmatpush1.msra.mxu0 0.0
        %4313 = vmatprep.subr.mxu0 0.0
        %4314 = vmatpush1.msra.mxu0 0.0
        %4315 = vmatprep.subr.mxu0 0.0
        %4316 = vmatpush1.msra.mxu0 0.0
        %4317 = vmatprep.subr.mxu0 0.0
        %4318 = vmatpush1.msra.mxu0 0.0
        %4319 = vmatprep.subr.mxu0 0.0
        %4320 = vmatpush1.msra.mxu0 0.0
        %4321 = vmatprep.subr.mxu0 0.0
        %4322 = vmatpush1.msra.mxu0 0.0
        %4323 = vmatprep.subr.mxu0 0.0
        %4324 = vmatpush1.msra.mxu0 0.0
        %4325 = vmatprep.subr.mxu0 0.0
        %4326 = vmatpush1.msra.mxu0 0.0
        %4327 = vmatprep.subr.mxu0 0.0
        %4328 = vmatpush1.msra.mxu0 0.0
        %4329 = vmatprep.subr.mxu0 0.0
        %4330 = vmatpush1.msra.mxu0 0.0
        %4331 = vmatprep.subr.mxu0 0.0
        %4332 = vmatpush1.msra.mxu0 0.0
        %4333 = vmatprep.subr.mxu0 0.0
        %4334 = vmatpush1.msra.mxu0 0.0
        %4335 = vmatprep.subr.mxu0 0.0
        %4336 = vmatpush1.msra.mxu0 0.0
        %4337 = vmatprep.subr.mxu0 0.0
        %4338 = vmatpush1.msra.mxu0 0.0
        %4339 = vmatprep.subr.mxu0 0.0
        %4340 = vmatpush1.msra.mxu0 0.0
        %4341 = vmatprep.subr.mxu0 0.0
        %4342 = vmatpush1.msra.mxu0 0.0
        %4343 = vmatprep.subr.mxu0 0.0
        %4344 = vmatpush1.msra.mxu0 0.0
        %4345 = vmatprep.subr.mxu0 0.0
        %4346 = vmatpush1.msra.mxu0 0.0
        %4347 = vmatprep.mubr.f32.mxu0 0.0
        %v4348 = vand.u32 %v2575, 4294901760
        %4349 = vmatmul.mubr.f32.gmra.mrb[0].mxu0 %v4348
        %v4350 = vpop.f32.mrb[0].mxu0
        %v4351 = vadd.f32 %v4086, %v4350
        %v4352 = vpop.f32.mrb[0].mxu0
        %4353 = vmatprep.mubr.f32.mxu0 0.0
        %v4354 = vand.u32 %v2578, 4294901760
        %4355 = vmatmul.mubr.f32.gmra.mrb[0].mxu0 %v4354
        %v4356 = vpop.f32.mrb[0].mxu0
        %v4357 = vadd.f32 %v4092, %v4356
        %v4358 = vpop.f32.mrb[0].mxu0
        %4359 = vmatprep.mubr.f32.mxu0 0.0
        %v4360 = vand.u32 %v2581, 4294901760
        %4361 = vmatmul.mubr.f32.gmra.mrb[0].mxu0 %v4360
        %v4362 = vpop.f32.mrb[0].mxu0
        %v4363 = vadd.f32 %v4098, %v4362
        %v4364 = vpop.f32.mrb[0].mxu0
        %4365 = vmatprep.mubr.f32.mxu0 0.0
        %v4366 = vand.u32 %v2584, 4294901760
        %4367 = vmatmul.mubr.f32.gmra.mrb[0].mxu0 %v4366
        %v4368 = vpop.f32.mrb[0].mxu0
        %v4369 = vadd.f32 %v4104, %v4368
        %v4370 = vpop.f32.mrb[0].mxu0
        %4371 = vmatprep.mubr.f32.mxu0 0.0
        %v4372 = vand.u32 %v2587, 4294901760
        %4373 = vmatmul.mubr.f32.gmra.mrb[0].mxu0 %v4372
        %v4374 = vpop.f32.mrb[0].mxu0
        %v4375 = vadd.f32 %v4110, %v4374
        %v4376 = vpop.f32.mrb[0].mxu0
        %4377 = vmatprep.mubr.f32.mxu0 0.0
        %v4378 = vand.u32 %v2590, 4294901760
        %4379 = vmatmul.mubr.f32.gmra.mrb[0].mxu0 %v4378
        %v4380 = vpop.f32.mrb[0].mxu0
        %v4381 = vadd.f32 %v4116, %v4380
        %v4382 = vpop.f32.mrb[0].mxu0
        %4383 = vmatprep.mubr.f32.mxu0 0.0
        %v4384 = vand.u32 %v2593, 4294901760
        %4385 = vmatmul.mubr.f32.gmra.mrb[0].mxu0 %v4384
        %v4386 = vpop.f32.mrb[0].mxu0
        %v4387 = vadd.f32 %v4122, %v4386
        %v4388 = vpop.f32.mrb[0].mxu0
        %4389 = vmatprep.mubr.f32.mxu0 0.0
        %v4390 = vand.u32 %v2596, 4294901760
        %4391 = vmatmul.mubr.f32.gmra.mrb[0].mxu0 %v4390
        %v4392 = vpop.f32.mrb[0].mxu0
        %v4393 = vadd.f32 %v4128, %v4392
        %v4394 = vpop.f32.mrb[0].mxu0
        %4395 = vmatprep.mubr.f32.mxu0 0.0
        %v4396 = vand.u32 %v2599, 4294901760
        %4397 = vmatmul.mubr.f32.gmra.mrb[0].mxu0 %v4396
        %v4398 = vpop.f32.mrb[0].mxu0
        %v4399 = vadd.f32 %v4134, %v4398
        %v4400 = vpop.f32.mrb[0].mxu0
        %4401 = vmatprep.mubr.f32.mxu0 0.0
        %v4402 = vand.u32 %v2602, 4294901760
        %4403 = vmatmul.mubr.f32.gmra.mrb[0].mxu0 %v4402
        %v4404 = vpop.f32.mrb[0].mxu0
        %v4405 = vadd.f32 %v4140, %v4404
        %v4406 = vpop.f32.mrb[0].mxu0
        %4407 = vmatprep.mubr.f32.mxu0 0.0
        %v4408 = vand.u32 %v2605, 4294901760
        %4409 = vmatmul.mubr.f32.gmra.mrb[0].mxu0 %v4408
        %v4410 = vpop.f32.mrb[0].mxu0
        %v4411 = vadd.f32 %v4146, %v4410
        %v4412 = vpop.f32.mrb[0].mxu0
        %4413 = vmatprep.mubr.f32.mxu0 0.0
        %v4414 = vand.u32 %v2608, 4294901760
        %4415 = vmatmul.mubr.f32.gmra.mrb[0].mxu0 %v4414
        %v4416 = vpop.f32.mrb[0].mxu0
        %v4417 = vadd.f32 %v4152, %v4416
        %v4418 = vpop.f32.mrb[0].mxu0
        %4419 = vmatprep.mubr.f32.mxu0 0.0
        %v4420 = vand.u32 %v2611, 4294901760
        %4421 = vmatmul.mubr.f32.gmra.mrb[0].mxu0 %v4420
        %v4422 = vpop.f32.mrb[0].mxu0
        %v4423 = vadd.f32 %v4158, %v4422
        %v4424 = vpop.f32.mrb[0].mxu0
        %4425 = vmatprep.mubr.f32.mxu0 0.0
        %v4426 = vand.u32 %v2614, 4294901760
        %4427 = vmatmul.mubr.f32.gmra.mrb[0].mxu0 %v4426
        %v4428 = vpop.f32.mrb[0].mxu0
        %v4429 = vadd.f32 %v4164, %v4428
        %v4430 = vpop.f32.mrb[0].mxu0
        %4431 = vmatprep.mubr.f32.mxu0 0.0
        %v4432 = vand.u32 %v2617, 4294901760
        %4433 = vmatmul.mubr.f32.gmra.mrb[0].mxu0 %v4432
        %v4434 = vpop.f32.mrb[0].mxu0
        %v4435 = vadd.f32 %v4170, %v4434
        %v4436 = vpop.f32.mrb[0].mxu0
        %4437 = vmatprep.mubr.f32.mxu0 0.0
        %v4438 = vand.u32 %v2620, 4294901760
        %4439 = vmatmul.mubr.f32.gmra.mrb[0].mxu0 %v4438
        %v4440 = vpop.f32.mrb[0].mxu0
        %v4441 = vadd.f32 %v4176, %v4440
        %v4442 = vpop.f32.mrb[0].mxu0
        %4443 = vmatprep.mubr.f32.mxu0 0.0
        %v4444 = vand.u32 %v2623, 4294901760
        %4445 = vmatmul.mubr.f32.gmra.mrb[0].mxu0 %v4444
        %v4446 = vpop.f32.mrb[0].mxu0
        %v4447 = vadd.f32 %v4182, %v4446
        %v4448 = vpop.f32.mrb[0].mxu0
        %4449 = vmatprep.mubr.f32.mxu0 0.0
        %v4450 = vand.u32 %v2626, 4294901760
        %4451 = vmatmul.mubr.f32.gmra.mrb[0].mxu0 %v4450
        %v4452 = vpop.f32.mrb[0].mxu0
        %v4453 = vadd.f32 %v4188, %v4452
        %v4454 = vpop.f32.mrb[0].mxu0
        %4455 = vmatprep.mubr.f32.mxu0 0.0
        %v4456 = vand.u32 %v2629, 4294901760
        %4457 = vmatmul.mubr.f32.gmra.mrb[0].mxu0 %v4456
        %v4458 = vpop.f32.mrb[0].mxu0
        %v4459 = vadd.f32 %v4194, %v4458
        %v4460 = vpop.f32.mrb[0].mxu0
        %4461 = vmatprep.mubr.f32.mxu0 0.0
        %v4462 = vand.u32 %v2632, 4294901760
        %4463 = vmatmul.mubr.f32.gmra.mrb[0].mxu0 %v4462
        %v4464 = vpop.f32.mrb[0].mxu0
        %v4465 = vadd.f32 %v4200, %v4464
        %v4466 = vpop.f32.mrb[0].mxu0
        %4467 = vmatprep.mubr.f32.mxu0 0.0
        %v4468 = vand.u32 %v2635, 4294901760
        %4469 = vmatmul.mubr.f32.gmra.mrb[0].mxu0 %v4468
        %v4470 = vpop.f32.mrb[0].mxu0
        %v4471 = vadd.f32 %v4206, %v4470
        %v4472 = vpop.f32.mrb[0].mxu0
        %4473 = vmatprep.mubr.f32.mxu0 0.0
        %v4474 = vand.u32 %v2638, 4294901760
        %4475 = vmatmul.mubr.f32.gmra.mrb[0].mxu0 %v4474
        %v4476 = vpop.f32.mrb[0].mxu0
        %v4477 = vadd.f32 %v4212, %v4476
        %v4478 = vpop.f32.mrb[0].mxu0
        %4479 = vmatprep.mubr.f32.mxu0 0.0
        %v4480 = vand.u32 %v2641, 4294901760
        %4481 = vmatmul.mubr.f32.gmra.mrb[0].mxu0 %v4480
        %v4482 = vpop.f32.mrb[0].mxu0
        %v4483 = vadd.f32 %v4218, %v4482
        %v4484 = vpop.f32.mrb[0].mxu0
        %4485 = vmatprep.mubr.f32.mxu0 0.0
        %v4486 = vand.u32 %v2644, 4294901760
        %4487 = vmatmul.mubr.f32.gmra.mrb[0].mxu0 %v4486
        %v4488 = vpop.f32.mrb[0].mxu0
        %v4489 = vadd.f32 %v4224, %v4488
        %v4490 = vpop.f32.mrb[0].mxu0
        %4491 = vmatprep.mubr.f32.mxu0 0.0
        %v4492 = vand.u32 %v2647, 4294901760
        %4493 = vmatmul.mubr.f32.gmra.mrb[0].mxu0 %v4492
        %v4494 = vpop.f32.mrb[0].mxu0
        %v4495 = vadd.f32 %v4230, %v4494
        %v4496 = vpop.f32.mrb[0].mxu0
        %4497 = vmatprep.mubr.f32.mxu0 0.0
        %v4498 = vand.u32 %v2650, 4294901760
        %4499 = vmatmul.mubr.f32.gmra.mrb[0].mxu0 %v4498
        %v4500 = vpop.f32.mrb[0].mxu0
        %v4501 = vadd.f32 %v4236, %v4500
        %v4502 = vpop.f32.mrb[0].mxu0
        %4503 = vmatprep.mubr.f32.mxu0 0.0
        %v4504 = vand.u32 %v2653, 4294901760
        %4505 = vmatmul.mubr.f32.gmra.mrb[0].mxu0 %v4504
        %v4506 = vpop.f32.mrb[0].mxu0
        %v4507 = vadd.f32 %v4242, %v4506
        %v4508 = vpop.f32.mrb[0].mxu0
        %4509 = vmatprep.mubr.f32.mxu0 0.0
        %v4510 = vand.u32 %v2656, 4294901760
        %4511 = vmatmul.mubr.f32.gmra.mrb[0].mxu0 %v4510
        %v4512 = vpop.f32.mrb[0].mxu0
        %v4513 = vadd.f32 %v4248, %v4512
        %v4514 = vpop.f32.mrb[0].mxu0
        %4515 = vmatprep.mubr.f32.mxu0 0.0
        %v4516 = vand.u32 %v2659, 4294901760
        %4517 = vmatmul.mubr.f32.gmra.mrb[0].mxu0 %v4516
        %v4518 = vpop.f32.mrb[0].mxu0
        %v4519 = vadd.f32 %v4254, %v4518
        %v4520 = vpop.f32.mrb[0].mxu0
        %4521 = vmatprep.mubr.f32.mxu0 0.0
        %v4522 = vand.u32 %v2662, 4294901760
        %4523 = vmatmul.mubr.f32.gmra.mrb[0].mxu0 %v4522
        %v4524 = vpop.f32.mrb[0].mxu0
        %v4525 = vadd.f32 %v4260, %v4524
        %v4526 = vpop.f32.mrb[0].mxu0
        %4527 = vmatprep.mubr.f32.mxu0 0.0
        %v4528 = vand.u32 %v2665, 4294901760
        %4529 = vmatmul.mubr.f32.gmra.mrb[0].mxu0 %v4528
        %v4530 = vpop.f32.mrb[0].mxu0
        %v4531 = vadd.f32 %v4266, %v4530
        %v4532 = vpop.f32.mrb[0].mxu0
        %4533 = vmatprep.mubr.f32.mxu0 0.0
        %v4534 = vand.u32 %v2668, 4294901760
        %4535 = vmatmul.mubr.f32.gmra.mrb[0].mxu0 %v4534
        %v4536 = vpop.f32.mrb[0].mxu0
        %v4537 = vadd.f32 %v4272, %v4536
        %v4538 = vpop.f32.mrb[0].mxu0
        %4539 = vdwg.mxu0
        %v4540 = vld [vmem:[#allocation2] sm:$0xff]
        %v4541 = vld [vmem:[#allocation2 + $0x8] sm:$0xff]
        %v4542 = vld [vmem:[#allocation2 + $0x10] sm:$0xff]
        %v4543 = vld [vmem:[#allocation2 + $0x18] sm:$0xff]
        %v4544 = vld [vmem:[#allocation2 + $0x20] sm:$0xff]
        %v4545 = vld [vmem:[#allocation2 + $0x28] sm:$0xff]
        %v4546 = vld [vmem:[#allocation2 + $0x30] sm:$0xff]
        %v4547 = vld [vmem:[#allocation2 + $0x38] sm:$0xff]
        %v4548 = vld [vmem:[#allocation2 + $0x40] sm:$0xff]
        %v4549 = vld [vmem:[#allocation2 + $0x48] sm:$0xff]
        %v4550 = vld [vmem:[#allocation2 + $0x50] sm:$0xff]
        %v4551 = vld [vmem:[#allocation2 + $0x58] sm:$0xff]
        %v4552 = vld [vmem:[#allocation2 + $0x60] sm:$0xff]
        %v4553 = vld [vmem:[#allocation2 + $0x68] sm:$0xff]
        %v4554 = vld [vmem:[#allocation2 + $0x70] sm:$0xff]
        %v4555 = vld [vmem:[#allocation2 + $0x78] sm:$0xff]
        %v4556 = vld [vmem:[#allocation2 + $0x80] sm:$0xff]
        %v4557 = vld [vmem:[#allocation2 + $0x88] sm:$0xff]
        %v4558 = vld [vmem:[#allocation2 + $0x90] sm:$0xff]
        %v4559 = vld [vmem:[#allocation2 + $0x98] sm:$0xff]
        %v4560 = vld [vmem:[#allocation2 + $0xa0] sm:$0xff]
        %v4561 = vld [vmem:[#allocation2 + $0xa8] sm:$0xff]
        %v4562 = vld [vmem:[#allocation2 + $0xb0] sm:$0xff]
        %v4563 = vld [vmem:[#allocation2 + $0xb8] sm:$0xff]
        %v4564 = vld [vmem:[#allocation2 + $0xc0] sm:$0xff]
        %v4565 = vld [vmem:[#allocation2 + $0xc8] sm:$0xff]
        %v4566 = vld [vmem:[#allocation2 + $0xd0] sm:$0xff]
        %v4567 = vld [vmem:[#allocation2 + $0xd8] sm:$0xff]
        %v4568 = vld [vmem:[#allocation2 + $0xe0] sm:$0xff]
        %v4569 = vld [vmem:[#allocation2 + $0xe8] sm:$0xff]
        %v4570 = vld [vmem:[#allocation2 + $0xf0] sm:$0xff]
        %v4571 = vld [vmem:[#allocation2 + $0xf8] sm:$0xff]
        %4573 = vset.pattern.permute.xlu0 0
        %4574 = vperm.xlu0 %4573, %v543
        %v4575 = vpop.permute.xlu0 %4574
        %4578 = vset.pattern.permute.xlu0 0
        %4579 = vperm.xlu0 %4578, %v544
        %v4580 = vpop.permute.xlu0 %4579
        %4583 = vset.pattern.permute.xlu0 0
        %4584 = vperm.xlu0 %4583, %v545
        %v4585 = vpop.permute.xlu0 %4584
        %4588 = vset.pattern.permute.xlu0 0
        %4589 = vperm.xlu0 %4588, %v546
        %v4590 = vpop.permute.xlu0 %4589
        %4593 = vset.pattern.permute.xlu0 0
        %4594 = vperm.xlu0 %4593, %v547
        %v4595 = vpop.permute.xlu0 %4594
        %4598 = vset.pattern.permute.xlu0 0
        %4599 = vperm.xlu0 %4598, %v548
        %v4600 = vpop.permute.xlu0 %4599
        %4603 = vset.pattern.permute.xlu0 0
        %4604 = vperm.xlu0 %4603, %v549
        %v4605 = vpop.permute.xlu0 %4604
        %4608 = vset.pattern.permute.xlu0 0
        %4609 = vperm.xlu0 %4608, %v550
        %v4610 = vpop.permute.xlu0 %4609
        %4613 = vset.pattern.permute.xlu0 0
        %4614 = vperm.xlu0 %4613, %v551
        %v4615 = vpop.permute.xlu0 %4614
        %4618 = vset.pattern.permute.xlu0 0
        %4619 = vperm.xlu0 %4618, %v552
        %v4620 = vpop.permute.xlu0 %4619
        %4623 = vset.pattern.permute.xlu0 0
        %4624 = vperm.xlu0 %4623, %v553
        %v4625 = vpop.permute.xlu0 %4624
        %4628 = vset.pattern.permute.xlu0 0
        %4629 = vperm.xlu0 %4628, %v554
        %v4630 = vpop.permute.xlu0 %4629
        %4633 = vset.pattern.permute.xlu0 0
        %4634 = vperm.xlu0 %4633, %v555
        %v4635 = vpop.permute.xlu0 %4634
        %4638 = vset.pattern.permute.xlu0 0
        %4639 = vperm.xlu0 %4638, %v556
        %v4640 = vpop.permute.xlu0 %4639
        %4643 = vset.pattern.permute.xlu0 0
        %4644 = vperm.xlu0 %4643, %v557
        %v4645 = vpop.permute.xlu0 %4644
        %4648 = vset.pattern.permute.xlu0 0
        %4649 = vperm.xlu0 %4648, %v558
        %v4650 = vpop.permute.xlu0 %4649
        %4653 = vset.pattern.permute.xlu0 0
        %4654 = vperm.xlu0 %4653, %v559
        %v4655 = vpop.permute.xlu0 %4654
        %4658 = vset.pattern.permute.xlu0 0
        %4659 = vperm.xlu0 %4658, %v560
        %v4660 = vpop.permute.xlu0 %4659
        %4663 = vset.pattern.permute.xlu0 0
        %4664 = vperm.xlu0 %4663, %v561
        %v4665 = vpop.permute.xlu0 %4664
        %4668 = vset.pattern.permute.xlu0 0
        %4669 = vperm.xlu0 %4668, %v562
        %v4670 = vpop.permute.xlu0 %4669
        %4673 = vset.pattern.permute.xlu0 0
        %4674 = vperm.xlu0 %4673, %v563
        %v4675 = vpop.permute.xlu0 %4674
        %4678 = vset.pattern.permute.xlu0 0
        %4679 = vperm.xlu0 %4678, %v564
        %v4680 = vpop.permute.xlu0 %4679
        %4683 = vset.pattern.permute.xlu0 0
        %4684 = vperm.xlu0 %4683, %v565
        %v4685 = vpop.permute.xlu0 %4684
        %4688 = vset.pattern.permute.xlu0 0
        %4689 = vperm.xlu0 %4688, %v566
        %v4690 = vpop.permute.xlu0 %4689
        %4693 = vset.pattern.permute.xlu0 0
        %4694 = vperm.xlu0 %4693, %v567
        %v4695 = vpop.permute.xlu0 %4694
        %4698 = vset.pattern.permute.xlu0 0
        %4699 = vperm.xlu0 %4698, %v568
        %v4700 = vpop.permute.xlu0 %4699
        %4703 = vset.pattern.permute.xlu0 0
        %4704 = vperm.xlu0 %4703, %v569
        %v4705 = vpop.permute.xlu0 %4704
        %4708 = vset.pattern.permute.xlu0 0
        %4709 = vperm.xlu0 %4708, %v570
        %v4710 = vpop.permute.xlu0 %4709
        %4713 = vset.pattern.permute.xlu0 0
        %4714 = vperm.xlu0 %4713, %v571
        %v4715 = vpop.permute.xlu0 %4714
        %4718 = vset.pattern.permute.xlu0 0
        %4719 = vperm.xlu0 %4718, %v572
        %v4720 = vpop.permute.xlu0 %4719
        %4723 = vset.pattern.permute.xlu0 0
        %4724 = vperm.xlu0 %4723, %v573
        %v4725 = vpop.permute.xlu0 %4724
        %4728 = vset.pattern.permute.xlu0 0
        %4729 = vperm.xlu0 %4728, %v574
        %v4730 = vpop.permute.xlu0 %4729
        %v4732 = vmul.f32 %v4575, %v4351
        %v4733 = vmul.f32 %v4580, %v4357
        %v4734 = vmul.f32 %v4585, %v4363
        %v4735 = vmul.f32 %v4590, %v4369
        %v4736 = vmul.f32 %v4595, %v4375
        %v4737 = vmul.f32 %v4600, %v4381
        %v4738 = vmul.f32 %v4605, %v4387
        %v4739 = vmul.f32 %v4610, %v4393
        %v4740 = vmul.f32 %v4615, %v4399
        %v4741 = vmul.f32 %v4620, %v4405
        %v4742 = vmul.f32 %v4625, %v4411
        %v4743 = vmul.f32 %v4630, %v4417
        %v4744 = vmul.f32 %v4635, %v4423
        %v4745 = vmul.f32 %v4640, %v4429
        %v4746 = vmul.f32 %v4645, %v4435
        %v4747 = vmul.f32 %v4650, %v4441
        %v4748 = vmul.f32 %v4655, %v4447
        %v4749 = vmul.f32 %v4660, %v4453
        %v4750 = vmul.f32 %v4665, %v4459
        %v4751 = vmul.f32 %v4670, %v4465
        %v4752 = vmul.f32 %v4675, %v4471
        %v4753 = vmul.f32 %v4680, %v4477
        %v4754 = vmul.f32 %v4685, %v4483
        %v4755 = vmul.f32 %v4690, %v4489
        %v4756 = vmul.f32 %v4695, %v4495
        %v4757 = vmul.f32 %v4700, %v4501
        %v4758 = vmul.f32 %v4705, %v4507
        %v4759 = vmul.f32 %v4710, %v4513
        %v4760 = vmul.f32 %v4715, %v4519
        %v4761 = vmul.f32 %v4720, %v4525
        %v4762 = vmul.f32 %v4725, %v4531
        %v4763 = vmul.f32 %v4730, %v4537
        %v4764 = vadd.f32 %v4540, %v4732
        %v4765 = vadd.f32 %v4541, %v4733
        %v4766 = vadd.f32 %v4542, %v4734
        %v4767 = vadd.f32 %v4543, %v4735
        %v4768 = vadd.f32 %v4544, %v4736
        %v4769 = vadd.f32 %v4545, %v4737
        %v4770 = vadd.f32 %v4546, %v4738
        %v4771 = vadd.f32 %v4547, %v4739
        %v4772 = vadd.f32 %v4548, %v4740
        %v4773 = vadd.f32 %v4549, %v4741
        %v4774 = vadd.f32 %v4550, %v4742
        %v4775 = vadd.f32 %v4551, %v4743
        %v4776 = vadd.f32 %v4552, %v4744
        %v4777 = vadd.f32 %v4553, %v4745
        %v4778 = vadd.f32 %v4554, %v4746
        %v4779 = vadd.f32 %v4555, %v4747
        %v4780 = vadd.f32 %v4556, %v4748
        %v4781 = vadd.f32 %v4557, %v4749
        %v4782 = vadd.f32 %v4558, %v4750
        %v4783 = vadd.f32 %v4559, %v4751
        %v4784 = vadd.f32 %v4560, %v4752
        %v4785 = vadd.f32 %v4561, %v4753
        %v4786 = vadd.f32 %v4562, %v4754
        %v4787 = vadd.f32 %v4563, %v4755
        %v4788 = vadd.f32 %v4564, %v4756
        %v4789 = vadd.f32 %v4565, %v4757
        %v4790 = vadd.f32 %v4566, %v4758
        %v4791 = vadd.f32 %v4567, %v4759
        %v4792 = vadd.f32 %v4568, %v4760
        %v4793 = vadd.f32 %v4569, %v4761
        %v4794 = vadd.f32 %v4570, %v4762
        %v4795 = vadd.f32 %v4571, %v4763
        %4796 = vst.msk [vmem:[#allocation2] sm:$0xff] %vm618, %v4764
        %4797 = vst.msk [vmem:[#allocation2 + $0x8] sm:$0xff] %vm618, %v4765
        %4798 = vst.msk [vmem:[#allocation2 + $0x10] sm:$0xff] %vm618, %v4766
        %4799 = vst.msk [vmem:[#allocation2 + $0x18] sm:$0xff] %vm618, %v4767
        %4800 = vst.msk [vmem:[#allocation2 + $0x20] sm:$0xff] %vm618, %v4768
        %4801 = vst.msk [vmem:[#allocation2 + $0x28] sm:$0xff] %vm618, %v4769
        %4802 = vst.msk [vmem:[#allocation2 + $0x30] sm:$0xff] %vm618, %v4770
        %4803 = vst.msk [vmem:[#allocation2 + $0x38] sm:$0xff] %vm618, %v4771
        %4804 = vst.msk [vmem:[#allocation2 + $0x40] sm:$0xff] %vm618, %v4772
        %4805 = vst.msk [vmem:[#allocation2 + $0x48] sm:$0xff] %vm618, %v4773
        %4806 = vst.msk [vmem:[#allocation2 + $0x50] sm:$0xff] %vm618, %v4774
        %4807 = vst.msk [vmem:[#allocation2 + $0x58] sm:$0xff] %vm618, %v4775
        %4808 = vst.msk [vmem:[#allocation2 + $0x60] sm:$0xff] %vm618, %v4776
        %4809 = vst.msk [vmem:[#allocation2 + $0x68] sm:$0xff] %vm618, %v4777
        %4810 = vst.msk [vmem:[#allocation2 + $0x70] sm:$0xff] %vm618, %v4778
        %4811 = vst.msk [vmem:[#allocation2 + $0x78] sm:$0xff] %vm618, %v4779
        %4812 = vst.msk [vmem:[#allocation2 + $0x80] sm:$0xff] %vm618, %v4780
        %4813 = vst.msk [vmem:[#allocation2 + $0x88] sm:$0xff] %vm618, %v4781
        %4814 = vst.msk [vmem:[#allocation2 + $0x90] sm:$0xff] %vm618, %v4782
        %4815 = vst.msk [vmem:[#allocation2 + $0x98] sm:$0xff] %vm618, %v4783
        %4816 = vst.msk [vmem:[#allocation2 + $0xa0] sm:$0xff] %vm618, %v4784
        %4817 = vst.msk [vmem:[#allocation2 + $0xa8] sm:$0xff] %vm618, %v4785
        %4818 = vst.msk [vmem:[#allocation2 + $0xb0] sm:$0xff] %vm618, %v4786
        %4819 = vst.msk [vmem:[#allocation2 + $0xb8] sm:$0xff] %vm618, %v4787
        %4820 = vst.msk [vmem:[#allocation2 + $0xc0] sm:$0xff] %vm618, %v4788
        %4821 = vst.msk [vmem:[#allocation2 + $0xc8] sm:$0xff] %vm618, %v4789
        %4822 = vst.msk [vmem:[#allocation2 + $0xd0] sm:$0xff] %vm618, %v4790
        %4823 = vst.msk [vmem:[#allocation2 + $0xd8] sm:$0xff] %vm618, %v4791
        %4824 = vst.msk [vmem:[#allocation2 + $0xe0] sm:$0xff] %vm618, %v4792
        %4825 = vst.msk [vmem:[#allocation2 + $0xe8] sm:$0xff] %vm618, %v4793
        %4826 = vst.msk [vmem:[#allocation2 + $0xf0] sm:$0xff] %vm618, %v4794
        %4827 = vst.msk [vmem:[#allocation2 + $0xf8] sm:$0xff] %vm618, %v4795
      $region48: #{moe_feedforward_top2.1} parent=39 // pred_fallthru
        _
      %p4828 = scmp.eq.s32.totalorder %s39, 3
      %p4829 = pnand %p4828, %p498
      %p4830 = pneg %p4829
      // Predicated region
      $region49: #{moe_feedforward_top2.1} parent=39 // pred_check
        _
      $region50: #{moe_feedforward_top2.1} parent=39 // pred_check_branch
        %4832 = sbr.rel (%p4829) target = $region52
      $region51: #{moe_feedforward_top2.1} parent=39 // pred_region
        %v4833 = vld [vmem:[#allocation2] sm:$0xff]
        %v4834 = vld [vmem:[#allocation2 + $0x8] sm:$0xff]
        %v4835 = vld [vmem:[#allocation2 + $0x10] sm:$0xff]
        %v4836 = vld [vmem:[#allocation2 + $0x18] sm:$0xff]
        %v4837 = vld [vmem:[#allocation2 + $0x20] sm:$0xff]
        %v4838 = vld [vmem:[#allocation2 + $0x28] sm:$0xff]
        %v4839 = vld [vmem:[#allocation2 + $0x30] sm:$0xff]
        %v4840 = vld [vmem:[#allocation2 + $0x38] sm:$0xff]
        %v4841 = vld [vmem:[#allocation2 + $0x40] sm:$0xff]
        %v4842 = vld [vmem:[#allocation2 + $0x48] sm:$0xff]
        %v4843 = vld [vmem:[#allocation2 + $0x50] sm:$0xff]
        %v4844 = vld [vmem:[#allocation2 + $0x58] sm:$0xff]
        %v4845 = vld [vmem:[#allocation2 + $0x60] sm:$0xff]
        %v4846 = vld [vmem:[#allocation2 + $0x68] sm:$0xff]
        %v4847 = vld [vmem:[#allocation2 + $0x70] sm:$0xff]
        %v4848 = vld [vmem:[#allocation2 + $0x78] sm:$0xff]
        %v4849 = vld [vmem:[#allocation2 + $0x80] sm:$0xff]
        %v4850 = vld [vmem:[#allocation2 + $0x88] sm:$0xff]
        %v4851 = vld [vmem:[#allocation2 + $0x90] sm:$0xff]
        %v4852 = vld [vmem:[#allocation2 + $0x98] sm:$0xff]
        %v4853 = vld [vmem:[#allocation2 + $0xa0] sm:$0xff]
        %v4854 = vld [vmem:[#allocation2 + $0xa8] sm:$0xff]
        %v4855 = vld [vmem:[#allocation2 + $0xb0] sm:$0xff]
        %v4856 = vld [vmem:[#allocation2 + $0xb8] sm:$0xff]
        %v4857 = vld [vmem:[#allocation2 + $0xc0] sm:$0xff]
        %v4858 = vld [vmem:[#allocation2 + $0xc8] sm:$0xff]
        %v4859 = vld [vmem:[#allocation2 + $0xd0] sm:$0xff]
        %v4860 = vld [vmem:[#allocation2 + $0xd8] sm:$0xff]
        %v4861 = vld [vmem:[#allocation2 + $0xe0] sm:$0xff]
        %v4862 = vld [vmem:[#allocation2 + $0xe8] sm:$0xff]
        %v4863 = vld [vmem:[#allocation2 + $0xf0] sm:$0xff]
        %v4864 = vld [vmem:[#allocation2 + $0xf8] sm:$0xff]
        %vm4865 = vcmask 261120
        %4866 = vst.msk [vmem:[%s495] sm:$0xff] %vm4865, %v4833
        %4867 = vst.msk [vmem:[%s495 + $0x8] sm:$0xff] %vm4865, %v4834
        %4868 = vst.msk [vmem:[%s495 + $0x10] sm:$0xff] %vm4865, %v4835
        %4869 = vst.msk [vmem:[%s495 + $0x18] sm:$0xff] %vm4865, %v4836
        %4870 = vst.msk [vmem:[%s495 + $0x20] sm:$0xff] %vm4865, %v4837
        %4871 = vst.msk [vmem:[%s495 + $0x28] sm:$0xff] %vm4865, %v4838
        %4872 = vst.msk [vmem:[%s495 + $0x30] sm:$0xff] %vm4865, %v4839
        %4873 = vst.msk [vmem:[%s495 + $0x38] sm:$0xff] %vm4865, %v4840
        %4874 = vst.msk [vmem:[%s495 + $0x40] sm:$0xff] %vm4865, %v4841
        %4875 = vst.msk [vmem:[%s495 + $0x48] sm:$0xff] %vm4865, %v4842
        %4876 = vst.msk [vmem:[%s495 + $0x50] sm:$0xff] %vm4865, %v4843
        %4877 = vst.msk [vmem:[%s495 + $0x58] sm:$0xff] %vm4865, %v4844
        %4878 = vst.msk [vmem:[%s495 + $0x60] sm:$0xff] %vm4865, %v4845
        %4879 = vst.msk [vmem:[%s495 + $0x68] sm:$0xff] %vm4865, %v4846
        %4880 = vst.msk [vmem:[%s495 + $0x70] sm:$0xff] %vm4865, %v4847
        %4881 = vst.msk [vmem:[%s495 + $0x78] sm:$0xff] %vm4865, %v4848
        %4882 = vst.msk [vmem:[%s495 + $0x80] sm:$0xff] %vm4865, %v4849
        %4883 = vst.msk [vmem:[%s495 + $0x88] sm:$0xff] %vm4865, %v4850
        %4884 = vst.msk [vmem:[%s495 + $0x90] sm:$0xff] %vm4865, %v4851
        %4885 = vst.msk [vmem:[%s495 + $0x98] sm:$0xff] %vm4865, %v4852
        %4886 = vst.msk [vmem:[%s495 + $0xa0] sm:$0xff] %vm4865, %v4853
        %4887 = vst.msk [vmem:[%s495 + $0xa8] sm:$0xff] %vm4865, %v4854
        %4888 = vst.msk [vmem:[%s495 + $0xb0] sm:$0xff] %vm4865, %v4855
        %4889 = vst.msk [vmem:[%s495 + $0xb8] sm:$0xff] %vm4865, %v4856
        %4890 = vst.msk [vmem:[%s495 + $0xc0] sm:$0xff] %vm4865, %v4857
        %4891 = vst.msk [vmem:[%s495 + $0xc8] sm:$0xff] %vm4865, %v4858
        %4892 = vst.msk [vmem:[%s495 + $0xd0] sm:$0xff] %vm4865, %v4859
        %4893 = vst.msk [vmem:[%s495 + $0xd8] sm:$0xff] %vm4865, %v4860
        %4894 = vst.msk [vmem:[%s495 + $0xe0] sm:$0xff] %vm4865, %v4861
        %4895 = vst.msk [vmem:[%s495 + $0xe8] sm:$0xff] %vm4865, %v4862
        %4896 = vst.msk [vmem:[%s495 + $0xf0] sm:$0xff] %vm4865, %v4863
        %4897 = vst.msk [vmem:[%s495 + $0xf8] sm:$0xff] %vm4865, %v4864
      $region52: #{moe_feedforward_top2.1} parent=39 // pred_fallthru
        _
      %s4898 = smul.u32 32, %s38
      %p4899 = scmp.lt.s32.totalorder %s4898, 31
      %s4900 = scalar_select %p4899, %s4898, 31
      %s4901 = smul.addr %s4900, 8
      %s4902 = scalar_lea.vmem %s8, %s4901
      // Predicated region
      $region53: #{moe_feedforward_top2.1} parent=39 // pred_check
        %p4903 = pneg %p238
      $region54: #{moe_feedforward_top2.1} parent=39 // pred_check_branch
        %4905 = sbr.rel (%p4903) target = $region56
      $region55: #{moe_feedforward_top2.1} parent=39 // pred_region
        %s4906 = smul.u32 32, %s38
      $region56: #{moe_feedforward_top2.1} parent=39 // pred_fallthru
        _
      // Predicated region
      $region57: #{moe_feedforward_top2.1} parent=39 // pred_check
        %p4907 = pneg %p238
      $region58: #{moe_feedforward_top2.1} parent=39 // pred_check_branch
        %4909 = sbr.rel (%p4907) target = $region60
      $region59: #{moe_feedforward_top2.1} parent=39 // pred_region
        %s4910 = smul.u32 32, %s38
        %p4911 = scmp.lt.s32.totalorder %s4910, 31
        %s4912 = scalar_select %p4911, %s4910, 31
        %s4913 = smul.addr %s4912, 8
        %s4914 = scalar_lea.vmem %s8, %s4913
      $region60: #{moe_feedforward_top2.1} parent=39 // pred_fallthru
        _
    $region40: #{moe_feedforward_top2.1} parent=5 // pred_fallthru
      _
    %p4915 = scmp.le.s32.totalorder 2, %s28
    // Predicated region
    $region61: #{moe_feedforward_top2.1} parent=5 // pred_check
      %p4916 = pneg %p4915
    $region62: #{moe_feedforward_top2.1} parent=5 // pred_check_branch
      %4918 = sbr.rel (%p4916) target = $region64
    $region63: #{moe_feedforward_top2.1} parent=5 // pred_region
      %s4919 = ssub.s32 %s28, 2
    $region64: #{moe_feedforward_top2.1} parent=5 // pred_fallthru
      _
  $region6: #{moe_feedforward_top2.1} parent=0 // loop_footer
    %s32 = sadd.s32 1, %s28
  $region7: #{moe_feedforward_top2.1} parent=0 // loop_footer_branch
    %27 = sbr.rel target = $region3
  $region8: #{moe_feedforward_top2.1} parent=0 // loop_exit
    _

</llo_original>
